<compile_context>
chip_gen: v7x
topology: tpu7x:2x2x1
jax: 0.10.0
libtpu: 0.0.40
codegen_flags: <defaults>
</compile_context>

<pallas_src>
import functools

import jax
import jax.numpy as jnp
from jax.experimental import pallas as pl
from jax.experimental.pallas import tpu as pltpu


# ----------------------------------------------------------------------------
# Fused kernel
# ----------------------------------------------------------------------------
def ugnn_kernel(x_ref, a_ref, w1_ref, b1_ref, w2_ref, b2_ref, w3_ref, b3_ref,
                wf_ref, o_ref, h_s, feat_s, rhs_s, aux_s, acc_s,
                *, k, general_c, n_classes, tm, tk):
    C = n_classes
    p = pl.program_id(0)          # phase: 0 = MLP + stats, 1..k = hops
    i = pl.program_id(1)          # output row block (destination nodes)
    j = pl.program_id(2)          # contraction block (source nodes)
    nj = pl.num_programs(2)

    row0 = pl.multiple_of(i * tm, tm)
    col0 = pl.multiple_of(j * tk, tk)

    # --- phase 0, first row block: MLP for source chunk j + stats RHS -------
    # mlp: Dropout(id) -> Linear -> ReLU -> Dropout(id) -> Linear -> ReLU
    #      -> Dropout(id) -> Linear   (n_mlp = 2)
    @pl.when((p == 0) & (i == 0))
    def _():
        xb = x_ref[...]
        h = jnp.dot(xb, w1_ref[...], preferred_element_type=jnp.float32) + b1_ref[...]
        h = jnp.maximum(h, 0.0)
        h = jnp.dot(h, w2_ref[...], preferred_element_type=jnp.float32) + b2_ref[...]
        h = jnp.maximum(h, 0.0)
        h = jnp.dot(h, w3_ref[...], preferred_element_type=jnp.float32) + b3_ref[...]
        rows_j = pl.ds(col0, tk)
        h_s[rows_j, :] = h                      # feat_0
        feat_s[rows_j, :] = h                   # running feat
        ones = jnp.ones((tk, 1), jnp.float32)
        rhs_s[rows_j, :] = jnp.concatenate([ones, h, h * h], axis=1)

    # --- hop phases, first grid step: snapshot RHS = [c | c*feat*n | feat*n] --
    # (snapshot => row blocks can update feat_s in place during the phase)
    @pl.when((p > 0) & (i == 0) & (j == 0))
    def _():
        c_all = aux_s[:, 0:1]
        n_all = aux_s[:, 1:2]
        fn = feat_s[...] * n_all                # source-side feat * norm
        rhs_s[...] = jnp.concatenate([c_all, c_all * fn, fn], axis=1)

    # --- accumulate this A tile against the RHS chunk (single A pass/phase) --
    @pl.when(j == 0)
    def _():
        acc_s[...] = jnp.zeros_like(acc_s)

    a_blk = a_ref[...].astype(jnp.float32)      # bf16 0/1 mask -> f32 (exact)
    acc_s[...] += jnp.dot(a_blk, rhs_s[pl.ds(col0, tk), :],
                          preferred_element_type=jnp.float32)

    # --- epilogue for the current row block at the last contraction chunk ----
    @pl.when(j == nj - 1)
    def _():
        acc = acc_s[...]
        rows = pl.ds(row0, tm)

        @pl.when(p == 0)
        def _():
            deg = acc[:, 0:1]                   # in-degree (raw)
            a_h = acc[:, 1:1 + C]               # A @ h
            a_hh = acc[:, 1 + C:1 + 2 * C]      # A @ (h*h)
            deg_c = jnp.maximum(deg, 1.0)       # clamp(min=1)
            inv_deg = 1.0 / deg_c
            mean = a_h * inv_deg
            var = a_hh * inv_deg - mean * mean  # neighbor variance
            # Film gate: Linear(C -> 1), no bias, Identity -> VPU lane reduce.
            c = general_c * jnp.sum(var * wf_ref[...], axis=-1, keepdims=True)
            aux_s[rows, 0:1] = c
            aux_s[rows, 1:2] = jax.lax.rsqrt(deg_c)      # norm = deg_c^-0.5
            aux_s[rows, 2:3] = deg
            aux_s[rows, 3:4] = inv_deg                   # de_norm

        @pl.when(p > 0)
        def _():
            c = aux_s[rows, 0:1]
            norm = aux_s[rows, 1:2]
            a_c = acc[:, 0:1]                   # A @ c
            a_cf = acc[:, 1:1 + C]              # A @ (c * feat * norm)
            a_f = acc[:, 1 + C:1 + 2 * C]       # A @ (feat * norm)

            @pl.when(p == 1)                    # b only needs computing once
            def _():
                deg = aux_s[rows, 2:3]
                inv_deg = aux_s[rows, 3:4]
                c_sum = a_c + deg * c           # sum over in-edges of c[u]+c[v]
                b = 1.0 / (2.0 + c_sum * inv_deg)
                aux_s[rows, 4:5] = b
                aux_s[rows, 5:6] = b * norm     # hoisted loop invariant

            b = aux_s[rows, 4:5]
            bn = aux_s[rows, 5:6]
            agg = a_cf + c * a_f                # sum_u A[v,u](c[u]+c[v])*featn[u]
            new_feat = bn * agg + (2.0 * b) * h_s[rows, :]
            feat_s[rows, :] = new_feat

            @pl.when(p == k)                    # final hop -> log_softmax(dim=1)
            def _():
                m = jnp.max(new_feat, axis=1, keepdims=True)
                z = new_feat - m
                lse = jnp.log(jnp.sum(jnp.exp(z), axis=1, keepdims=True))
                o_ref[...] = z - lse


# ----------------------------------------------------------------------------
# Wrapper
# ----------------------------------------------------------------------------
def ugnn_forward(A, x, params, *, n_hop, general_c, tm=128, tk=128):
    w1, b1, w2, b2, w3, b3, wf = params
    N, in_feats = x.shape
    H = w1.shape[1]
    C = w3.shape[1]
    assert n_hop >= 1
    assert N % tm == 0 and N % tk == 0

    num_phases = n_hop + 1
    last_phase = num_phases - 1

    a_bf16 = A.astype(jnp.bfloat16)     # 0/1 adjacency: bf16 is exact, half the bytes
    wf_row = wf.T                       # (1, C) row for the VPU reduce

    # x is only read during (phase 0, row block 0); pin its block otherwise.
    x_spec = pl.BlockSpec(
        (tk, in_feats),
        lambda p, i, j: (jnp.where((p == 0) & (i == 0), j, 0), 0))
    a_spec = pl.BlockSpec((tm, tk), lambda p, i, j: (i, j))

    def resident(shape):
        nd = len(shape)
        return pl.BlockSpec(shape, lambda p, i, j, _nd=nd: (0,) * _nd)

    in_specs = [x_spec, a_spec,
                resident(w1.shape), resident(b1.shape),
                resident(w2.shape), resident(b2.shape),
                resident(w3.shape), resident(b3.shape),
                resident((1, C))]
    # Output block pinned to block 0 until the last phase -> each row block is
    # written back to HBM exactly once, right after its final-hop epilogue.
    out_spec = pl.BlockSpec(
        (tm, C), lambda p, i, j: (jnp.where(p == last_phase, i, 0), 0))

    scratch = [
        pltpu.VMEM((N, C), jnp.float32),           # h  (feat_0)
        pltpu.VMEM((N, C), jnp.float32),           # running feat
        pltpu.VMEM((N, 2 * C + 1), jnp.float32),   # concatenated matmul RHS
        pltpu.VMEM((N, 8), jnp.float32),           # c, norm, deg, 1/deg, b, b*norm
        pltpu.VMEM((tm, 2 * C + 1), jnp.float32),  # per-row-block accumulator
    ]

    flops = int(2 * N * (in_feats * H + H * H + H * C)
                + 2 * num_phases * N * N * (2 * C + 1))
    bytes_accessed = int(num_phases * N * N * 2          # bf16 A, one pass/phase
                         + x.size * 4 + N * C * 4
                         + sum(int(w.size) * 4 for w in params))
    cost = pl.CostEstimate(flops=flops,
                           transcendentals=int(N * (C + 2)),
                           bytes_accessed=bytes_accessed)

    kernel = functools.partial(ugnn_kernel, k=n_hop, general_c=general_c,
                               n_classes=C, tm=tm, tk=tk)

    return pl.pallas_call(
        kernel,
        out_shape=jax.ShapeDtypeStruct((N, C), jnp.float32),
        grid_spec=pltpu.PrefetchScalarGridSpec(
            num_scalar_prefetch=0,
            grid=(num_phases, N // tm, N // tk),
            in_specs=in_specs,
            out_specs=out_spec,
            scratch_shapes=scratch),
        compiler_params=pltpu.CompilerParams(
            # Row/contraction blocks share per-node VMEM state across phases,
            # so every axis must stay sequential ("arbitrary").
            dimension_semantics=("arbitrary", "arbitrary", "arbitrary"),
            vmem_limit_bytes=48 * 1024 * 1024),
        cost_estimate=cost,
    )(x, a_bf16, w1, b1, w2, b2, w3, b3, wf_row)


# ----------------------------------------------------------------------------
# Pure-JAX reference for correctness checking.
# ----------------------------------------------------------------------------
def ugnn_reference(A, x, params, *, n_hop, general_c):
    w1, b1, w2, b2, w3, b3, wf = params
    h = jnp.maximum(x @ w1 + b1, 0.0)
    h = jnp.maximum(h @ w2 + b2, 0.0)
    h = h @ w3 + b3
    deg = A.sum(axis=1, keepdims=True)
    deg_c = jnp.maximum(deg, 1.0)
    mean = (A @ h) / deg_c
    var = (A @ (h * h)) / deg_c - mean * mean
    c = general_c * (var @ wf)
    c_sum = A @ c + deg * c
    b = 1.0 / (2.0 + c_sum / deg_c)
    norm = deg_c ** -0.5
    feat_0 = h
    feat = h
    for _ in range(n_hop):
        feat = feat * norm
        feat = (A @ (c * feat)) + c * (A @ feat)
        feat = feat * norm
        feat = b * feat + 2.0 * b * feat_0
    return jax.nn.log_softmax(feat, axis=1)


if __name__ == "__main__":
    # Small shapes: N nodes, in_feats -> n_hidden -> n_classes, k = 2 hops.
    N, in_feats, n_hidden, n_classes = 512, 64, 64, 8
    n_hop, general_c = 2, 0.5

    key = jax.random.PRNGKey(0)
    k_adj, k_x, k1, k2, k3, k4, k5, k6, k7 = jax.random.split(key, 9)

    # Random directed graph; add self-loops so every node has in-degree >= 1.
    A = (jax.random.uniform(k_adj, (N, N)) < 0.05).astype(jnp.float32)
    A = jnp.maximum(A, jnp.eye(N, dtype=jnp.float32))   # A[v, u] = edge u -> v

    x = jax.random.normal(k_x, (N, in_feats), dtype=jnp.float32)

    def linear_init(kw, kb, fan_in, fan_out, bias=True):
        bound = 1.0 / jnp.sqrt(float(fan_in))
        w = jax.random.uniform(kw, (fan_in, fan_out), minval=-bound, maxval=bound,
                               dtype=jnp.float32)
        b = (jax.random.uniform(kb, (1, fan_out), minval=-bound, maxval=bound,
                                dtype=jnp.float32) if bias
             else jnp.zeros((1, fan_out), jnp.float32))
        return w, b

    w1, b1 = linear_init(k1, k2, in_feats, n_hidden)        # Linear(in, hid)
    w2, b2 = linear_init(k3, k4, n_hidden, n_hidden)        # Linear(hid, hid)
    w3, b3 = linear_init(k5, k6, n_hidden, n_classes)       # Linear(hid, classes)
    wf, _ = linear_init(k7, k7, n_classes, 1, bias=False)   # Film: Linear(classes, 1)

    params = (w1, b1, w2, b2, w3, b3, wf)

    out = ugnn_forward(A, x, params, n_hop=n_hop, general_c=general_c,
                       tm=128, tk=128)
    out = jax.block_until_ready(out)

    ref = ugnn_reference(A, x, params, n_hop=n_hop, general_c=general_c)
    assert out.shape == (N, n_classes)
    assert jnp.allclose(out, ref, atol=2e-4, rtol=2e-4), \
        "Pallas output mismatch vs JAX reference"

    print("KERNEL_OK")
</pallas_src>

<mosaic_0001>
module attributes {stable_mosaic.version = 11 : i64} {
  func.func @ugnn_kernel(%arg0: i32, %arg1: i32, %arg2: i32, %arg3: memref<128x64xf32, #tpu.memory_space<vmem>>, %arg4: memref<128x128xbf16, #tpu.memory_space<vmem>>, %arg5: memref<64x64xf32, #tpu.memory_space<vmem>>, %arg6: memref<1x64xf32, #tpu.memory_space<vmem>>, %arg7: memref<64x64xf32, #tpu.memory_space<vmem>>, %arg8: memref<1x64xf32, #tpu.memory_space<vmem>>, %arg9: memref<64x8xf32, #tpu.memory_space<vmem>>, %arg10: memref<1x8xf32, #tpu.memory_space<vmem>>, %arg11: memref<1x8xf32, #tpu.memory_space<vmem>>, %arg12: memref<128x8xf32, #tpu.memory_space<vmem>>, %arg13: memref<512x8xf32, #tpu.memory_space<vmem>>, %arg14: memref<512x8xf32, #tpu.memory_space<vmem>>, %arg15: memref<512x17xf32, #tpu.memory_space<vmem>>, %arg16: memref<512x8xf32, #tpu.memory_space<vmem>>, %arg17: memref<128x17xf32, #tpu.memory_space<vmem>>) attributes {dimension_semantics = [#tpu.dimension_semantics<arbitrary>, #tpu.dimension_semantics<arbitrary>, #tpu.dimension_semantics<arbitrary>], iteration_bounds = array<i64: 3, 4, 4>, scalar_prefetch = 0 : i64, scratch_operands = 5 : i64, tpu.core_type = #tpu.core_type<tc>, window_params = [{transform_indices = @transform_0, window_bounds = array<i64: 128, 64>}, {transform_indices = @transform_1, window_bounds = array<i64: 128, 128>}, {pipeline_mode = #tpu.pipeline_mode<synchronous>, transform_indices = @transform_2, window_bounds = array<i64: 64, 64>}, {pipeline_mode = #tpu.pipeline_mode<synchronous>, transform_indices = @transform_3, window_bounds = array<i64: 1, 64>}, {pipeline_mode = #tpu.pipeline_mode<synchronous>, transform_indices = @transform_4, window_bounds = array<i64: 64, 64>}, {pipeline_mode = #tpu.pipeline_mode<synchronous>, transform_indices = @transform_5, window_bounds = array<i64: 1, 64>}, {pipeline_mode = #tpu.pipeline_mode<synchronous>, transform_indices = @transform_6, window_bounds = array<i64: 64, 8>}, {pipeline_mode = #tpu.pipeline_mode<synchronous>, transform_indices = @transform_7, window_bounds = array<i64: 1, 8>}, {pipeline_mode = #tpu.pipeline_mode<synchronous>, transform_indices = @transform_8, window_bounds = array<i64: 1, 8>}, {transform_indices = @transform_9, window_bounds = array<i64: 128, 8>}]} {
    %c128_i32 = arith.constant 128 : i32
    %0 = arith.muli %arg1, %c128_i32 : i32
    %1 = tpu.assume_multiple %0, 128 : i32
    %c128_i32_0 = arith.constant 128 : i32
    %2 = arith.muli %arg2, %c128_i32_0 : i32
    %3 = tpu.assume_multiple %2, 128 : i32
    %c0_i32 = arith.constant 0 : i32
    %4 = arith.cmpi eq, %arg0, %c0_i32 : i32
    %c0_i32_1 = arith.constant 0 : i32
    %5 = arith.cmpi eq, %arg1, %c0_i32_1 : i32
    %6 = arith.andi %4, %5 : i1
    %7 = arith.extui %6 : i1 to i32
    %c0_i32_2 = arith.constant 0 : i32
    %8 = arith.cmpi ne, %7, %c0_i32_2 : i32
    scf.if %8 {
      %c0_16 = arith.constant 0 : index
      %c0_17 = arith.constant 0 : index
      %30 = vector.load %arg3[%c0_16, %c0_17] : memref<128x64xf32, #tpu.memory_space<vmem>>, vector<128x64xf32>
      %c0_18 = arith.constant 0 : index
      %c0_19 = arith.constant 0 : index
      %31 = vector.load %arg5[%c0_18, %c0_19] : memref<64x64xf32, #tpu.memory_space<vmem>>, vector<64x64xf32>
      %cst_20 = arith.constant dense<0.000000e+00> : vector<128x64xf32>
      %32 = tpu.matmul %30, %31, %cst_20 {dimension_numbers = #tpu.dot_dimension_numbers<[1], [0], [0], [1], [0, 0, 1, 1], [], []>} : vector<128x64xf32>, vector<64x64xf32>, vector<128x64xf32> -> vector<128x64xf32>
      %c0_21 = arith.constant 0 : index
      %c0_22 = arith.constant 0 : index
      %33 = vector.load %arg6[%c0_21, %c0_22] : memref<1x64xf32, #tpu.memory_space<vmem>>, vector<1x64xf32>
      %34 = vector.broadcast %33 : vector<1x64xf32> to vector<128x64xf32>
      %35 = arith.addf %32, %34 : vector<128x64xf32>
      %cst_23 = arith.constant 0.000000e+00 : f32
      %36 = vector.broadcast %cst_23 : f32 to vector<128x64xf32>
      %37 = arith.maximumf %35, %36 : vector<128x64xf32>
      %c0_24 = arith.constant 0 : index
      %c0_25 = arith.constant 0 : index
      %38 = vector.load %arg7[%c0_24, %c0_25] : memref<64x64xf32, #tpu.memory_space<vmem>>, vector<64x64xf32>
      %cst_26 = arith.constant dense<0.000000e+00> : vector<128x64xf32>
      %39 = tpu.matmul %37, %38, %cst_26 {dimension_numbers = #tpu.dot_dimension_numbers<[1], [0], [0], [1], [0, 0, 1, 1], [], []>} : vector<128x64xf32>, vector<64x64xf32>, vector<128x64xf32> -> vector<128x64xf32>
      %c0_27 = arith.constant 0 : index
      %c0_28 = arith.constant 0 : index
      %40 = vector.load %arg8[%c0_27, %c0_28] : memref<1x64xf32, #tpu.memory_space<vmem>>, vector<1x64xf32>
      %41 = vector.broadcast %40 : vector<1x64xf32> to vector<128x64xf32>
      %42 = arith.addf %39, %41 : vector<128x64xf32>
      %cst_29 = arith.constant 0.000000e+00 : f32
      %43 = vector.broadcast %cst_29 : f32 to vector<128x64xf32>
      %44 = arith.maximumf %42, %43 : vector<128x64xf32>
      %c0_30 = arith.constant 0 : index
      %c0_31 = arith.constant 0 : index
      %45 = vector.load %arg9[%c0_30, %c0_31] : memref<64x8xf32, #tpu.memory_space<vmem>>, vector<64x8xf32>
      %cst_32 = arith.constant dense<0.000000e+00> : vector<128x8xf32>
      %46 = tpu.matmul %44, %45, %cst_32 {dimension_numbers = #tpu.dot_dimension_numbers<[1], [0], [0], [1], [0, 0, 1, 1], [], []>} : vector<128x64xf32>, vector<64x8xf32>, vector<128x8xf32> -> vector<128x8xf32>
      %c0_33 = arith.constant 0 : index
      %c0_34 = arith.constant 0 : index
      %47 = vector.load %arg10[%c0_33, %c0_34] : memref<1x8xf32, #tpu.memory_space<vmem>>, vector<1x8xf32>
      %48 = vector.broadcast %47 : vector<1x8xf32> to vector<128x8xf32>
      %49 = arith.addf %46, %48 : vector<128x8xf32>
      %50 = arith.index_cast %3 : i32 to index
      %c0_35 = arith.constant 0 : index
      %51 = vector.load %arg13[%50, %c0_35] : memref<512x8xf32, #tpu.memory_space<vmem>>, vector<128x8xf32>
      tpu.vector_store %arg13[%50, %c0_35], %49 {strides = array<i32>} : memref<512x8xf32, #tpu.memory_space<vmem>>, vector<128x8xf32>,
      %52 = arith.index_cast %3 : i32 to index
      %c0_36 = arith.constant 0 : index
      %53 = vector.load %arg14[%52, %c0_36] : memref<512x8xf32, #tpu.memory_space<vmem>>, vector<128x8xf32>
      tpu.vector_store %arg14[%52, %c0_36], %49 {strides = array<i32>} : memref<512x8xf32, #tpu.memory_space<vmem>>, vector<128x8xf32>,
      %cst_37 = arith.constant 1.000000e+00 : f32
      %54 = vector.broadcast %cst_37 : f32 to vector<128x1xf32>
      %55 = arith.mulf %49, %49 : vector<128x8xf32>
      %56 = tpu.concatenate %54, %49, %55 in 1 : vector<128x1xf32>, vector<128x8xf32>, vector<128x8xf32> -> vector<128x17xf32>
      %57 = arith.index_cast %3 : i32 to index
      %c0_38 = arith.constant 0 : index
      %58 = vector.load %arg15[%57, %c0_38] : memref<512x17xf32, #tpu.memory_space<vmem>>, vector<128x17xf32>
      tpu.vector_store %arg15[%57, %c0_38], %56 {strides = array<i32>} : memref<512x17xf32, #tpu.memory_space<vmem>>, vector<128x17xf32>,
    } else {
    }
    %c0_i32_3 = arith.constant 0 : i32
    %9 = arith.cmpi sgt, %arg0, %c0_i32_3 : i32
    %c0_i32_4 = arith.constant 0 : i32
    %10 = arith.cmpi eq, %arg1, %c0_i32_4 : i32
    %11 = arith.andi %9, %10 : i1
    %c0_i32_5 = arith.constant 0 : i32
    %12 = arith.cmpi eq, %arg2, %c0_i32_5 : i32
    %13 = arith.andi %11, %12 : i1
    %14 = arith.extui %13 : i1 to i32
    %c0_i32_6 = arith.constant 0 : i32
    %15 = arith.cmpi ne, %14, %c0_i32_6 : i32
    scf.if %15 {
      %c0_16 = arith.constant 0 : index
      %c0_17 = arith.constant 0 : index
      %30 = vector.load %arg16[%c0_16, %c0_17] : memref<512x8xf32, #tpu.memory_space<vmem>>, vector<512x1xf32>
      %c0_18 = arith.constant 0 : index
      %c1 = arith.constant 1 : index
      %31 = vector.load %arg16[%c0_18, %c1] : memref<512x8xf32, #tpu.memory_space<vmem>>, vector<512x1xf32>
      %c0_19 = arith.constant 0 : index
      %c0_20 = arith.constant 0 : index
      %32 = vector.load %arg14[%c0_19, %c0_20] : memref<512x8xf32, #tpu.memory_space<vmem>>, vector<512x8xf32>
      %33 = vector.broadcast %31 : vector<512x1xf32> to vector<512x8xf32>
      %34 = arith.mulf %32, %33 : vector<512x8xf32>
      %35 = vector.broadcast %30 : vector<512x1xf32> to vector<512x8xf32>
      %36 = arith.mulf %35, %34 : vector<512x8xf32>
      %37 = tpu.concatenate %30, %36, %34 in 1 : vector<512x1xf32>, vector<512x8xf32>, vector<512x8xf32> -> vector<512x17xf32>
      %c0_21 = arith.constant 0 : index
      %c0_22 = arith.constant 0 : index
      %38 = vector.load %arg15[%c0_21, %c0_22] : memref<512x17xf32, #tpu.memory_space<vmem>>, vector<512x17xf32>
      tpu.vector_store %arg15[%c0_21, %c0_22], %37 {strides = array<i32>} : memref<512x17xf32, #tpu.memory_space<vmem>>, vector<512x17xf32>,
    } else {
    }
    %c0_i32_7 = arith.constant 0 : i32
    %16 = arith.cmpi eq, %arg2, %c0_i32_7 : i32
    %17 = arith.extui %16 : i1 to i32
    %c0_i32_8 = arith.constant 0 : i32
    %18 = arith.cmpi ne, %17, %c0_i32_8 : i32
    scf.if %18 {
      %cst_16 = arith.constant 0.000000e+00 : f32
      %30 = vector.broadcast %cst_16 : f32 to vector<128x17xf32>
      %c0_17 = arith.constant 0 : index
      %c0_18 = arith.constant 0 : index
      %31 = vector.load %arg17[%c0_17, %c0_18] : memref<128x17xf32, #tpu.memory_space<vmem>>, vector<128x17xf32>
      tpu.vector_store %arg17[%c0_17, %c0_18], %30 {strides = array<i32>} : memref<128x17xf32, #tpu.memory_space<vmem>>, vector<128x17xf32>,
    } else {
    }
    %c0 = arith.constant 0 : index
    %c0_9 = arith.constant 0 : index
    %19 = vector.load %arg4[%c0, %c0_9] : memref<128x128xbf16, #tpu.memory_space<vmem>>, vector<128x128xbf16>
    %20 = arith.extf %19 : vector<128x128xbf16> to vector<128x128xf32>
    %c0_10 = arith.constant 0 : index
    %c0_11 = arith.constant 0 : index
    %21 = vector.load %arg17[%c0_10, %c0_11] : memref<128x17xf32, #tpu.memory_space<vmem>>, vector<128x17xf32>
    %22 = arith.index_cast %3 : i32 to index
    %c0_12 = arith.constant 0 : index
    %23 = vector.load %arg15[%22, %c0_12] : memref<512x17xf32, #tpu.memory_space<vmem>>, vector<128x17xf32>
    %cst = arith.constant dense<0.000000e+00> : vector<128x17xf32>
    %24 = tpu.matmul %20, %23, %cst {dimension_numbers = #tpu.dot_dimension_numbers<[1], [0], [0], [1], [0, 0, 1, 1], [], []>} : vector<128x128xf32>, vector<128x17xf32>, vector<128x17xf32> -> vector<128x17xf32>
    %25 = arith.addf %21, %24 : vector<128x17xf32>
    %c0_13 = arith.constant 0 : index
    %c0_14 = arith.constant 0 : index
    %26 = vector.load %arg17[%c0_13, %c0_14] : memref<128x17xf32, #tpu.memory_space<vmem>>, vector<128x17xf32>
    tpu.vector_store %arg17[%c0_13, %c0_14], %25 {strides = array<i32>} : memref<128x17xf32, #tpu.memory_space<vmem>>, vector<128x17xf32>,
    %c3_i32 = arith.constant 3 : i32
    %27 = arith.cmpi eq, %arg2, %c3_i32 : i32
    %28 = arith.extui %27 : i1 to i32
    %c0_i32_15 = arith.constant 0 : i32
    %29 = arith.cmpi ne, %28, %c0_i32_15 : i32
    scf.if %29 {
      %c0_16 = arith.constant 0 : index
      %c0_17 = arith.constant 0 : index
      %30 = vector.load %arg17[%c0_16, %c0_17] : memref<128x17xf32, #tpu.memory_space<vmem>>, vector<128x17xf32>
      %c0_i32_18 = arith.constant 0 : i32
      %31 = arith.cmpi eq, %arg0, %c0_i32_18 : i32
      %32 = arith.extui %31 : i1 to i32
      %c0_i32_19 = arith.constant 0 : i32
      %33 = arith.cmpi ne, %32, %c0_i32_19 : i32
      scf.if %33 {
        %37 = vector.extract_strided_slice %30 {offsets = [0, 0], sizes = [128, 1], strides = [1, 1]} : vector<128x17xf32> to vector<128x1xf32>
        %38 = vector.extract_strided_slice %30 {offsets = [0, 1], sizes = [128, 8], strides = [1, 1]} : vector<128x17xf32> to vector<128x8xf32>
        %39 = vector.extract_strided_slice %30 {offsets = [0, 9], sizes = [128, 8], strides = [1, 1]} : vector<128x17xf32> to vector<128x8xf32>
        %cst_22 = arith.constant 1.000000e+00 : f32
        %40 = vector.broadcast %cst_22 : f32 to vector<128x1xf32>
        %41 = arith.maximumf %37, %40 : vector<128x1xf32>
        %cst_23 = arith.constant 1.000000e+00 : f32
        %42 = vector.broadcast %cst_23 : f32 to vector<128x1xf32>
        %43 = arith.divf %42, %41 : vector<128x1xf32>
        %44 = vector.broadcast %43 : vector<128x1xf32> to vector<128x8xf32>
        %45 = arith.mulf %38, %44 : vector<128x8xf32>
        %46 = vector.broadcast %43 : vector<128x1xf32> to vector<128x8xf32>
        %47 = arith.mulf %39, %46 : vector<128x8xf32>
        %48 = arith.mulf %45, %45 : vector<128x8xf32>
        %49 = arith.subf %47, %48 : vector<128x8xf32>
        %c0_24 = arith.constant 0 : index
        %c0_25 = arith.constant 0 : index
        %50 = vector.load %arg11[%c0_24, %c0_25] : memref<1x8xf32, #tpu.memory_space<vmem>>, vector<1x8xf32>
        %51 = vector.broadcast %50 : vector<1x8xf32> to vector<128x8xf32>
        %52 = arith.mulf %49, %51 : vector<128x8xf32>
        %cst_26 = arith.constant dense<0.000000e+00> : vector<128xf32>
        %53 = vector.multi_reduction <add>, %52, %cst_26 [1] : vector<128x8xf32> to vector<128xf32>
        %54 = vector.shape_cast %53 : vector<128xf32> to vector<128x1xf32>
        %cst_27 = arith.constant 5.000000e-01 : f32
        %55 = vector.broadcast %cst_27 : f32 to vector<128x1xf32>
        %56 = arith.mulf %55, %54 : vector<128x1xf32>
        %57 = arith.index_cast %1 : i32 to index
        %c0_28 = arith.constant 0 : index
        %58 = vector.load %arg16[%57, %c0_28] : memref<512x8xf32, #tpu.memory_space<vmem>>, vector<128x1xf32>
        tpu.vector_store %arg16[%57, %c0_28], %56 {strides = array<i32>} : memref<512x8xf32, #tpu.memory_space<vmem>>, vector<128x1xf32>,
        %59 = math.rsqrt %41 : vector<128x1xf32>
        %60 = arith.index_cast %1 : i32 to index
        %c1 = arith.constant 1 : index
        %61 = vector.load %arg16[%60, %c1] : memref<512x8xf32, #tpu.memory_space<vmem>>, vector<128x1xf32>
        tpu.vector_store %arg16[%60, %c1], %59 {strides = array<i32>} : memref<512x8xf32, #tpu.memory_space<vmem>>, vector<128x1xf32>,
        %62 = arith.index_cast %1 : i32 to index
        %c2 = arith.constant 2 : index
        %63 = vector.load %arg16[%62, %c2] : memref<512x8xf32, #tpu.memory_space<vmem>>, vector<128x1xf32>
        tpu.vector_store %arg16[%62, %c2], %37 {strides = array<i32>} : memref<512x8xf32, #tpu.memory_space<vmem>>, vector<128x1xf32>,
        %64 = arith.index_cast %1 : i32 to index
        %c3 = arith.constant 3 : index
        %65 = vector.load %arg16[%64, %c3] : memref<512x8xf32, #tpu.memory_space<vmem>>, vector<128x1xf32>
        tpu.vector_store %arg16[%64, %c3], %43 {strides = array<i32>} : memref<512x8xf32, #tpu.memory_space<vmem>>, vector<128x1xf32>,
      } else {
      }
      %c0_i32_20 = arith.constant 0 : i32
      %34 = arith.cmpi sgt, %arg0, %c0_i32_20 : i32
      %35 = arith.extui %34 : i1 to i32
      %c0_i32_21 = arith.constant 0 : i32
      %36 = arith.cmpi ne, %35, %c0_i32_21 : i32
      scf.if %36 {
        %37 = arith.index_cast %1 : i32 to index
        %c0_22 = arith.constant 0 : index
        %38 = vector.load %arg16[%37, %c0_22] : memref<512x8xf32, #tpu.memory_space<vmem>>, vector<128x1xf32>
        %39 = arith.index_cast %1 : i32 to index
        %c1 = arith.constant 1 : index
        %40 = vector.load %arg16[%39, %c1] : memref<512x8xf32, #tpu.memory_space<vmem>>, vector<128x1xf32>
        %41 = vector.extract_strided_slice %30 {offsets = [0, 0], sizes = [128, 1], strides = [1, 1]} : vector<128x17xf32> to vector<128x1xf32>
        %42 = vector.extract_strided_slice %30 {offsets = [0, 1], sizes = [128, 8], strides = [1, 1]} : vector<128x17xf32> to vector<128x8xf32>
        %43 = vector.extract_strided_slice %30 {offsets = [0, 9], sizes = [128, 8], strides = [1, 1]} : vector<128x17xf32> to vector<128x8xf32>
        %c1_i32 = arith.constant 1 : i32
        %44 = arith.cmpi eq, %arg0, %c1_i32 : i32
        %45 = arith.extui %44 : i1 to i32
        %c0_i32_23 = arith.constant 0 : i32
        %46 = arith.cmpi ne, %45, %c0_i32_23 : i32
        scf.if %46 {
          %68 = arith.index_cast %1 : i32 to index
          %c2 = arith.constant 2 : index
          %69 = vector.load %arg16[%68, %c2] : memref<512x8xf32, #tpu.memory_space<vmem>>, vector<128x1xf32>
          %70 = arith.index_cast %1 : i32 to index
          %c3 = arith.constant 3 : index
          %71 = vector.load %arg16[%70, %c3] : memref<512x8xf32, #tpu.memory_space<vmem>>, vector<128x1xf32>
          %72 = arith.mulf %69, %38 : vector<128x1xf32>
          %73 = arith.addf %41, %72 : vector<128x1xf32>
          %74 = arith.mulf %73, %71 : vector<128x1xf32>
          %cst_28 = arith.constant 2.000000e+00 : f32
          %75 = vector.broadcast %cst_28 : f32 to vector<128x1xf32>
          %76 = arith.addf %75, %74 : vector<128x1xf32>
          %cst_29 = arith.constant 1.000000e+00 : f32
          %77 = vector.broadcast %cst_29 : f32 to vector<128x1xf32>
          %78 = arith.divf %77, %76 : vector<128x1xf32>
          %79 = arith.index_cast %1 : i32 to index
          %c4_30 = arith.constant 4 : index
          %80 = vector.load %arg16[%79, %c4_30] : memref<512x8xf32, #tpu.memory_space<vmem>>, vector<128x1xf32>
          tpu.vector_store %arg16[%79, %c4_30], %78 {strides = array<i32>} : memref<512x8xf32, #tpu.memory_space<vmem>>, vector<128x1xf32>,
          %81 = arith.mulf %78, %40 : vector<128x1xf32>
          %82 = arith.index_cast %1 : i32 to index
          %c5_31 = arith.constant 5 : index
          %83 = vector.load %arg16[%82, %c5_31] : memref<512x8xf32, #tpu.memory_space<vmem>>, vector<128x1xf32>
          tpu.vector_store %arg16[%82, %c5_31], %81 {strides = array<i32>} : memref<512x8xf32, #tpu.memory_space<vmem>>, vector<128x1xf32>,
        } else {
        }
        %47 = arith.index_cast %1 : i32 to index
        %c4 = arith.constant 4 : index
        %48 = vector.load %arg16[%47, %c4] : memref<512x8xf32, #tpu.memory_space<vmem>>, vector<128x1xf32>
        %49 = arith.index_cast %1 : i32 to index
        %c5 = arith.constant 5 : index
        %50 = vector.load %arg16[%49, %c5] : memref<512x8xf32, #tpu.memory_space<vmem>>, vector<128x1xf32>
        %51 = vector.broadcast %38 : vector<128x1xf32> to vector<128x8xf32>
        %52 = arith.mulf %51, %43 : vector<128x8xf32>
        %53 = arith.addf %42, %52 : vector<128x8xf32>
        %54 = vector.broadcast %50 : vector<128x1xf32> to vector<128x8xf32>
        %55 = arith.mulf %54, %53 : vector<128x8xf32>
        %cst_24 = arith.constant 2.000000e+00 : f32
        %56 = vector.broadcast %cst_24 : f32 to vector<128x1xf32>
        %57 = arith.mulf %56, %48 : vector<128x1xf32>
        %58 = arith.index_cast %1 : i32 to index
        %c0_25 = arith.constant 0 : index
        %59 = vector.load %arg13[%58, %c0_25] : memref<512x8xf32, #tpu.memory_space<vmem>>, vector<128x8xf32>
        %60 = vector.broadcast %57 : vector<128x1xf32> to vector<128x8xf32>
        %61 = arith.mulf %60, %59 : vector<128x8xf32>
        %62 = arith.addf %55, %61 : vector<128x8xf32>
        %63 = arith.index_cast %1 : i32 to index
        %c0_26 = arith.constant 0 : index
        %64 = vector.load %arg14[%63, %c0_26] : memref<512x8xf32, #tpu.memory_space<vmem>>, vector<128x8xf32>
        tpu.vector_store %arg14[%63, %c0_26], %62 {strides = array<i32>} : memref<512x8xf32, #tpu.memory_space<vmem>>, vector<128x8xf32>,
        %c2_i32 = arith.constant 2 : i32
        %65 = arith.cmpi eq, %arg0, %c2_i32 : i32
        %66 = arith.extui %65 : i1 to i32
        %c0_i32_27 = arith.constant 0 : i32
        %67 = arith.cmpi ne, %66, %c0_i32_27 : i32
        scf.if %67 {
          %cst_28 = arith.constant dense<0xFF800000> : vector<128xf32>
          %68 = vector.multi_reduction <maximumf>, %62, %cst_28 [1] : vector<128x8xf32> to vector<128xf32>
          %69 = vector.shape_cast %68 : vector<128xf32> to vector<128x1xf32>
          %70 = vector.broadcast %69 : vector<128x1xf32> to vector<128x8xf32>
          %71 = arith.subf %62, %70 : vector<128x8xf32>
          %72 = math.exp %71 : vector<128x8xf32>
          %cst_29 = arith.constant dense<0.000000e+00> : vector<128xf32>
          %73 = vector.multi_reduction <add>, %72, %cst_29 [1] : vector<128x8xf32> to vector<128xf32>
          %74 = vector.shape_cast %73 : vector<128xf32> to vector<128x1xf32>
          %75 = math.log %74 : vector<128x1xf32>
          %76 = vector.broadcast %75 : vector<128x1xf32> to vector<128x8xf32>
          %77 = arith.subf %71, %76 : vector<128x8xf32>
          %c0_30 = arith.constant 0 : index
          %c0_31 = arith.constant 0 : index
          %78 = vector.load %arg12[%c0_30, %c0_31] : memref<128x8xf32, #tpu.memory_space<vmem>>, vector<128x8xf32>
          tpu.vector_store %arg12[%c0_30, %c0_31], %77 {strides = array<i32>} : memref<128x8xf32, #tpu.memory_space<vmem>>, vector<128x8xf32>,
        } else {
        }
      } else {
      }
    } else {
    }
    return
  }
  func.func @transform_0(%arg0: i32, %arg1: i32, %arg2: i32) -> (i32, i32) {
    %c0_i32 = arith.constant 0 : i32
    %0 = arith.cmpi eq, %arg0, %c0_i32 : i32
    %c0_i32_0 = arith.constant 0 : i32
    %1 = arith.cmpi eq, %arg1, %c0_i32_0 : i32
    %2 = arith.andi %0, %1 : i1
    %c0_i32_1 = arith.constant 0 : i32
    %3 = arith.select %2, %arg2, %c0_i32_1 : i32
    %c0_i32_2 = arith.constant 0 : i32
    %c0_i32_3 = arith.constant 0 : i32
    return %3, %c0_i32_2 : i32, i32
  }
  func.func @transform_1(%arg0: i32, %arg1: i32, %arg2: i32) -> (i32, i32) {
    %c0_i32 = arith.constant 0 : i32
    return %arg1, %arg2 : i32, i32
  }
  func.func @transform_2(%arg0: i32, %arg1: i32, %arg2: i32) -> (i32, i32) {
    %c0_i32 = arith.constant 0 : i32
    %c0_i32_0 = arith.constant 0 : i32
    %c0_i32_1 = arith.constant 0 : i32
    return %c0_i32, %c0_i32_0 : i32, i32
  }
  func.func @transform_3(%arg0: i32, %arg1: i32, %arg2: i32) -> (i32, i32) {
    %c0_i32 = arith.constant 0 : i32
    %c0_i32_0 = arith.constant 0 : i32
    %c0_i32_1 = arith.constant 0 : i32
    return %c0_i32, %c0_i32_0 : i32, i32
  }
  func.func @transform_4(%arg0: i32, %arg1: i32, %arg2: i32) -> (i32, i32) {
    %c0_i32 = arith.constant 0 : i32
    %c0_i32_0 = arith.constant 0 : i32
    %c0_i32_1 = arith.constant 0 : i32
    return %c0_i32, %c0_i32_0 : i32, i32
  }
  func.func @transform_5(%arg0: i32, %arg1: i32, %arg2: i32) -> (i32, i32) {
    %c0_i32 = arith.constant 0 : i32
    %c0_i32_0 = arith.constant 0 : i32
    %c0_i32_1 = arith.constant 0 : i32
    return %c0_i32, %c0_i32_0 : i32, i32
  }
  func.func @transform_6(%arg0: i32, %arg1: i32, %arg2: i32) -> (i32, i32) {
    %c0_i32 = arith.constant 0 : i32
    %c0_i32_0 = arith.constant 0 : i32
    %c0_i32_1 = arith.constant 0 : i32
    return %c0_i32, %c0_i32_0 : i32, i32
  }
  func.func @transform_7(%arg0: i32, %arg1: i32, %arg2: i32) -> (i32, i32) {
    %c0_i32 = arith.constant 0 : i32
    %c0_i32_0 = arith.constant 0 : i32
    %c0_i32_1 = arith.constant 0 : i32
    return %c0_i32, %c0_i32_0 : i32, i32
  }
  func.func @transform_8(%arg0: i32, %arg1: i32, %arg2: i32) -> (i32, i32) {
    %c0_i32 = arith.constant 0 : i32
    %c0_i32_0 = arith.constant 0 : i32
    %c0_i32_1 = arith.constant 0 : i32
    return %c0_i32, %c0_i32_0 : i32, i32
  }
  func.func @transform_9(%arg0: i32, %arg1: i32, %arg2: i32) -> (i32, i32) {
    %c2_i32 = arith.constant 2 : i32
    %0 = arith.cmpi eq, %arg0, %c2_i32 : i32
    %c0_i32 = arith.constant 0 : i32
    %1 = arith.select %0, %arg1, %c0_i32 : i32
    %c0_i32_0 = arith.constant 0 : i32
    %c0_i32_1 = arith.constant 0 : i32
    return %1, %c0_i32_0 : i32, i32
  }
}

</mosaic_0001>

<llo_original>
// kernel: tpu_custom_call.1
$region0: #{tpu_custom_call.1}
  #allocation0 [shape = 'u32[]', space=smem, size = 0x4, offset = 0x4, fixed_abs, tag = 'smem constant byte address 0x4 - core index']
  #allocation1 [shape = 'u32[144,128]{1,0:T(1,128)}', space=vmem, size = 0x12000, scoped, tag = 'internal scratch']
  #allocation2 [shape = 'f32[512,8]{1,0:T(8,128)}', space=vmem, size = 0x40000, scoped, tag = 'scratch operand']
  #allocation3 [shape = 'f32[512,8]{1,0:T(8,128)}', space=vmem, size = 0x40000, scoped, tag = 'scratch operand']
  #allocation4 [shape = 'f32[512,17]{1,0:T(8,128)}', space=vmem, size = 0x40000, scoped, tag = 'scratch operand']
  #allocation5 [shape = 'f32[512,8]{1,0:T(8,128)}', space=vmem, size = 0x40000, scoped, tag = 'scratch operand']
  #allocation6 [shape = 'f32[128,17]{1,0:T(8,128)}', space=vmem, size = 0x10000, scoped, tag = 'scratch operand']
  %s0 = inlined_call_operand.vmem [shape: f32[512,64], index: 0, kind: input, shape index: {}]
  %s1 = inlined_call_operand.hbm [shape: bf16[512,512], index: 1, kind: input, shape index: {}]
  %s2 = inlined_call_operand.vmem [shape: f32[64,64], index: 2, kind: input, shape index: {}]
  %s3 = inlined_call_operand.vmem [shape: f32[1,64], index: 3, kind: input, shape index: {}]
  %s4 = inlined_call_operand.vmem [shape: f32[64,64], index: 4, kind: input, shape index: {}]
  %s5 = inlined_call_operand.vmem [shape: f32[1,64], index: 5, kind: input, shape index: {}]
  %s6 = inlined_call_operand.vmem [shape: f32[64,8], index: 6, kind: input, shape index: {}]
  %s7 = inlined_call_operand.vmem [shape: f32[1,8], index: 7, kind: input, shape index: {}]
  %s8 = inlined_call_operand.vmem [shape: f32[1,8], index: 8, kind: input, shape index: {}]
  %s9 = inlined_call_operand.vmem [shape: f32[512,8], index: 9, kind: output, shape index: {}]
  %s10 = sld [smem:[#allocation0]]
  $region105: #{tpu_custom_call.1} parent=0
    _
  %s12 = ssub.s32 1, %s10
  %s13 = scalar_select 0, %s12, %s10
  $region1: #{tpu_custom_call.1} parent=0
    #allocation7 [shape = 'u8[65536]{0}', space=vmem, size = 0x10000, scoped, tag = 'input window, operand 1']
    #allocation8 [shape = 's32[2]{0}', space=sflag, size = 0x8, scoped, tag = 'scoped memory for tpu_custom_call.1']
    %14 = vsyncpa [#allocation8], 0
    %s15 = scalar_lea.sflag [#allocation8], 1
    %16 = vsyncpa %s15, 0
    loop: start=0, step=1, limit=50
    $region2: #{tpu_custom_call.1} parent=1 // loop_pre_header
      _
    $region3: #{tpu_custom_call.1} parent=1 // loop_header
      %s18 = sphi 0, %s22
      %p19 = scmp.ge.s32.totalorder %s18, 50
      %s25 = sphi 0, %s44
      %s26 = sphi 0, %s40
      %s27 = sphi 0, %s36
      %s28 = sphi 0, %s25
      %s29 = sphi 0, %s26
      %s30 = sphi 0, %s27
      %s31 = sphi 0, %s28
      %s32 = sphi 0, %s29
      %s33 = sphi 0, %s30
      %s57 = sphi 0, %s59
      %s60 = sphi 0, %s57
      %s61 = sphi 0, %s60
      %s77 = sphi 0, %s61
      %s85 = sphi 0, %s87
      %s88 = sphi 0, %s85
      %s89 = sphi 0, %s88
      %s105 = sphi 0, %s89
      %s109 = sphi 0, %s109
      %s111 = sphi 0, %s109
      %s112 = sphi 0, %s111
      %s126 = sphi 0, %s112
      %s130 = sphi 0, %s130
      %s132 = sphi 0, %s130
      %s133 = sphi 0, %s132
      %s147 = sphi 0, %s133
      %s151 = sphi 0, %s151
      %s153 = sphi 0, %s151
      %s154 = sphi 0, %s153
      %s168 = sphi 0, %s154
      %s172 = sphi 0, %s172
      %s174 = sphi 0, %s172
      %s175 = sphi 0, %s174
      %s189 = sphi 0, %s175
      %s193 = sphi 0, %s193
      %s195 = sphi 0, %s193
      %s196 = sphi 0, %s195
      %s210 = sphi 0, %s196
      %s214 = sphi 0, %s214
      %s216 = sphi 0, %s214
      %s217 = sphi 0, %s216
      %s231 = sphi 0, %s217
      %s235 = sphi 0, %s235
      %s237 = sphi 0, %s235
      %s238 = sphi 0, %s237
      %s252 = sphi 0, %s238
      %s262 = sphi 0, %s264
      %s265 = sphi 0, %s262
      %s266 = sphi 0, %s265
      %s282 = sphi 0, %s266
    $region4: #{tpu_custom_call.1} parent=1 // loop_header_branch
      %21 = sbr.rel (%p19) target = $region8
    $region5: #{tpu_custom_call.1} parent=1 // loop_body
      %s23 = ssub.s32 %s18, 1
      %s24 = ssub.s32 %s18, 2
      %s34 = sadd.s32 1, %s27
      %p35 = scmp.ge.s32.totalorder %s34, 4
      %s36 = scalar_select %p35, 0, %s34
      %s37 = sadd.s32 1, %s26
      %s38 = scalar_select %p35, %s37, %s26
      %p39 = scmp.ge.s32.totalorder %s38, 4
      %s40 = scalar_select %p39, 0, %s38
      %s41 = sadd.s32 1, %s25
      %s42 = scalar_select %p39, %s41, %s25
      %p43 = scmp.ge.s32.totalorder %s42, 3
      %s44 = scalar_select %p43, 0, %s42
      %p45 = scmp.eq.s32.totalorder %s25, 0
      %p46 = scmp.eq.s32.totalorder %s26, 0
      %p47 = pnand %p45, %p46
      %p48 = pneg %p47
      %s49 = scalar_select %p48, %s27, 0
      %p50 = scmp.eq.s32.totalorder %s44, 0
      %p51 = scmp.eq.s32.totalorder %s40, 0
      %p52 = pnand %p50, %p51
      %p53 = pneg %p52
      %s54 = scalar_select %p53, %s36, 0
      %s55 = ssub.s32 %s49, %s54
      %p56 = scmp.eq.s32.totalorder %s55, 0
      %s58 = sadd.s32 %s57, 1
      %s59 = scalar_select %p56, %s57, %s58
      %p62 = pneg %p56
      %p63 = scmp.eq.s32.totalorder %s18, 47
      %p64 = por %p62, %p63
      %p65 = scmp.ne.s32.totalorder %s57, %s60
      %p66 = scmp.eq.s32.totalorder %s18, 0
      %p67 = por %p65, %p66
      %p68 = scmp.ne.s32.totalorder %s57, %s60
      %p69 = scmp.eq.s32.totalorder %s23, 47
      %p70 = por %p68, %p69
      %p71 = scmp.ne.s32.totalorder %s60, %s61
      %p72 = scmp.eq.s32.totalorder %s23, 0
      %p73 = por %p71, %p72
      %p74 = scmp.ne.s32.totalorder %s60, %s61
      %p75 = scmp.eq.s32.totalorder %s24, 47
      %p76 = por %p74, %p75
      %p78 = scmp.ne.s32.totalorder %s61, %s77
      %p79 = scmp.eq.s32.totalorder %s24, 0
      %p80 = por %p78, %p79
      %s81 = ssub.s32 %s26, %s40
      %s82 = ssub.s32 %s27, %s36
      %s83 = sor.u32 %s81, %s82
      %p84 = scmp.eq.s32.totalorder %s83, 0
      %s86 = sadd.s32 %s85, 1
      %s87 = scalar_select %p84, %s85, %s86
      %p90 = pneg %p84
      %p91 = scmp.eq.s32.totalorder %s18, 47
      %p92 = por %p90, %p91
      %p93 = scmp.ne.s32.totalorder %s85, %s88
      %p94 = scmp.eq.s32.totalorder %s18, 0
      %p95 = por %p93, %p94
      %p96 = scmp.ne.s32.totalorder %s85, %s88
      %p97 = scmp.eq.s32.totalorder %s23, 47
      %p98 = por %p96, %p97
      %p99 = scmp.ne.s32.totalorder %s88, %s89
      %p100 = scmp.eq.s32.totalorder %s23, 0
      %p101 = por %p99, %p100
      %p102 = scmp.ne.s32.totalorder %s88, %s89
      %p103 = scmp.eq.s32.totalorder %s24, 47
      %p104 = por %p102, %p103
      %p106 = scmp.ne.s32.totalorder %s89, %s105
      %p107 = scmp.eq.s32.totalorder %s24, 0
      %p108 = por %p106, %p107
      %s110 = sadd.s32 %s109, 1
      %p113 = scmp.eq.s32.totalorder %s18, 47
      %p114 = scmp.ne.s32.totalorder %s109, %s111
      %p115 = scmp.eq.s32.totalorder %s18, 0
      %p116 = por %p114, %p115
      %p117 = scmp.ne.s32.totalorder %s109, %s111
      %p118 = scmp.eq.s32.totalorder %s23, 47
      %p119 = por %p117, %p118
      %p120 = scmp.ne.s32.totalorder %s111, %s112
      %p121 = scmp.eq.s32.totalorder %s23, 0
      %p122 = por %p120, %p121
      %p123 = scmp.ne.s32.totalorder %s111, %s112
      %p124 = scmp.eq.s32.totalorder %s24, 47
      %p125 = por %p123, %p124
      %p127 = scmp.ne.s32.totalorder %s112, %s126
      %p128 = scmp.eq.s32.totalorder %s24, 0
      %p129 = por %p127, %p128
      %s131 = sadd.s32 %s130, 1
      %p134 = scmp.eq.s32.totalorder %s18, 47
      %p135 = scmp.ne.s32.totalorder %s130, %s132
      %p136 = scmp.eq.s32.totalorder %s18, 0
      %p137 = por %p135, %p136
      %p138 = scmp.ne.s32.totalorder %s130, %s132
      %p139 = scmp.eq.s32.totalorder %s23, 47
      %p140 = por %p138, %p139
      %p141 = scmp.ne.s32.totalorder %s132, %s133
      %p142 = scmp.eq.s32.totalorder %s23, 0
      %p143 = por %p141, %p142
      %p144 = scmp.ne.s32.totalorder %s132, %s133
      %p145 = scmp.eq.s32.totalorder %s24, 47
      %p146 = por %p144, %p145
      %p148 = scmp.ne.s32.totalorder %s133, %s147
      %p149 = scmp.eq.s32.totalorder %s24, 0
      %p150 = por %p148, %p149
      %s152 = sadd.s32 %s151, 1
      %p155 = scmp.eq.s32.totalorder %s18, 47
      %p156 = scmp.ne.s32.totalorder %s151, %s153
      %p157 = scmp.eq.s32.totalorder %s18, 0
      %p158 = por %p156, %p157
      %p159 = scmp.ne.s32.totalorder %s151, %s153
      %p160 = scmp.eq.s32.totalorder %s23, 47
      %p161 = por %p159, %p160
      %p162 = scmp.ne.s32.totalorder %s153, %s154
      %p163 = scmp.eq.s32.totalorder %s23, 0
      %p164 = por %p162, %p163
      %p165 = scmp.ne.s32.totalorder %s153, %s154
      %p166 = scmp.eq.s32.totalorder %s24, 47
      %p167 = por %p165, %p166
      %p169 = scmp.ne.s32.totalorder %s154, %s168
      %p170 = scmp.eq.s32.totalorder %s24, 0
      %p171 = por %p169, %p170
      %s173 = sadd.s32 %s172, 1
      %p176 = scmp.eq.s32.totalorder %s18, 47
      %p177 = scmp.ne.s32.totalorder %s172, %s174
      %p178 = scmp.eq.s32.totalorder %s18, 0
      %p179 = por %p177, %p178
      %p180 = scmp.ne.s32.totalorder %s172, %s174
      %p181 = scmp.eq.s32.totalorder %s23, 47
      %p182 = por %p180, %p181
      %p183 = scmp.ne.s32.totalorder %s174, %s175
      %p184 = scmp.eq.s32.totalorder %s23, 0
      %p185 = por %p183, %p184
      %p186 = scmp.ne.s32.totalorder %s174, %s175
      %p187 = scmp.eq.s32.totalorder %s24, 47
      %p188 = por %p186, %p187
      %p190 = scmp.ne.s32.totalorder %s175, %s189
      %p191 = scmp.eq.s32.totalorder %s24, 0
      %p192 = por %p190, %p191
      %s194 = sadd.s32 %s193, 1
      %p197 = scmp.eq.s32.totalorder %s18, 47
      %p198 = scmp.ne.s32.totalorder %s193, %s195
      %p199 = scmp.eq.s32.totalorder %s18, 0
      %p200 = por %p198, %p199
      %p201 = scmp.ne.s32.totalorder %s193, %s195
      %p202 = scmp.eq.s32.totalorder %s23, 47
      %p203 = por %p201, %p202
      %p204 = scmp.ne.s32.totalorder %s195, %s196
      %p205 = scmp.eq.s32.totalorder %s23, 0
      %p206 = por %p204, %p205
      %p207 = scmp.ne.s32.totalorder %s195, %s196
      %p208 = scmp.eq.s32.totalorder %s24, 47
      %p209 = por %p207, %p208
      %p211 = scmp.ne.s32.totalorder %s196, %s210
      %p212 = scmp.eq.s32.totalorder %s24, 0
      %p213 = por %p211, %p212
      %s215 = sadd.s32 %s214, 1
      %p218 = scmp.eq.s32.totalorder %s18, 47
      %p219 = scmp.ne.s32.totalorder %s214, %s216
      %p220 = scmp.eq.s32.totalorder %s18, 0
      %p221 = por %p219, %p220
      %p222 = scmp.ne.s32.totalorder %s214, %s216
      %p223 = scmp.eq.s32.totalorder %s23, 47
      %p224 = por %p222, %p223
      %p225 = scmp.ne.s32.totalorder %s216, %s217
      %p226 = scmp.eq.s32.totalorder %s23, 0
      %p227 = por %p225, %p226
      %p228 = scmp.ne.s32.totalorder %s216, %s217
      %p229 = scmp.eq.s32.totalorder %s24, 47
      %p230 = por %p228, %p229
      %p232 = scmp.ne.s32.totalorder %s217, %s231
      %p233 = scmp.eq.s32.totalorder %s24, 0
      %p234 = por %p232, %p233
      %s236 = sadd.s32 %s235, 1
      %p239 = scmp.eq.s32.totalorder %s18, 47
      %p240 = scmp.ne.s32.totalorder %s235, %s237
      %p241 = scmp.eq.s32.totalorder %s18, 0
      %p242 = por %p240, %p241
      %p243 = scmp.ne.s32.totalorder %s235, %s237
      %p244 = scmp.eq.s32.totalorder %s23, 47
      %p245 = por %p243, %p244
      %p246 = scmp.ne.s32.totalorder %s237, %s238
      %p247 = scmp.eq.s32.totalorder %s23, 0
      %p248 = por %p246, %p247
      %p249 = scmp.ne.s32.totalorder %s237, %s238
      %p250 = scmp.eq.s32.totalorder %s24, 47
      %p251 = por %p249, %p250
      %p253 = scmp.ne.s32.totalorder %s238, %s252
      %p254 = scmp.eq.s32.totalorder %s24, 0
      %p255 = por %p253, %p254
      %p256 = scmp.eq.s32.totalorder %s25, 2
      %s257 = scalar_select %p256, %s26, 0
      %p258 = scmp.eq.s32.totalorder %s44, 2
      %s259 = scalar_select %p258, %s40, 0
      %s260 = ssub.s32 %s257, %s259
      %p261 = scmp.eq.s32.totalorder %s260, 0
      %s263 = sadd.s32 %s262, 1
      %s264 = scalar_select %p261, %s262, %s263
      %p267 = pneg %p261
      %p268 = scmp.eq.s32.totalorder %s18, 47
      %p269 = por %p267, %p268
      %p270 = scmp.ne.s32.totalorder %s262, %s265
      %p271 = scmp.eq.s32.totalorder %s18, 0
      %p272 = por %p270, %p271
      %p273 = scmp.ne.s32.totalorder %s262, %s265
      %p274 = scmp.eq.s32.totalorder %s23, 47
      %p275 = por %p273, %p274
      %p276 = scmp.ne.s32.totalorder %s265, %s266
      %p277 = scmp.eq.s32.totalorder %s23, 0
      %p278 = por %p276, %p277
      %p279 = scmp.ne.s32.totalorder %s265, %s266
      %p280 = scmp.eq.s32.totalorder %s24, 47
      %p281 = por %p279, %p280
      %p283 = scmp.ne.s32.totalorder %s266, %s282
      %p284 = scmp.eq.s32.totalorder %s24, 0
      %p285 = por %p283, %p284
      %p286 = scmp.le.s32.totalorder 1, %s18
      %p287 = scmp.lt.s32.totalorder %s18, 49
      %p288 = pnand %p286, %p287
      %p289 = pneg %p288
      // Predicated region
      $region9: #{tpu_custom_call.1} parent=5 // pred_check
        _
      $region10: #{tpu_custom_call.1} parent=5 // pred_check_branch
        %291 = sbr.rel (%p288) target = $region12
      $region11: #{tpu_custom_call.1} parent=5 // pred_region
        %s292 = ssub.s32 %s18, 1
        // Predicated region
        $region13: #{tpu_custom_call.1} parent=11 // pred_check
          %p293 = pneg %p122
        $region14: #{tpu_custom_call.1} parent=11 // pred_check_branch
          %295 = sbr.rel (%p293) target = $region16
        $region15: #{tpu_custom_call.1} parent=11 // pred_region
          _
        $region16: #{tpu_custom_call.1} parent=11 // pred_fallthru
          _
        // Predicated region
        $region17: #{tpu_custom_call.1} parent=11 // pred_check
          %p296 = pneg %p143
        $region18: #{tpu_custom_call.1} parent=11 // pred_check_branch
          %298 = sbr.rel (%p296) target = $region20
        $region19: #{tpu_custom_call.1} parent=11 // pred_region
          _
        $region20: #{tpu_custom_call.1} parent=11 // pred_fallthru
          _
        // Predicated region
        $region21: #{tpu_custom_call.1} parent=11 // pred_check
          %p299 = pneg %p164
        $region22: #{tpu_custom_call.1} parent=11 // pred_check_branch
          %301 = sbr.rel (%p299) target = $region24
        $region23: #{tpu_custom_call.1} parent=11 // pred_region
          _
        $region24: #{tpu_custom_call.1} parent=11 // pred_fallthru
          _
        // Predicated region
        $region25: #{tpu_custom_call.1} parent=11 // pred_check
          %p302 = pneg %p185
        $region26: #{tpu_custom_call.1} parent=11 // pred_check_branch
          %304 = sbr.rel (%p302) target = $region28
        $region27: #{tpu_custom_call.1} parent=11 // pred_region
          _
        $region28: #{tpu_custom_call.1} parent=11 // pred_fallthru
          _
        // Predicated region
        $region29: #{tpu_custom_call.1} parent=11 // pred_check
          %p305 = pneg %p206
        $region30: #{tpu_custom_call.1} parent=11 // pred_check_branch
          %307 = sbr.rel (%p305) target = $region32
        $region31: #{tpu_custom_call.1} parent=11 // pred_region
          _
        $region32: #{tpu_custom_call.1} parent=11 // pred_fallthru
          _
        // Predicated region
        $region33: #{tpu_custom_call.1} parent=11 // pred_check
          %p308 = pneg %p227
        $region34: #{tpu_custom_call.1} parent=11 // pred_check_branch
          %310 = sbr.rel (%p308) target = $region36
        $region35: #{tpu_custom_call.1} parent=11 // pred_region
          _
        $region36: #{tpu_custom_call.1} parent=11 // pred_fallthru
          _
        // Predicated region
        $region37: #{tpu_custom_call.1} parent=11 // pred_check
          %p311 = pneg %p248
        $region38: #{tpu_custom_call.1} parent=11 // pred_check_branch
          %313 = sbr.rel (%p311) target = $region40
        $region39: #{tpu_custom_call.1} parent=11 // pred_region
          _
        $region40: #{tpu_custom_call.1} parent=11 // pred_fallthru
          _
      $region12: #{tpu_custom_call.1} parent=5 // pred_fallthru
        _
      %p314 = scmp.lt.s32.totalorder %s18, 48
      // Predicated region
      $region41: #{tpu_custom_call.1} parent=5 // pred_check
        %p315 = pneg %p314
      $region42: #{tpu_custom_call.1} parent=5 // pred_check_branch
        %317 = sbr.rel (%p315) target = $region44
      $region43: #{tpu_custom_call.1} parent=5 // pred_region
        // Predicated region
        $region45: #{tpu_custom_call.1} parent=43 // pred_check
          %p318 = pneg %p67
        $region46: #{tpu_custom_call.1} parent=43 // pred_check_branch
          %320 = sbr.rel (%p318) target = $region48
        $region47: #{tpu_custom_call.1} parent=43 // pred_region
          %p321 = scmp.eq.s32.totalorder %s25, 0
          %p322 = scmp.eq.s32.totalorder %s26, 0
          %p323 = pnand %p321, %p322
          %p324 = pneg %p323
          %s325 = scalar_select %p324, %s27, 0
          %s326 = smul.u32 16, %s325
          %p327 = scmp.lt.s32.totalorder %s326, 63
          %s328 = scalar_select %p327, %s326, 63
          %s329 = smul.addr %s328, 8
          %s330 = scalar_lea.vmem %s0, %s329
          %p331 = scmp.eq.s32.totalorder %s25, 0
          %p332 = scmp.eq.s32.totalorder %s26, 0
          %p333 = pnand %p331, %p332
          %p334 = pneg %p333
          %s335 = scalar_select %p334, %s27, 0
          %s336 = smul.u32 16, %s335
        $region48: #{tpu_custom_call.1} parent=43 // pred_fallthru
          _
        // Predicated region
        $region49: #{tpu_custom_call.1} parent=43 // pred_check
          %p337 = pneg %p95
        $region50: #{tpu_custom_call.1} parent=43 // pred_check_branch
          %339 = sbr.rel (%p337) target = $region52
        $region51: #{tpu_custom_call.1} parent=43 // pred_region
          %s340 = sand.u32 %s85, 1
          %s341 = scalar_lea.sflag [#allocation8], %s340
          %s342 = sand.u32 %s85, 1
          %s343 = smul.addr %s342, 64
          %s344 = scalar_lea.vmem [#allocation7], %s343
          %s345 = smul.u32 16, %s26
          %s347 = ssub.s32 1024, 1024
          %348 = vsyncadd %s341, %s347
          %s349 = smul.addr %s345, 4
          %s350 = sadd.s32 %s27, %s349
          %s351 = smul.addr %s350, 64
          %s352 = scalar_lea.hbm %s1, %s351
          %s353 = sshll.u32 %s344, 4
          %s354 = int_to_ptr.vmem [resolvable:$true] %s353
          %359 = dma.hbm_to_vmem [thread:$0]  %s352, 1024, %s354, %s341, 256, 64, 4
        $region52: #{tpu_custom_call.1} parent=43 // pred_fallthru
          _
      $region44: #{tpu_custom_call.1} parent=5 // pred_fallthru
        _
      %p360 = scmp.le.s32.totalorder 1, %s18
      %p361 = scmp.lt.s32.totalorder %s18, 49
      %p362 = pnand %p360, %p361
      %p363 = pneg %p362
      // Predicated region
      $region53: #{tpu_custom_call.1} parent=5 // pred_check
        _
      $region54: #{tpu_custom_call.1} parent=5 // pred_check_branch
        %365 = sbr.rel (%p362) target = $region56
      $region55: #{tpu_custom_call.1} parent=5 // pred_region
        %s366 = ssub.s32 %s18, 1
        %s367 = sand.u32 %s88, 1
        %s368 = scalar_lea.sflag [#allocation8], %s367
        %s369 = sand.u32 %s88, 1
        %s370 = smul.addr %s369, 64
        %s371 = scalar_lea.vmem [#allocation7], %s370
        // Predicated region
        $region57: #{tpu_custom_call.1} parent=55 // pred_check
          %p372 = pneg %p101
        $region58: #{tpu_custom_call.1} parent=55 // pred_check_branch
          %374 = sbr.rel (%p372) target = $region60
        $region59: #{tpu_custom_call.1} parent=55 // pred_region
          %375 = dma.done %s368, 1024
        $region60: #{tpu_custom_call.1} parent=55 // pred_fallthru
          _
        %p376 = scmp.eq.s32.totalorder %s28, 0
        %p377 = scmp.eq.s32.totalorder %s29, 0
        %p378 = pnand %p376, %p377
        %p379 = pneg %p378
        %s380 = scalar_select %p379, %s30, 0
        %s381 = smul.u32 16, %s380
        %p382 = scmp.lt.s32.totalorder %s381, 63
        %s383 = scalar_select %p382, %s381, 63
        %s384 = smul.addr %s383, 8
        %s385 = scalar_lea.vmem %s0, %s384
        %p386 = pneg %p73
        %p387 = pneg %p70
        %s388 = sand.u32 %s88, 1
        %s389 = scalar_lea.sflag [#allocation8], %s388
        %s390 = sand.u32 %s88, 1
        %s391 = smul.addr %s390, 64
        %s392 = scalar_lea.vmem [#allocation7], %s391
        %p393 = pneg %p101
        %p394 = pneg %p98
        %p395 = pneg %p122
        %p396 = pneg %p119
        %p397 = pneg %p143
        %p398 = pneg %p140
        %p399 = pneg %p164
        %p400 = pneg %p161
        %p401 = pneg %p185
        %p402 = pneg %p182
        %p403 = pneg %p206
        %p404 = pneg %p203
        %p405 = pneg %p227
        %p406 = pneg %p224
        %p407 = pneg %p248
        %p408 = pneg %p245
        %p409 = pneg %p278
        %p410 = pneg %p275
        %p411 = scmp.eq.s32.totalorder %s28, 2
        %s412 = scalar_select %p411, %s29, 0
        %s413 = smul.u32 16, %s412
        %p414 = scmp.lt.s32.totalorder %s413, 63
        %s415 = scalar_select %p414, %s413, 63
        %s416 = smul.addr %s415, 8
        %s417 = scalar_lea.vmem %s9, %s416
        %p418 = scmp.eq.s32.totalorder %s28, 0
        %p419 = scmp.eq.s32.totalorder %s29, 0
        %p420 = pnand %p418, %p419
        %p421 = pneg %p420
        %s422 = scalar_select %p421, %s30, 0
        %s423 = smul.u32 16, %s422
        %p424 = scmp.lt.s32.totalorder %s423, 63
        %s425 = scalar_select %p424, %s423, 63
        %s426 = smul.addr %s425, 8
        %s427 = scalar_lea.vmem %s0, %s426
        %p428 = scmp.eq.s32.totalorder %s28, 0
        %p429 = scmp.eq.s32.totalorder %s29, 0
        %p430 = pnand %p428, %p429
        %p431 = pneg %p430
        %s432 = scalar_select %p431, %s30, 0
        %s433 = smul.u32 16, %s432
        %s434 = smul.u32 16, %s29
        %p435 = scmp.eq.s32.totalorder %s28, 2
        %s436 = scalar_select %p435, %s29, 0
        %s437 = smul.u32 16, %s436
        %p438 = scmp.lt.s32.totalorder %s437, 63
        %s439 = scalar_select %p438, %s437, 63
        %s440 = smul.addr %s439, 8
        %s441 = scalar_lea.vmem %s9, %s440
        %p442 = scmp.eq.s32.totalorder %s28, 2
        %s443 = scalar_select %p442, %s29, 0
        %s444 = smul.u32 16, %s443
        %s445 = smul.u32 %s29, 128
        %s446 = smul.u32 %s30, 128
        %p447 = scmp.eq.s32.totalorder %s28, 0
        %p448 = scmp.eq.s32.totalorder %s29, 0
        %p449 = pnand %p447, %p448
        %p450 = pneg %p449
        // Predicated region
        $region61: #{tpu_custom_call.1} parent=55 // pred_check
          _
        $region62: #{tpu_custom_call.1} parent=55 // pred_check_branch
          %452 = sbr.rel (%p449) target = $region64
        $region63: #{tpu_custom_call.1} parent=55 // pred_region
          %v453 = vld [vmem:[%s427] sm:$0xff]
          %v454 = vld [vmem:[%s427 + $0x8] sm:$0xff]
          %v455 = vld [vmem:[%s427 + $0x10] sm:$0xff]
          %v456 = vld [vmem:[%s427 + $0x18] sm:$0xff]
          %v457 = vld [vmem:[%s427 + $0x20] sm:$0xff]
          %v458 = vld [vmem:[%s427 + $0x28] sm:$0xff]
          %v459 = vld [vmem:[%s427 + $0x30] sm:$0xff]
          %v460 = vld [vmem:[%s427 + $0x38] sm:$0xff]
          %v461 = vld [vmem:[%s427 + $0x40] sm:$0xff]
          %v462 = vld [vmem:[%s427 + $0x48] sm:$0xff]
          %v463 = vld [vmem:[%s427 + $0x50] sm:$0xff]
          %v464 = vld [vmem:[%s427 + $0x58] sm:$0xff]
          %v465 = vld [vmem:[%s427 + $0x60] sm:$0xff]
          %v466 = vld [vmem:[%s427 + $0x68] sm:$0xff]
          %v467 = vld [vmem:[%s427 + $0x70] sm:$0xff]
          %v468 = vld [vmem:[%s427 + $0x78] sm:$0xff]
          %v469 = vld [vmem:[%s2] sm:$0xff]
          %v470 = vld [vmem:[%s2 + $0x8] sm:$0xff]
          %v471 = vld [vmem:[%s2 + $0x10] sm:$0xff]
          %v472 = vld [vmem:[%s2 + $0x18] sm:$0xff]
          %v473 = vld [vmem:[%s2 + $0x20] sm:$0xff]
          %v474 = vld [vmem:[%s2 + $0x28] sm:$0xff]
          %v475 = vld [vmem:[%s2 + $0x30] sm:$0xff]
          %v476 = vld [vmem:[%s2 + $0x38] sm:$0xff]
          %v477 = vld [vmem:[%s3] sm:$0x1]
          %v479 = vlaneseq
          %v480 = vshrl.u32 %v479, 7
          %v481 = vsub.s32 0, %v480
          %v482 = vrot.slane %v477, %v481
          %vm484 = vcmask 523264
          %v486 = vsel %vm484, %v453, 0
          %v489 = vsel %vm484, %v454, 0
          %v492 = vsel %vm484, %v455, 0
          %v495 = vsel %vm484, %v456, 0
          %v498 = vsel %vm484, %v457, 0
          %v501 = vsel %vm484, %v458, 0
          %v504 = vsel %vm484, %v459, 0
          %v507 = vsel %vm484, %v460, 0
          %v510 = vsel %vm484, %v461, 0
          %v513 = vsel %vm484, %v462, 0
          %v516 = vsel %vm484, %v463, 0
          %v519 = vsel %vm484, %v464, 0
          %v522 = vsel %vm484, %v465, 0
          %v525 = vsel %vm484, %v466, 0
          %v528 = vsel %vm484, %v467, 0
          %v531 = vsel %vm484, %v468, 0
          %533 = vmatprep.subr.mxu0 0.0
          %534 = vmatpush1.msra.mxu0 %v469
          %535 = vmatprep.subr.mxu0 0.0
          %536 = vmatpush1.msra.mxu0 %v470
          %537 = vmatprep.subr.mxu0 0.0
          %538 = vmatpush1.msra.mxu0 %v471
          %539 = vmatprep.subr.mxu0 0.0
          %540 = vmatpush1.msra.mxu0 %v472
          %541 = vmatprep.subr.mxu0 0.0
          %542 = vmatpush1.msra.mxu0 %v473
          %543 = vmatprep.subr.mxu0 0.0
          %544 = vmatpush1.msra.mxu0 %v474
          %545 = vmatprep.subr.mxu0 0.0
          %546 = vmatpush1.msra.mxu0 %v475
          %547 = vmatprep.subr.mxu0 0.0
          %548 = vmatpush1.msra.mxu0 %v476
          %549 = vmatprep.subr.mxu0 0.0
          %550 = vmatpush1.msra.mxu0 0.0
          %551 = vmatprep.subr.mxu0 0.0
          %552 = vmatpush1.msra.mxu0 0.0
          %553 = vmatprep.subr.mxu0 0.0
          %554 = vmatpush1.msra.mxu0 0.0
          %555 = vmatprep.subr.mxu0 0.0
          %556 = vmatpush1.msra.mxu0 0.0
          %557 = vmatprep.subr.mxu0 0.0
          %558 = vmatpush1.msra.mxu0 0.0
          %559 = vmatprep.subr.mxu0 0.0
          %560 = vmatpush1.msra.mxu0 0.0
          %561 = vmatprep.subr.mxu0 0.0
          %562 = vmatpush1.msra.mxu0 0.0
          %563 = vmatprep.subr.mxu0 0.0
          %564 = vmatpush1.msra.mxu0 0.0
          %565 = vmatprep.subr.mxu0 0.0
          %566 = vmatpush1.msra.mxu0 0.0
          %567 = vmatprep.subr.mxu0 0.0
          %568 = vmatpush1.msra.mxu0 0.0
          %569 = vmatprep.subr.mxu0 0.0
          %570 = vmatpush1.msra.mxu0 0.0
          %571 = vmatprep.subr.mxu0 0.0
          %572 = vmatpush1.msra.mxu0 0.0
          %573 = vmatprep.subr.mxu0 0.0
          %574 = vmatpush1.msra.mxu0 0.0
          %575 = vmatprep.subr.mxu0 0.0
          %576 = vmatpush1.msra.mxu0 0.0
          %577 = vmatprep.subr.mxu0 0.0
          %578 = vmatpush1.msra.mxu0 0.0
          %579 = vmatprep.subr.mxu0 0.0
          %580 = vmatpush1.msra.mxu0 0.0
          %581 = vmatprep.subr.mxu0 0.0
          %582 = vmatpush1.msra.mxu0 0.0
          %583 = vmatprep.subr.mxu0 0.0
          %584 = vmatpush1.msra.mxu0 0.0
          %585 = vmatprep.subr.mxu0 0.0
          %586 = vmatpush1.msra.mxu0 0.0
          %587 = vmatprep.subr.mxu0 0.0
          %588 = vmatpush1.msra.mxu0 0.0
          %589 = vmatprep.subr.mxu0 0.0
          %590 = vmatpush1.msra.mxu0 0.0
          %591 = vmatprep.subr.mxu0 0.0
          %592 = vmatpush1.msra.mxu0 0.0
          %593 = vmatprep.subr.mxu0 0.0
          %594 = vmatpush1.msra.mxu0 0.0
          %595 = vmatprep.subr.mxu0 0.0
          %596 = vmatpush1.msra.mxu0 0.0
          %597 = vmatprep.mubr.f32.mxu0 0.0
          %598 = vmatmul.mubr.f32.gmra.mrb[0].mxu0 %v486
          %v599 = vpop.f32.mrb[0].mxu0
          %v600 = vadd.f32 %v482, %v599
          %v601 = vpop.f32.mrb[0].mxu0
          %602 = vmatprep.mubr.f32.mxu0 0.0
          %603 = vmatmul.mubr.f32.gmra.mrb[0].mxu0 %v489
          %v604 = vpop.f32.mrb[0].mxu0
          %v605 = vadd.f32 %v482, %v604
          %v606 = vpop.f32.mrb[0].mxu0
          %607 = vmatprep.mubr.f32.mxu0 0.0
          %608 = vmatmul.mubr.f32.gmra.mrb[0].mxu0 %v492
          %v609 = vpop.f32.mrb[0].mxu0
          %v610 = vadd.f32 %v482, %v609
          %v611 = vpop.f32.mrb[0].mxu0
          %612 = vmatprep.mubr.f32.mxu0 0.0
          %613 = vmatmul.mubr.f32.gmra.mrb[0].mxu0 %v495
          %v614 = vpop.f32.mrb[0].mxu0
          %v615 = vadd.f32 %v482, %v614
          %v616 = vpop.f32.mrb[0].mxu0
          %617 = vmatprep.mubr.f32.mxu0 0.0
          %618 = vmatmul.mubr.f32.gmra.mrb[0].mxu0 %v498
          %v619 = vpop.f32.mrb[0].mxu0
          %v620 = vadd.f32 %v482, %v619
          %v621 = vpop.f32.mrb[0].mxu0
          %622 = vmatprep.mubr.f32.mxu0 0.0
          %623 = vmatmul.mubr.f32.gmra.mrb[0].mxu0 %v501
          %v624 = vpop.f32.mrb[0].mxu0
          %v625 = vadd.f32 %v482, %v624
          %v626 = vpop.f32.mrb[0].mxu0
          %627 = vmatprep.mubr.f32.mxu0 0.0
          %628 = vmatmul.mubr.f32.gmra.mrb[0].mxu0 %v504
          %v629 = vpop.f32.mrb[0].mxu0
          %v630 = vadd.f32 %v482, %v629
          %v631 = vpop.f32.mrb[0].mxu0
          %632 = vmatprep.mubr.f32.mxu0 0.0
          %633 = vmatmul.mubr.f32.gmra.mrb[0].mxu0 %v507
          %v634 = vpop.f32.mrb[0].mxu0
          %v635 = vadd.f32 %v482, %v634
          %v636 = vpop.f32.mrb[0].mxu0
          %637 = vmatprep.mubr.f32.mxu0 0.0
          %638 = vmatmul.mubr.f32.gmra.mrb[0].mxu0 %v510
          %v639 = vpop.f32.mrb[0].mxu0
          %v640 = vadd.f32 %v482, %v639
          %v641 = vpop.f32.mrb[0].mxu0
          %642 = vmatprep.mubr.f32.mxu0 0.0
          %643 = vmatmul.mubr.f32.gmra.mrb[0].mxu0 %v513
          %v644 = vpop.f32.mrb[0].mxu0
          %v645 = vadd.f32 %v482, %v644
          %v646 = vpop.f32.mrb[0].mxu0
          %647 = vmatprep.mubr.f32.mxu0 0.0
          %648 = vmatmul.mubr.f32.gmra.mrb[0].mxu0 %v516
          %v649 = vpop.f32.mrb[0].mxu0
          %v650 = vadd.f32 %v482, %v649
          %v651 = vpop.f32.mrb[0].mxu0
          %652 = vmatprep.mubr.f32.mxu0 0.0
          %653 = vmatmul.mubr.f32.gmra.mrb[0].mxu0 %v519
          %v654 = vpop.f32.mrb[0].mxu0
          %v655 = vadd.f32 %v482, %v654
          %v656 = vpop.f32.mrb[0].mxu0
          %657 = vmatprep.mubr.f32.mxu0 0.0
          %658 = vmatmul.mubr.f32.gmra.mrb[0].mxu0 %v522
          %v659 = vpop.f32.mrb[0].mxu0
          %v660 = vadd.f32 %v482, %v659
          %v661 = vpop.f32.mrb[0].mxu0
          %662 = vmatprep.mubr.f32.mxu0 0.0
          %663 = vmatmul.mubr.f32.gmra.mrb[0].mxu0 %v525
          %v664 = vpop.f32.mrb[0].mxu0
          %v665 = vadd.f32 %v482, %v664
          %v666 = vpop.f32.mrb[0].mxu0
          %667 = vmatprep.mubr.f32.mxu0 0.0
          %668 = vmatmul.mubr.f32.gmra.mrb[0].mxu0 %v528
          %v669 = vpop.f32.mrb[0].mxu0
          %v670 = vadd.f32 %v482, %v669
          %v671 = vpop.f32.mrb[0].mxu0
          %672 = vmatprep.mubr.f32.mxu0 0.0
          %673 = vmatmul.mubr.f32.gmra.mrb[0].mxu0 %v531
          %v674 = vpop.f32.mrb[0].mxu0
          %v675 = vadd.f32 %v482, %v674
          %v676 = vpop.f32.mrb[0].mxu0
          %677 = vdwg.mxu0
          %v678 = vmax.f32 %v600, 0.0
          %v679 = vmax.f32 %v605, 0.0
          %v680 = vmax.f32 %v610, 0.0
          %v681 = vmax.f32 %v615, 0.0
          %v682 = vmax.f32 %v620, 0.0
          %v683 = vmax.f32 %v625, 0.0
          %v684 = vmax.f32 %v630, 0.0
          %v685 = vmax.f32 %v635, 0.0
          %v686 = vmax.f32 %v640, 0.0
          %v687 = vmax.f32 %v645, 0.0
          %v688 = vmax.f32 %v650, 0.0
          %v689 = vmax.f32 %v655, 0.0
          %v690 = vmax.f32 %v660, 0.0
          %v691 = vmax.f32 %v665, 0.0
          %v692 = vmax.f32 %v670, 0.0
          %v693 = vmax.f32 %v675, 0.0
          %v694 = vld [vmem:[%s4] sm:$0xff]
          %v695 = vld [vmem:[%s4 + $0x8] sm:$0xff]
          %v696 = vld [vmem:[%s4 + $0x10] sm:$0xff]
          %v697 = vld [vmem:[%s4 + $0x18] sm:$0xff]
          %v698 = vld [vmem:[%s4 + $0x20] sm:$0xff]
          %v699 = vld [vmem:[%s4 + $0x28] sm:$0xff]
          %v700 = vld [vmem:[%s4 + $0x30] sm:$0xff]
          %v701 = vld [vmem:[%s4 + $0x38] sm:$0xff]
          %v702 = vld [vmem:[%s5] sm:$0x1]
          %v704 = vlaneseq
          %v705 = vshrl.u32 %v704, 7
          %v706 = vsub.s32 0, %v705
          %v707 = vrot.slane %v702, %v706
          %v710 = vsel %vm484, %v678, 0
          %v713 = vsel %vm484, %v679, 0
          %v716 = vsel %vm484, %v680, 0
          %v719 = vsel %vm484, %v681, 0
          %v722 = vsel %vm484, %v682, 0
          %v725 = vsel %vm484, %v683, 0
          %v728 = vsel %vm484, %v684, 0
          %v731 = vsel %vm484, %v685, 0
          %v734 = vsel %vm484, %v686, 0
          %v737 = vsel %vm484, %v687, 0
          %v740 = vsel %vm484, %v688, 0
          %v743 = vsel %vm484, %v689, 0
          %v746 = vsel %vm484, %v690, 0
          %v749 = vsel %vm484, %v691, 0
          %v752 = vsel %vm484, %v692, 0
          %v755 = vsel %vm484, %v693, 0
          %757 = vmatprep.subr.mxu0 0.0
          %758 = vmatpush1.msra.mxu0 %v694
          %759 = vmatprep.subr.mxu0 0.0
          %760 = vmatpush1.msra.mxu0 %v695
          %761 = vmatprep.subr.mxu0 0.0
          %762 = vmatpush1.msra.mxu0 %v696
          %763 = vmatprep.subr.mxu0 0.0
          %764 = vmatpush1.msra.mxu0 %v697
          %765 = vmatprep.subr.mxu0 0.0
          %766 = vmatpush1.msra.mxu0 %v698
          %767 = vmatprep.subr.mxu0 0.0
          %768 = vmatpush1.msra.mxu0 %v699
          %769 = vmatprep.subr.mxu0 0.0
          %770 = vmatpush1.msra.mxu0 %v700
          %771 = vmatprep.subr.mxu0 0.0
          %772 = vmatpush1.msra.mxu0 %v701
          %773 = vmatprep.subr.mxu0 0.0
          %774 = vmatpush1.msra.mxu0 0.0
          %775 = vmatprep.subr.mxu0 0.0
          %776 = vmatpush1.msra.mxu0 0.0
          %777 = vmatprep.subr.mxu0 0.0
          %778 = vmatpush1.msra.mxu0 0.0
          %779 = vmatprep.subr.mxu0 0.0
          %780 = vmatpush1.msra.mxu0 0.0
          %781 = vmatprep.subr.mxu0 0.0
          %782 = vmatpush1.msra.mxu0 0.0
          %783 = vmatprep.subr.mxu0 0.0
          %784 = vmatpush1.msra.mxu0 0.0
          %785 = vmatprep.subr.mxu0 0.0
          %786 = vmatpush1.msra.mxu0 0.0
          %787 = vmatprep.subr.mxu0 0.0
          %788 = vmatpush1.msra.mxu0 0.0
          %789 = vmatprep.subr.mxu0 0.0
          %790 = vmatpush1.msra.mxu0 0.0
          %791 = vmatprep.subr.mxu0 0.0
          %792 = vmatpush1.msra.mxu0 0.0
          %793 = vmatprep.subr.mxu0 0.0
          %794 = vmatpush1.msra.mxu0 0.0
          %795 = vmatprep.subr.mxu0 0.0
          %796 = vmatpush1.msra.mxu0 0.0
          %797 = vmatprep.subr.mxu0 0.0
          %798 = vmatpush1.msra.mxu0 0.0
          %799 = vmatprep.subr.mxu0 0.0
          %800 = vmatpush1.msra.mxu0 0.0
          %801 = vmatprep.subr.mxu0 0.0
          %802 = vmatpush1.msra.mxu0 0.0
          %803 = vmatprep.subr.mxu0 0.0
          %804 = vmatpush1.msra.mxu0 0.0
          %805 = vmatprep.subr.mxu0 0.0
          %806 = vmatpush1.msra.mxu0 0.0
          %807 = vmatprep.subr.mxu0 0.0
          %808 = vmatpush1.msra.mxu0 0.0
          %809 = vmatprep.subr.mxu0 0.0
          %810 = vmatpush1.msra.mxu0 0.0
          %811 = vmatprep.subr.mxu0 0.0
          %812 = vmatpush1.msra.mxu0 0.0
          %813 = vmatprep.subr.mxu0 0.0
          %814 = vmatpush1.msra.mxu0 0.0
          %815 = vmatprep.subr.mxu0 0.0
          %816 = vmatpush1.msra.mxu0 0.0
          %817 = vmatprep.subr.mxu0 0.0
          %818 = vmatpush1.msra.mxu0 0.0
          %819 = vmatprep.subr.mxu0 0.0
          %820 = vmatpush1.msra.mxu0 0.0
          %821 = vmatprep.mubr.f32.mxu0 0.0
          %822 = vmatmul.mubr.f32.gmra.mrb[0].mxu0 %v710
          %v823 = vpop.f32.mrb[0].mxu0
          %v824 = vadd.f32 %v707, %v823
          %v825 = vpop.f32.mrb[0].mxu0
          %826 = vmatprep.mubr.f32.mxu0 0.0
          %827 = vmatmul.mubr.f32.gmra.mrb[0].mxu0 %v713
          %v828 = vpop.f32.mrb[0].mxu0
          %v829 = vadd.f32 %v707, %v828
          %v830 = vpop.f32.mrb[0].mxu0
          %831 = vmatprep.mubr.f32.mxu0 0.0
          %832 = vmatmul.mubr.f32.gmra.mrb[0].mxu0 %v716
          %v833 = vpop.f32.mrb[0].mxu0
          %v834 = vadd.f32 %v707, %v833
          %v835 = vpop.f32.mrb[0].mxu0
          %836 = vmatprep.mubr.f32.mxu0 0.0
          %837 = vmatmul.mubr.f32.gmra.mrb[0].mxu0 %v719
          %v838 = vpop.f32.mrb[0].mxu0
          %v839 = vadd.f32 %v707, %v838
          %v840 = vpop.f32.mrb[0].mxu0
          %841 = vmatprep.mubr.f32.mxu0 0.0
          %842 = vmatmul.mubr.f32.gmra.mrb[0].mxu0 %v722
          %v843 = vpop.f32.mrb[0].mxu0
          %v844 = vadd.f32 %v707, %v843
          %v845 = vpop.f32.mrb[0].mxu0
          %846 = vmatprep.mubr.f32.mxu0 0.0
          %847 = vmatmul.mubr.f32.gmra.mrb[0].mxu0 %v725
          %v848 = vpop.f32.mrb[0].mxu0
          %v849 = vadd.f32 %v707, %v848
          %v850 = vpop.f32.mrb[0].mxu0
          %851 = vmatprep.mubr.f32.mxu0 0.0
          %852 = vmatmul.mubr.f32.gmra.mrb[0].mxu0 %v728
          %v853 = vpop.f32.mrb[0].mxu0
          %v854 = vadd.f32 %v707, %v853
          %v855 = vpop.f32.mrb[0].mxu0
          %856 = vmatprep.mubr.f32.mxu0 0.0
          %857 = vmatmul.mubr.f32.gmra.mrb[0].mxu0 %v731
          %v858 = vpop.f32.mrb[0].mxu0
          %v859 = vadd.f32 %v707, %v858
          %v860 = vpop.f32.mrb[0].mxu0
          %861 = vmatprep.mubr.f32.mxu0 0.0
          %862 = vmatmul.mubr.f32.gmra.mrb[0].mxu0 %v734
          %v863 = vpop.f32.mrb[0].mxu0
          %v864 = vadd.f32 %v707, %v863
          %v865 = vpop.f32.mrb[0].mxu0
          %866 = vmatprep.mubr.f32.mxu0 0.0
          %867 = vmatmul.mubr.f32.gmra.mrb[0].mxu0 %v737
          %v868 = vpop.f32.mrb[0].mxu0
          %v869 = vadd.f32 %v707, %v868
          %v870 = vpop.f32.mrb[0].mxu0
          %871 = vmatprep.mubr.f32.mxu0 0.0
          %872 = vmatmul.mubr.f32.gmra.mrb[0].mxu0 %v740
          %v873 = vpop.f32.mrb[0].mxu0
          %v874 = vadd.f32 %v707, %v873
          %v875 = vpop.f32.mrb[0].mxu0
          %876 = vmatprep.mubr.f32.mxu0 0.0
          %877 = vmatmul.mubr.f32.gmra.mrb[0].mxu0 %v743
          %v878 = vpop.f32.mrb[0].mxu0
          %v879 = vadd.f32 %v707, %v878
          %v880 = vpop.f32.mrb[0].mxu0
          %881 = vmatprep.mubr.f32.mxu0 0.0
          %882 = vmatmul.mubr.f32.gmra.mrb[0].mxu0 %v746
          %v883 = vpop.f32.mrb[0].mxu0
          %v884 = vadd.f32 %v707, %v883
          %v885 = vpop.f32.mrb[0].mxu0
          %886 = vmatprep.mubr.f32.mxu0 0.0
          %887 = vmatmul.mubr.f32.gmra.mrb[0].mxu0 %v749
          %v888 = vpop.f32.mrb[0].mxu0
          %v889 = vadd.f32 %v707, %v888
          %v890 = vpop.f32.mrb[0].mxu0
          %891 = vmatprep.mubr.f32.mxu0 0.0
          %892 = vmatmul.mubr.f32.gmra.mrb[0].mxu0 %v752
          %v893 = vpop.f32.mrb[0].mxu0
          %v894 = vadd.f32 %v707, %v893
          %v895 = vpop.f32.mrb[0].mxu0
          %896 = vmatprep.mubr.f32.mxu0 0.0
          %897 = vmatmul.mubr.f32.gmra.mrb[0].mxu0 %v755
          %v898 = vpop.f32.mrb[0].mxu0
          %v899 = vadd.f32 %v707, %v898
          %v900 = vpop.f32.mrb[0].mxu0
          %901 = vdwg.mxu0
          %v902 = vmax.f32 %v824, 0.0
          %v903 = vmax.f32 %v829, 0.0
          %v904 = vmax.f32 %v834, 0.0
          %v905 = vmax.f32 %v839, 0.0
          %v906 = vmax.f32 %v844, 0.0
          %v907 = vmax.f32 %v849, 0.0
          %v908 = vmax.f32 %v854, 0.0
          %v909 = vmax.f32 %v859, 0.0
          %v910 = vmax.f32 %v864, 0.0
          %v911 = vmax.f32 %v869, 0.0
          %v912 = vmax.f32 %v874, 0.0
          %v913 = vmax.f32 %v879, 0.0
          %v914 = vmax.f32 %v884, 0.0
          %v915 = vmax.f32 %v889, 0.0
          %v916 = vmax.f32 %v894, 0.0
          %v917 = vmax.f32 %v899, 0.0
          %v918 = vld [vmem:[%s6] sm:$0xff]
          %v919 = vld [vmem:[%s6 + $0x8] sm:$0xff]
          %v920 = vld [vmem:[%s6 + $0x10] sm:$0xff]
          %v921 = vld [vmem:[%s6 + $0x18] sm:$0xff]
          %v922 = vld [vmem:[%s6 + $0x20] sm:$0xff]
          %v923 = vld [vmem:[%s6 + $0x28] sm:$0xff]
          %v924 = vld [vmem:[%s6 + $0x30] sm:$0xff]
          %v925 = vld [vmem:[%s6 + $0x38] sm:$0xff]
          %v926 = vld [vmem:[%s7] sm:$0x1]
          %v928 = vlaneseq
          %v929 = vshrl.u32 %v928, 7
          %v930 = vsub.s32 0, %v929
          %v931 = vrot.slane %v926, %v930
          %v934 = vsel %vm484, %v902, 0
          %v937 = vsel %vm484, %v903, 0
          %v940 = vsel %vm484, %v904, 0
          %v943 = vsel %vm484, %v905, 0
          %v946 = vsel %vm484, %v906, 0
          %v949 = vsel %vm484, %v907, 0
          %v952 = vsel %vm484, %v908, 0
          %v955 = vsel %vm484, %v909, 0
          %v958 = vsel %vm484, %v910, 0
          %v961 = vsel %vm484, %v911, 0
          %v964 = vsel %vm484, %v912, 0
          %v967 = vsel %vm484, %v913, 0
          %v970 = vsel %vm484, %v914, 0
          %v973 = vsel %vm484, %v915, 0
          %v976 = vsel %vm484, %v916, 0
          %v979 = vsel %vm484, %v917, 0
          %981 = vmatprep.subr.mxu0 0.0
          %982 = vmatpush1.msra.mxu0 %v918
          %983 = vmatprep.subr.mxu0 0.0
          %984 = vmatpush1.msra.mxu0 %v919
          %985 = vmatprep.subr.mxu0 0.0
          %986 = vmatpush1.msra.mxu0 %v920
          %987 = vmatprep.subr.mxu0 0.0
          %988 = vmatpush1.msra.mxu0 %v921
          %989 = vmatprep.subr.mxu0 0.0
          %990 = vmatpush1.msra.mxu0 %v922
          %991 = vmatprep.subr.mxu0 0.0
          %992 = vmatpush1.msra.mxu0 %v923
          %993 = vmatprep.subr.mxu0 0.0
          %994 = vmatpush1.msra.mxu0 %v924
          %995 = vmatprep.subr.mxu0 0.0
          %996 = vmatpush1.msra.mxu0 %v925
          %997 = vmatprep.subr.mxu0 0.0
          %998 = vmatpush1.msra.mxu0 0.0
          %999 = vmatprep.subr.mxu0 0.0
          %1000 = vmatpush1.msra.mxu0 0.0
          %1001 = vmatprep.subr.mxu0 0.0
          %1002 = vmatpush1.msra.mxu0 0.0
          %1003 = vmatprep.subr.mxu0 0.0
          %1004 = vmatpush1.msra.mxu0 0.0
          %1005 = vmatprep.subr.mxu0 0.0
          %1006 = vmatpush1.msra.mxu0 0.0
          %1007 = vmatprep.subr.mxu0 0.0
          %1008 = vmatpush1.msra.mxu0 0.0
          %1009 = vmatprep.subr.mxu0 0.0
          %1010 = vmatpush1.msra.mxu0 0.0
          %1011 = vmatprep.subr.mxu0 0.0
          %1012 = vmatpush1.msra.mxu0 0.0
          %1013 = vmatprep.subr.mxu0 0.0
          %1014 = vmatpush1.msra.mxu0 0.0
          %1015 = vmatprep.subr.mxu0 0.0
          %1016 = vmatpush1.msra.mxu0 0.0
          %1017 = vmatprep.subr.mxu0 0.0
          %1018 = vmatpush1.msra.mxu0 0.0
          %1019 = vmatprep.subr.mxu0 0.0
          %1020 = vmatpush1.msra.mxu0 0.0
          %1021 = vmatprep.subr.mxu0 0.0
          %1022 = vmatpush1.msra.mxu0 0.0
          %1023 = vmatprep.subr.mxu0 0.0
          %1024 = vmatpush1.msra.mxu0 0.0
          %1025 = vmatprep.subr.mxu0 0.0
          %1026 = vmatpush1.msra.mxu0 0.0
          %1027 = vmatprep.subr.mxu0 0.0
          %1028 = vmatpush1.msra.mxu0 0.0
          %1029 = vmatprep.subr.mxu0 0.0
          %1030 = vmatpush1.msra.mxu0 0.0
          %1031 = vmatprep.subr.mxu0 0.0
          %1032 = vmatpush1.msra.mxu0 0.0
          %1033 = vmatprep.subr.mxu0 0.0
          %1034 = vmatpush1.msra.mxu0 0.0
          %1035 = vmatprep.subr.mxu0 0.0
          %1036 = vmatpush1.msra.mxu0 0.0
          %1037 = vmatprep.subr.mxu0 0.0
          %1038 = vmatpush1.msra.mxu0 0.0
          %1039 = vmatprep.subr.mxu0 0.0
          %1040 = vmatpush1.msra.mxu0 0.0
          %1041 = vmatprep.subr.mxu0 0.0
          %1042 = vmatpush1.msra.mxu0 0.0
          %1043 = vmatprep.subr.mxu0 0.0
          %1044 = vmatpush1.msra.mxu0 0.0
          %1045 = vmatprep.mubr.f32.mxu0 0.0
          %1046 = vmatmul.mubr.f32.gmra.mrb[0].mxu0 %v934
          %v1047 = vpop.f32.mrb[0].mxu0
          %v1048 = vadd.f32 %v931, %v1047
          %v1049 = vpop.f32.mrb[0].mxu0
          %1050 = vmatprep.mubr.f32.mxu0 0.0
          %1051 = vmatmul.mubr.f32.gmra.mrb[0].mxu0 %v937
          %v1052 = vpop.f32.mrb[0].mxu0
          %v1053 = vadd.f32 %v931, %v1052
          %v1054 = vpop.f32.mrb[0].mxu0
          %1055 = vmatprep.mubr.f32.mxu0 0.0
          %1056 = vmatmul.mubr.f32.gmra.mrb[0].mxu0 %v940
          %v1057 = vpop.f32.mrb[0].mxu0
          %v1058 = vadd.f32 %v931, %v1057
          %v1059 = vpop.f32.mrb[0].mxu0
          %1060 = vmatprep.mubr.f32.mxu0 0.0
          %1061 = vmatmul.mubr.f32.gmra.mrb[0].mxu0 %v943
          %v1062 = vpop.f32.mrb[0].mxu0
          %v1063 = vadd.f32 %v931, %v1062
          %v1064 = vpop.f32.mrb[0].mxu0
          %1065 = vmatprep.mubr.f32.mxu0 0.0
          %1066 = vmatmul.mubr.f32.gmra.mrb[0].mxu0 %v946
          %v1067 = vpop.f32.mrb[0].mxu0
          %v1068 = vadd.f32 %v931, %v1067
          %v1069 = vpop.f32.mrb[0].mxu0
          %1070 = vmatprep.mubr.f32.mxu0 0.0
          %1071 = vmatmul.mubr.f32.gmra.mrb[0].mxu0 %v949
          %v1072 = vpop.f32.mrb[0].mxu0
          %v1073 = vadd.f32 %v931, %v1072
          %v1074 = vpop.f32.mrb[0].mxu0
          %1075 = vmatprep.mubr.f32.mxu0 0.0
          %1076 = vmatmul.mubr.f32.gmra.mrb[0].mxu0 %v952
          %v1077 = vpop.f32.mrb[0].mxu0
          %v1078 = vadd.f32 %v931, %v1077
          %v1079 = vpop.f32.mrb[0].mxu0
          %1080 = vmatprep.mubr.f32.mxu0 0.0
          %1081 = vmatmul.mubr.f32.gmra.mrb[0].mxu0 %v955
          %v1082 = vpop.f32.mrb[0].mxu0
          %v1083 = vadd.f32 %v931, %v1082
          %v1084 = vpop.f32.mrb[0].mxu0
          %1085 = vmatprep.mubr.f32.mxu0 0.0
          %1086 = vmatmul.mubr.f32.gmra.mrb[0].mxu0 %v958
          %v1087 = vpop.f32.mrb[0].mxu0
          %v1088 = vadd.f32 %v931, %v1087
          %v1089 = vpop.f32.mrb[0].mxu0
          %1090 = vmatprep.mubr.f32.mxu0 0.0
          %1091 = vmatmul.mubr.f32.gmra.mrb[0].mxu0 %v961
          %v1092 = vpop.f32.mrb[0].mxu0
          %v1093 = vadd.f32 %v931, %v1092
          %v1094 = vpop.f32.mrb[0].mxu0
          %1095 = vmatprep.mubr.f32.mxu0 0.0
          %1096 = vmatmul.mubr.f32.gmra.mrb[0].mxu0 %v964
          %v1097 = vpop.f32.mrb[0].mxu0
          %v1098 = vadd.f32 %v931, %v1097
          %v1099 = vpop.f32.mrb[0].mxu0
          %1100 = vmatprep.mubr.f32.mxu0 0.0
          %1101 = vmatmul.mubr.f32.gmra.mrb[0].mxu0 %v967
          %v1102 = vpop.f32.mrb[0].mxu0
          %v1103 = vadd.f32 %v931, %v1102
          %v1104 = vpop.f32.mrb[0].mxu0
          %1105 = vmatprep.mubr.f32.mxu0 0.0
          %1106 = vmatmul.mubr.f32.gmra.mrb[0].mxu0 %v970
          %v1107 = vpop.f32.mrb[0].mxu0
          %v1108 = vadd.f32 %v931, %v1107
          %v1109 = vpop.f32.mrb[0].mxu0
          %1110 = vmatprep.mubr.f32.mxu0 0.0
          %1111 = vmatmul.mubr.f32.gmra.mrb[0].mxu0 %v973
          %v1112 = vpop.f32.mrb[0].mxu0
          %v1113 = vadd.f32 %v931, %v1112
          %v1114 = vpop.f32.mrb[0].mxu0
          %1115 = vmatprep.mubr.f32.mxu0 0.0
          %1116 = vmatmul.mubr.f32.gmra.mrb[0].mxu0 %v976
          %v1117 = vpop.f32.mrb[0].mxu0
          %v1118 = vadd.f32 %v931, %v1117
          %v1119 = vpop.f32.mrb[0].mxu0
          %1120 = vmatprep.mubr.f32.mxu0 0.0
          %1121 = vmatmul.mubr.f32.gmra.mrb[0].mxu0 %v979
          %v1122 = vpop.f32.mrb[0].mxu0
          %v1123 = vadd.f32 %v931, %v1122
          %v1124 = vpop.f32.mrb[0].mxu0
          %1125 = vdwg.mxu0
          %s1126 = scalar_lea.vmem [#allocation2], %s446
          %vm1127 = vcmask 64512
          %1128 = vst.msk [vmem:[%s1126] sm:$0xff] %vm1127, %v1048
          %1129 = vst.msk [vmem:[%s1126 + $0x8] sm:$0xff] %vm1127, %v1053
          %1130 = vst.msk [vmem:[%s1126 + $0x10] sm:$0xff] %vm1127, %v1058
          %1131 = vst.msk [vmem:[%s1126 + $0x18] sm:$0xff] %vm1127, %v1063
          %1132 = vst.msk [vmem:[%s1126 + $0x20] sm:$0xff] %vm1127, %v1068
          %1133 = vst.msk [vmem:[%s1126 + $0x28] sm:$0xff] %vm1127, %v1073
          %1134 = vst.msk [vmem:[%s1126 + $0x30] sm:$0xff] %vm1127, %v1078
          %1135 = vst.msk [vmem:[%s1126 + $0x38] sm:$0xff] %vm1127, %v1083
          %1136 = vst.msk [vmem:[%s1126 + $0x40] sm:$0xff] %vm1127, %v1088
          %1137 = vst.msk [vmem:[%s1126 + $0x48] sm:$0xff] %vm1127, %v1093
          %1138 = vst.msk [vmem:[%s1126 + $0x50] sm:$0xff] %vm1127, %v1098
          %1139 = vst.msk [vmem:[%s1126 + $0x58] sm:$0xff] %vm1127, %v1103
          %1140 = vst.msk [vmem:[%s1126 + $0x60] sm:$0xff] %vm1127, %v1108
          %1141 = vst.msk [vmem:[%s1126 + $0x68] sm:$0xff] %vm1127, %v1113
          %1142 = vst.msk [vmem:[%s1126 + $0x70] sm:$0xff] %vm1127, %v1118
          %1143 = vst.msk [vmem:[%s1126 + $0x78] sm:$0xff] %vm1127, %v1123
          %s1144 = scalar_lea.vmem [#allocation3], %s446
          %1145 = vst.msk [vmem:[%s1144] sm:$0xff] %vm1127, %v1048
          %1146 = vst.msk [vmem:[%s1144 + $0x8] sm:$0xff] %vm1127, %v1053
          %1147 = vst.msk [vmem:[%s1144 + $0x10] sm:$0xff] %vm1127, %v1058
          %1148 = vst.msk [vmem:[%s1144 + $0x18] sm:$0xff] %vm1127, %v1063
          %1149 = vst.msk [vmem:[%s1144 + $0x20] sm:$0xff] %vm1127, %v1068
          %1150 = vst.msk [vmem:[%s1144 + $0x28] sm:$0xff] %vm1127, %v1073
          %1151 = vst.msk [vmem:[%s1144 + $0x30] sm:$0xff] %vm1127, %v1078
          %1152 = vst.msk [vmem:[%s1144 + $0x38] sm:$0xff] %vm1127, %v1083
          %1153 = vst.msk [vmem:[%s1144 + $0x40] sm:$0xff] %vm1127, %v1088
          %1154 = vst.msk [vmem:[%s1144 + $0x48] sm:$0xff] %vm1127, %v1093
          %1155 = vst.msk [vmem:[%s1144 + $0x50] sm:$0xff] %vm1127, %v1098
          %1156 = vst.msk [vmem:[%s1144 + $0x58] sm:$0xff] %vm1127, %v1103
          %1157 = vst.msk [vmem:[%s1144 + $0x60] sm:$0xff] %vm1127, %v1108
          %1158 = vst.msk [vmem:[%s1144 + $0x68] sm:$0xff] %vm1127, %v1113
          %1159 = vst.msk [vmem:[%s1144 + $0x70] sm:$0xff] %vm1127, %v1118
          %1160 = vst.msk [vmem:[%s1144 + $0x78] sm:$0xff] %vm1127, %v1123
          %v1161 = vmul.f32 %v1048, %v1048
          %v1162 = vmul.f32 %v1053, %v1053
          %v1163 = vmul.f32 %v1058, %v1058
          %v1164 = vmul.f32 %v1063, %v1063
          %v1165 = vmul.f32 %v1068, %v1068
          %v1166 = vmul.f32 %v1073, %v1073
          %v1167 = vmul.f32 %v1078, %v1078
          %v1168 = vmul.f32 %v1083, %v1083
          %v1169 = vmul.f32 %v1088, %v1088
          %v1170 = vmul.f32 %v1093, %v1093
          %v1171 = vmul.f32 %v1098, %v1098
          %v1172 = vmul.f32 %v1103, %v1103
          %v1173 = vmul.f32 %v1108, %v1108
          %v1174 = vmul.f32 %v1113, %v1113
          %v1175 = vmul.f32 %v1118, %v1118
          %v1176 = vmul.f32 %v1123, %v1123
          %1193 = vrot.lane.b32.xlu0 %v1048, 1
          %v1194 = vpop.permute.xlu0 %1193
          %1195 = vrot.lane.b32.xlu0 %v1053, 1
          %v1196 = vpop.permute.xlu0 %1195
          %1197 = vrot.lane.b32.xlu0 %v1058, 1
          %v1198 = vpop.permute.xlu0 %1197
          %1199 = vrot.lane.b32.xlu0 %v1063, 1
          %v1200 = vpop.permute.xlu0 %1199
          %1201 = vrot.lane.b32.xlu0 %v1068, 1
          %v1202 = vpop.permute.xlu0 %1201
          %1203 = vrot.lane.b32.xlu0 %v1073, 1
          %v1204 = vpop.permute.xlu0 %1203
          %1205 = vrot.lane.b32.xlu0 %v1078, 1
          %v1206 = vpop.permute.xlu0 %1205
          %1207 = vrot.lane.b32.xlu0 %v1083, 1
          %v1208 = vpop.permute.xlu0 %1207
          %1209 = vrot.lane.b32.xlu0 %v1088, 1
          %v1210 = vpop.permute.xlu0 %1209
          %1211 = vrot.lane.b32.xlu0 %v1093, 1
          %v1212 = vpop.permute.xlu0 %1211
          %1213 = vrot.lane.b32.xlu0 %v1098, 1
          %v1214 = vpop.permute.xlu0 %1213
          %1215 = vrot.lane.b32.xlu0 %v1103, 1
          %v1216 = vpop.permute.xlu0 %1215
          %1217 = vrot.lane.b32.xlu0 %v1108, 1
          %v1218 = vpop.permute.xlu0 %1217
          %1219 = vrot.lane.b32.xlu0 %v1113, 1
          %v1220 = vpop.permute.xlu0 %1219
          %1221 = vrot.lane.b32.xlu0 %v1118, 1
          %v1222 = vpop.permute.xlu0 %1221
          %1223 = vrot.lane.b32.xlu0 %v1123, 1
          %v1224 = vpop.permute.xlu0 %1223
          %1257 = vrot.lane.b32.xlu0 %v1161, 9
          %v1258 = vpop.permute.xlu0 %1257
          %1259 = vrot.lane.b32.xlu0 %v1162, 9
          %v1260 = vpop.permute.xlu0 %1259
          %1261 = vrot.lane.b32.xlu0 %v1163, 9
          %v1262 = vpop.permute.xlu0 %1261
          %1263 = vrot.lane.b32.xlu0 %v1164, 9
          %v1264 = vpop.permute.xlu0 %1263
          %1265 = vrot.lane.b32.xlu0 %v1165, 9
          %v1266 = vpop.permute.xlu0 %1265
          %1267 = vrot.lane.b32.xlu0 %v1166, 9
          %v1268 = vpop.permute.xlu0 %1267
          %1269 = vrot.lane.b32.xlu0 %v1167, 9
          %v1270 = vpop.permute.xlu0 %1269
          %1271 = vrot.lane.b32.xlu0 %v1168, 9
          %v1272 = vpop.permute.xlu0 %1271
          %1273 = vrot.lane.b32.xlu0 %v1169, 9
          %v1274 = vpop.permute.xlu0 %1273
          %1275 = vrot.lane.b32.xlu0 %v1170, 9
          %v1276 = vpop.permute.xlu0 %1275
          %1277 = vrot.lane.b32.xlu0 %v1171, 9
          %v1278 = vpop.permute.xlu0 %1277
          %1279 = vrot.lane.b32.xlu0 %v1172, 9
          %v1280 = vpop.permute.xlu0 %1279
          %1281 = vrot.lane.b32.xlu0 %v1173, 9
          %v1282 = vpop.permute.xlu0 %1281
          %1283 = vrot.lane.b32.xlu0 %v1174, 9
          %v1284 = vpop.permute.xlu0 %1283
          %1285 = vrot.lane.b32.xlu0 %v1175, 9
          %v1286 = vpop.permute.xlu0 %1285
          %1287 = vrot.lane.b32.xlu0 %v1176, 9
          %v1288 = vpop.permute.xlu0 %1287
          %vm1305 = vcmask 7168
          %v1306 = vsel %vm1305, 1.0, %v1194
          %v1307 = vsel %vm1305, 1.0, %v1196
          %v1308 = vsel %vm1305, 1.0, %v1198
          %v1309 = vsel %vm1305, 1.0, %v1200
          %v1310 = vsel %vm1305, 1.0, %v1202
          %v1311 = vsel %vm1305, 1.0, %v1204
          %v1312 = vsel %vm1305, 1.0, %v1206
          %v1313 = vsel %vm1305, 1.0, %v1208
          %v1314 = vsel %vm1305, 1.0, %v1210
          %v1315 = vsel %vm1305, 1.0, %v1212
          %v1316 = vsel %vm1305, 1.0, %v1214
          %v1317 = vsel %vm1305, 1.0, %v1216
          %v1318 = vsel %vm1305, 1.0, %v1218
          %v1319 = vsel %vm1305, 1.0, %v1220
          %v1320 = vsel %vm1305, 1.0, %v1222
          %v1321 = vsel %vm1305, 1.0, %v1224
          %vm1322 = vcmask 72704
          %v1323 = vsel %vm1322, %v1306, %v1258
          %v1324 = vsel %vm1322, %v1307, %v1260
          %v1325 = vsel %vm1322, %v1308, %v1262
          %v1326 = vsel %vm1322, %v1309, %v1264
          %v1327 = vsel %vm1322, %v1310, %v1266
          %v1328 = vsel %vm1322, %v1311, %v1268
          %v1329 = vsel %vm1322, %v1312, %v1270
          %v1330 = vsel %vm1322, %v1313, %v1272
          %v1331 = vsel %vm1322, %v1314, %v1274
          %v1332 = vsel %vm1322, %v1315, %v1276
          %v1333 = vsel %vm1322, %v1316, %v1278
          %v1334 = vsel %vm1322, %v1317, %v1280
          %v1335 = vsel %vm1322, %v1318, %v1282
          %v1336 = vsel %vm1322, %v1319, %v1284
          %v1337 = vsel %vm1322, %v1320, %v1286
          %v1338 = vsel %vm1322, %v1321, %v1288
          %s1339 = scalar_lea.vmem [#allocation4], %s446
          %vm1340 = vcmask 138240
          %1341 = vst.msk [vmem:[%s1339] sm:$0xff] %vm1340, %v1323
          %1342 = vst.msk [vmem:[%s1339 + $0x8] sm:$0xff] %vm1340, %v1324
          %1343 = vst.msk [vmem:[%s1339 + $0x10] sm:$0xff] %vm1340, %v1325
          %1344 = vst.msk [vmem:[%s1339 + $0x18] sm:$0xff] %vm1340, %v1326
          %1345 = vst.msk [vmem:[%s1339 + $0x20] sm:$0xff] %vm1340, %v1327
          %1346 = vst.msk [vmem:[%s1339 + $0x28] sm:$0xff] %vm1340, %v1328
          %1347 = vst.msk [vmem:[%s1339 + $0x30] sm:$0xff] %vm1340, %v1329
          %1348 = vst.msk [vmem:[%s1339 + $0x38] sm:$0xff] %vm1340, %v1330
          %1349 = vst.msk [vmem:[%s1339 + $0x40] sm:$0xff] %vm1340, %v1331
          %1350 = vst.msk [vmem:[%s1339 + $0x48] sm:$0xff] %vm1340, %v1332
          %1351 = vst.msk [vmem:[%s1339 + $0x50] sm:$0xff] %vm1340, %v1333
          %1352 = vst.msk [vmem:[%s1339 + $0x58] sm:$0xff] %vm1340, %v1334
          %1353 = vst.msk [vmem:[%s1339 + $0x60] sm:$0xff] %vm1340, %v1335
          %1354 = vst.msk [vmem:[%s1339 + $0x68] sm:$0xff] %vm1340, %v1336
          %1355 = vst.msk [vmem:[%s1339 + $0x70] sm:$0xff] %vm1340, %v1337
          %1356 = vst.msk [vmem:[%s1339 + $0x78] sm:$0xff] %vm1340, %v1338
        $region64: #{tpu_custom_call.1} parent=55 // pred_fallthru
          _
        %p1357 = scmp.gt.s32.totalorder %s28, 0
        %p1358 = pnand %p1357, %p448
        %p1359 = pneg %p1358
        %p1360 = scmp.eq.s32.totalorder %s30, 0
        %p1361 = pnand %p1359, %p1360
        %p1362 = pneg %p1361
        // Predicated region
        $region65: #{tpu_custom_call.1} parent=55 // pred_check
          _
        $region66: #{tpu_custom_call.1} parent=55 // pred_check_branch
          %1364 = sbr.rel (%p1361) target = $region68
        $region67: #{tpu_custom_call.1} parent=55 // pred_region
          %v1365 = vld [vmem:[#allocation5] sm:$0xff]
          %v1366 = vld [vmem:[#allocation5 + $0x8] sm:$0xff]
          %v1367 = vld [vmem:[#allocation5 + $0x10] sm:$0xff]
          %v1368 = vld [vmem:[#allocation5 + $0x18] sm:$0xff]
          %v1369 = vld [vmem:[#allocation5 + $0x20] sm:$0xff]
          %v1370 = vld [vmem:[#allocation5 + $0x28] sm:$0xff]
          %v1371 = vld [vmem:[#allocation5 + $0x30] sm:$0xff]
          %v1372 = vld [vmem:[#allocation5 + $0x38] sm:$0xff]
          %v1373 = vld [vmem:[#allocation5 + $0x40] sm:$0xff]
          %v1374 = vld [vmem:[#allocation5 + $0x48] sm:$0xff]
          %v1375 = vld [vmem:[#allocation5 + $0x50] sm:$0xff]
          %v1376 = vld [vmem:[#allocation5 + $0x58] sm:$0xff]
          %v1377 = vld [vmem:[#allocation5 + $0x60] sm:$0xff]
          %v1378 = vld [vmem:[#allocation5 + $0x68] sm:$0xff]
          %v1379 = vld [vmem:[#allocation5 + $0x70] sm:$0xff]
          %v1380 = vld [vmem:[#allocation5 + $0x78] sm:$0xff]
          %v1381 = vld [vmem:[#allocation5 + $0x80] sm:$0xff]
          %v1382 = vld [vmem:[#allocation5 + $0x88] sm:$0xff]
          %v1383 = vld [vmem:[#allocation5 + $0x90] sm:$0xff]
          %v1384 = vld [vmem:[#allocation5 + $0x98] sm:$0xff]
          %v1385 = vld [vmem:[#allocation5 + $0xa0] sm:$0xff]
          %v1386 = vld [vmem:[#allocation5 + $0xa8] sm:$0xff]
          %v1387 = vld [vmem:[#allocation5 + $0xb0] sm:$0xff]
          %v1388 = vld [vmem:[#allocation5 + $0xb8] sm:$0xff]
          %v1389 = vld [vmem:[#allocation5 + $0xc0] sm:$0xff]
          %v1390 = vld [vmem:[#allocation5 + $0xc8] sm:$0xff]
          %v1391 = vld [vmem:[#allocation5 + $0xd0] sm:$0xff]
          %v1392 = vld [vmem:[#allocation5 + $0xd8] sm:$0xff]
          %v1393 = vld [vmem:[#allocation5 + $0xe0] sm:$0xff]
          %v1394 = vld [vmem:[#allocation5 + $0xe8] sm:$0xff]
          %v1395 = vld [vmem:[#allocation5 + $0xf0] sm:$0xff]
          %v1396 = vld [vmem:[#allocation5 + $0xf8] sm:$0xff]
          %v1397 = vld [vmem:[#allocation5 + $0x100] sm:$0xff]
          %v1398 = vld [vmem:[#allocation5 + $0x108] sm:$0xff]
          %v1399 = vld [vmem:[#allocation5 + $0x110] sm:$0xff]
          %v1400 = vld [vmem:[#allocation5 + $0x118] sm:$0xff]
          %v1401 = vld [vmem:[#allocation5 + $0x120] sm:$0xff]
          %v1402 = vld [vmem:[#allocation5 + $0x128] sm:$0xff]
          %v1403 = vld [vmem:[#allocation5 + $0x130] sm:$0xff]
          %v1404 = vld [vmem:[#allocation5 + $0x138] sm:$0xff]
          %v1405 = vld [vmem:[#allocation5 + $0x140] sm:$0xff]
          %v1406 = vld [vmem:[#allocation5 + $0x148] sm:$0xff]
          %v1407 = vld [vmem:[#allocation5 + $0x150] sm:$0xff]
          %v1408 = vld [vmem:[#allocation5 + $0x158] sm:$0xff]
          %v1409 = vld [vmem:[#allocation5 + $0x160] sm:$0xff]
          %v1410 = vld [vmem:[#allocation5 + $0x168] sm:$0xff]
          %v1411 = vld [vmem:[#allocation5 + $0x170] sm:$0xff]
          %v1412 = vld [vmem:[#allocation5 + $0x178] sm:$0xff]
          %v1413 = vld [vmem:[#allocation5 + $0x180] sm:$0xff]
          %v1414 = vld [vmem:[#allocation5 + $0x188] sm:$0xff]
          %v1415 = vld [vmem:[#allocation5 + $0x190] sm:$0xff]
          %v1416 = vld [vmem:[#allocation5 + $0x198] sm:$0xff]
          %v1417 = vld [vmem:[#allocation5 + $0x1a0] sm:$0xff]
          %v1418 = vld [vmem:[#allocation5 + $0x1a8] sm:$0xff]
          %v1419 = vld [vmem:[#allocation5 + $0x1b0] sm:$0xff]
          %v1420 = vld [vmem:[#allocation5 + $0x1b8] sm:$0xff]
          %v1421 = vld [vmem:[#allocation5 + $0x1c0] sm:$0xff]
          %v1422 = vld [vmem:[#allocation5 + $0x1c8] sm:$0xff]
          %v1423 = vld [vmem:[#allocation5 + $0x1d0] sm:$0xff]
          %v1424 = vld [vmem:[#allocation5 + $0x1d8] sm:$0xff]
          %v1425 = vld [vmem:[#allocation5 + $0x1e0] sm:$0xff]
          %v1426 = vld [vmem:[#allocation5 + $0x1e8] sm:$0xff]
          %v1427 = vld [vmem:[#allocation5 + $0x1f0] sm:$0xff]
          %v1428 = vld [vmem:[#allocation5 + $0x1f8] sm:$0xff]
          %v1429 = vld [vmem:[#allocation3] sm:$0xff]
          %v1430 = vld [vmem:[#allocation3 + $0x8] sm:$0xff]
          %v1431 = vld [vmem:[#allocation3 + $0x10] sm:$0xff]
          %v1432 = vld [vmem:[#allocation3 + $0x18] sm:$0xff]
          %v1433 = vld [vmem:[#allocation3 + $0x20] sm:$0xff]
          %v1434 = vld [vmem:[#allocation3 + $0x28] sm:$0xff]
          %v1435 = vld [vmem:[#allocation3 + $0x30] sm:$0xff]
          %v1436 = vld [vmem:[#allocation3 + $0x38] sm:$0xff]
          %v1437 = vld [vmem:[#allocation3 + $0x40] sm:$0xff]
          %v1438 = vld [vmem:[#allocation3 + $0x48] sm:$0xff]
          %v1439 = vld [vmem:[#allocation3 + $0x50] sm:$0xff]
          %v1440 = vld [vmem:[#allocation3 + $0x58] sm:$0xff]
          %v1441 = vld [vmem:[#allocation3 + $0x60] sm:$0xff]
          %v1442 = vld [vmem:[#allocation3 + $0x68] sm:$0xff]
          %v1443 = vld [vmem:[#allocation3 + $0x70] sm:$0xff]
          %v1444 = vld [vmem:[#allocation3 + $0x78] sm:$0xff]
          %v1445 = vld [vmem:[#allocation3 + $0x80] sm:$0xff]
          %v1446 = vld [vmem:[#allocation3 + $0x88] sm:$0xff]
          %v1447 = vld [vmem:[#allocation3 + $0x90] sm:$0xff]
          %v1448 = vld [vmem:[#allocation3 + $0x98] sm:$0xff]
          %v1449 = vld [vmem:[#allocation3 + $0xa0] sm:$0xff]
          %v1450 = vld [vmem:[#allocation3 + $0xa8] sm:$0xff]
          %v1451 = vld [vmem:[#allocation3 + $0xb0] sm:$0xff]
          %v1452 = vld [vmem:[#allocation3 + $0xb8] sm:$0xff]
          %v1453 = vld [vmem:[#allocation3 + $0xc0] sm:$0xff]
          %v1454 = vld [vmem:[#allocation3 + $0xc8] sm:$0xff]
          %v1455 = vld [vmem:[#allocation3 + $0xd0] sm:$0xff]
          %v1456 = vld [vmem:[#allocation3 + $0xd8] sm:$0xff]
          %v1457 = vld [vmem:[#allocation3 + $0xe0] sm:$0xff]
          %v1458 = vld [vmem:[#allocation3 + $0xe8] sm:$0xff]
          %v1459 = vld [vmem:[#allocation3 + $0xf0] sm:$0xff]
          %v1460 = vld [vmem:[#allocation3 + $0xf8] sm:$0xff]
          %v1461 = vld [vmem:[#allocation3 + $0x100] sm:$0xff]
          %v1462 = vld [vmem:[#allocation3 + $0x108] sm:$0xff]
          %v1463 = vld [vmem:[#allocation3 + $0x110] sm:$0xff]
          %v1464 = vld [vmem:[#allocation3 + $0x118] sm:$0xff]
          %v1465 = vld [vmem:[#allocation3 + $0x120] sm:$0xff]
          %v1466 = vld [vmem:[#allocation3 + $0x128] sm:$0xff]
          %v1467 = vld [vmem:[#allocation3 + $0x130] sm:$0xff]
          %v1468 = vld [vmem:[#allocation3 + $0x138] sm:$0xff]
          %v1469 = vld [vmem:[#allocation3 + $0x140] sm:$0xff]
          %v1470 = vld [vmem:[#allocation3 + $0x148] sm:$0xff]
          %v1471 = vld [vmem:[#allocation3 + $0x150] sm:$0xff]
          %v1472 = vld [vmem:[#allocation3 + $0x158] sm:$0xff]
          %v1473 = vld [vmem:[#allocation3 + $0x160] sm:$0xff]
          %v1474 = vld [vmem:[#allocation3 + $0x168] sm:$0xff]
          %v1475 = vld [vmem:[#allocation3 + $0x170] sm:$0xff]
          %v1476 = vld [vmem:[#allocation3 + $0x178] sm:$0xff]
          %v1477 = vld [vmem:[#allocation3 + $0x180] sm:$0xff]
          %v1478 = vld [vmem:[#allocation3 + $0x188] sm:$0xff]
          %v1479 = vld [vmem:[#allocation3 + $0x190] sm:$0xff]
          %v1480 = vld [vmem:[#allocation3 + $0x198] sm:$0xff]
          %v1481 = vld [vmem:[#allocation3 + $0x1a0] sm:$0xff]
          %v1482 = vld [vmem:[#allocation3 + $0x1a8] sm:$0xff]
          %v1483 = vld [vmem:[#allocation3 + $0x1b0] sm:$0xff]
          %v1484 = vld [vmem:[#allocation3 + $0x1b8] sm:$0xff]
          %v1485 = vld [vmem:[#allocation3 + $0x1c0] sm:$0xff]
          %v1486 = vld [vmem:[#allocation3 + $0x1c8] sm:$0xff]
          %v1487 = vld [vmem:[#allocation3 + $0x1d0] sm:$0xff]
          %v1488 = vld [vmem:[#allocation3 + $0x1d8] sm:$0xff]
          %v1489 = vld [vmem:[#allocation3 + $0x1e0] sm:$0xff]
          %v1490 = vld [vmem:[#allocation3 + $0x1e8] sm:$0xff]
          %v1491 = vld [vmem:[#allocation3 + $0x1f0] sm:$0xff]
          %v1492 = vld [vmem:[#allocation3 + $0x1f8] sm:$0xff]
          %1494 = vset.pattern.permute.xlu0 1
          %1495 = vperm.xlu0 %1494, %v1365
          %v1496 = vpop.permute.xlu0 %1495
          %1499 = vset.pattern.permute.xlu0 1
          %1500 = vperm.xlu0 %1499, %v1366
          %v1501 = vpop.permute.xlu0 %1500
          %1504 = vset.pattern.permute.xlu0 1
          %1505 = vperm.xlu0 %1504, %v1367
          %v1506 = vpop.permute.xlu0 %1505
          %1509 = vset.pattern.permute.xlu0 1
          %1510 = vperm.xlu0 %1509, %v1368
          %v1511 = vpop.permute.xlu0 %1510
          %1514 = vset.pattern.permute.xlu0 1
          %1515 = vperm.xlu0 %1514, %v1369
          %v1516 = vpop.permute.xlu0 %1515
          %1519 = vset.pattern.permute.xlu0 1
          %1520 = vperm.xlu0 %1519, %v1370
          %v1521 = vpop.permute.xlu0 %1520
          %1524 = vset.pattern.permute.xlu0 1
          %1525 = vperm.xlu0 %1524, %v1371
          %v1526 = vpop.permute.xlu0 %1525
          %1529 = vset.pattern.permute.xlu0 1
          %1530 = vperm.xlu0 %1529, %v1372
          %v1531 = vpop.permute.xlu0 %1530
          %1534 = vset.pattern.permute.xlu0 1
          %1535 = vperm.xlu0 %1534, %v1373
          %v1536 = vpop.permute.xlu0 %1535
          %1539 = vset.pattern.permute.xlu0 1
          %1540 = vperm.xlu0 %1539, %v1374
          %v1541 = vpop.permute.xlu0 %1540
          %1544 = vset.pattern.permute.xlu0 1
          %1545 = vperm.xlu0 %1544, %v1375
          %v1546 = vpop.permute.xlu0 %1545
          %1549 = vset.pattern.permute.xlu0 1
          %1550 = vperm.xlu0 %1549, %v1376
          %v1551 = vpop.permute.xlu0 %1550
          %1554 = vset.pattern.permute.xlu0 1
          %1555 = vperm.xlu0 %1554, %v1377
          %v1556 = vpop.permute.xlu0 %1555
          %1559 = vset.pattern.permute.xlu0 1
          %1560 = vperm.xlu0 %1559, %v1378
          %v1561 = vpop.permute.xlu0 %1560
          %1564 = vset.pattern.permute.xlu0 1
          %1565 = vperm.xlu0 %1564, %v1379
          %v1566 = vpop.permute.xlu0 %1565
          %1569 = vset.pattern.permute.xlu0 1
          %1570 = vperm.xlu0 %1569, %v1380
          %v1571 = vpop.permute.xlu0 %1570
          %1574 = vset.pattern.permute.xlu0 1
          %1575 = vperm.xlu0 %1574, %v1381
          %v1576 = vpop.permute.xlu0 %1575
          %1579 = vset.pattern.permute.xlu0 1
          %1580 = vperm.xlu0 %1579, %v1382
          %v1581 = vpop.permute.xlu0 %1580
          %1584 = vset.pattern.permute.xlu0 1
          %1585 = vperm.xlu0 %1584, %v1383
          %v1586 = vpop.permute.xlu0 %1585
          %1589 = vset.pattern.permute.xlu0 1
          %1590 = vperm.xlu0 %1589, %v1384
          %v1591 = vpop.permute.xlu0 %1590
          %1594 = vset.pattern.permute.xlu0 1
          %1595 = vperm.xlu0 %1594, %v1385
          %v1596 = vpop.permute.xlu0 %1595
          %1599 = vset.pattern.permute.xlu0 1
          %1600 = vperm.xlu0 %1599, %v1386
          %v1601 = vpop.permute.xlu0 %1600
          %1604 = vset.pattern.permute.xlu0 1
          %1605 = vperm.xlu0 %1604, %v1387
          %v1606 = vpop.permute.xlu0 %1605
          %1609 = vset.pattern.permute.xlu0 1
          %1610 = vperm.xlu0 %1609, %v1388
          %v1611 = vpop.permute.xlu0 %1610
          %1614 = vset.pattern.permute.xlu0 1
          %1615 = vperm.xlu0 %1614, %v1389
          %v1616 = vpop.permute.xlu0 %1615
          %1619 = vset.pattern.permute.xlu0 1
          %1620 = vperm.xlu0 %1619, %v1390
          %v1621 = vpop.permute.xlu0 %1620
          %1624 = vset.pattern.permute.xlu0 1
          %1625 = vperm.xlu0 %1624, %v1391
          %v1626 = vpop.permute.xlu0 %1625
          %1629 = vset.pattern.permute.xlu0 1
          %1630 = vperm.xlu0 %1629, %v1392
          %v1631 = vpop.permute.xlu0 %1630
          %1634 = vset.pattern.permute.xlu0 1
          %1635 = vperm.xlu0 %1634, %v1393
          %v1636 = vpop.permute.xlu0 %1635
          %1639 = vset.pattern.permute.xlu0 1
          %1640 = vperm.xlu0 %1639, %v1394
          %v1641 = vpop.permute.xlu0 %1640
          %1644 = vset.pattern.permute.xlu0 1
          %1645 = vperm.xlu0 %1644, %v1395
          %v1646 = vpop.permute.xlu0 %1645
          %1649 = vset.pattern.permute.xlu0 1
          %1650 = vperm.xlu0 %1649, %v1396
          %v1651 = vpop.permute.xlu0 %1650
          %1654 = vset.pattern.permute.xlu0 1
          %1655 = vperm.xlu0 %1654, %v1397
          %v1656 = vpop.permute.xlu0 %1655
          %1659 = vset.pattern.permute.xlu0 1
          %1660 = vperm.xlu0 %1659, %v1398
          %v1661 = vpop.permute.xlu0 %1660
          %1664 = vset.pattern.permute.xlu0 1
          %1665 = vperm.xlu0 %1664, %v1399
          %v1666 = vpop.permute.xlu0 %1665
          %1669 = vset.pattern.permute.xlu0 1
          %1670 = vperm.xlu0 %1669, %v1400
          %v1671 = vpop.permute.xlu0 %1670
          %1674 = vset.pattern.permute.xlu0 1
          %1675 = vperm.xlu0 %1674, %v1401
          %v1676 = vpop.permute.xlu0 %1675
          %1679 = vset.pattern.permute.xlu0 1
          %1680 = vperm.xlu0 %1679, %v1402
          %v1681 = vpop.permute.xlu0 %1680
          %1684 = vset.pattern.permute.xlu0 1
          %1685 = vperm.xlu0 %1684, %v1403
          %v1686 = vpop.permute.xlu0 %1685
          %1689 = vset.pattern.permute.xlu0 1
          %1690 = vperm.xlu0 %1689, %v1404
          %v1691 = vpop.permute.xlu0 %1690
          %1694 = vset.pattern.permute.xlu0 1
          %1695 = vperm.xlu0 %1694, %v1405
          %v1696 = vpop.permute.xlu0 %1695
          %1699 = vset.pattern.permute.xlu0 1
          %1700 = vperm.xlu0 %1699, %v1406
          %v1701 = vpop.permute.xlu0 %1700
          %1704 = vset.pattern.permute.xlu0 1
          %1705 = vperm.xlu0 %1704, %v1407
          %v1706 = vpop.permute.xlu0 %1705
          %1709 = vset.pattern.permute.xlu0 1
          %1710 = vperm.xlu0 %1709, %v1408
          %v1711 = vpop.permute.xlu0 %1710
          %1714 = vset.pattern.permute.xlu0 1
          %1715 = vperm.xlu0 %1714, %v1409
          %v1716 = vpop.permute.xlu0 %1715
          %1719 = vset.pattern.permute.xlu0 1
          %1720 = vperm.xlu0 %1719, %v1410
          %v1721 = vpop.permute.xlu0 %1720
          %1724 = vset.pattern.permute.xlu0 1
          %1725 = vperm.xlu0 %1724, %v1411
          %v1726 = vpop.permute.xlu0 %1725
          %1729 = vset.pattern.permute.xlu0 1
          %1730 = vperm.xlu0 %1729, %v1412
          %v1731 = vpop.permute.xlu0 %1730
          %1734 = vset.pattern.permute.xlu0 1
          %1735 = vperm.xlu0 %1734, %v1413
          %v1736 = vpop.permute.xlu0 %1735
          %1739 = vset.pattern.permute.xlu0 1
          %1740 = vperm.xlu0 %1739, %v1414
          %v1741 = vpop.permute.xlu0 %1740
          %1744 = vset.pattern.permute.xlu0 1
          %1745 = vperm.xlu0 %1744, %v1415
          %v1746 = vpop.permute.xlu0 %1745
          %1749 = vset.pattern.permute.xlu0 1
          %1750 = vperm.xlu0 %1749, %v1416
          %v1751 = vpop.permute.xlu0 %1750
          %1754 = vset.pattern.permute.xlu0 1
          %1755 = vperm.xlu0 %1754, %v1417
          %v1756 = vpop.permute.xlu0 %1755
          %1759 = vset.pattern.permute.xlu0 1
          %1760 = vperm.xlu0 %1759, %v1418
          %v1761 = vpop.permute.xlu0 %1760
          %1764 = vset.pattern.permute.xlu0 1
          %1765 = vperm.xlu0 %1764, %v1419
          %v1766 = vpop.permute.xlu0 %1765
          %1769 = vset.pattern.permute.xlu0 1
          %1770 = vperm.xlu0 %1769, %v1420
          %v1771 = vpop.permute.xlu0 %1770
          %1774 = vset.pattern.permute.xlu0 1
          %1775 = vperm.xlu0 %1774, %v1421
          %v1776 = vpop.permute.xlu0 %1775
          %1779 = vset.pattern.permute.xlu0 1
          %1780 = vperm.xlu0 %1779, %v1422
          %v1781 = vpop.permute.xlu0 %1780
          %1784 = vset.pattern.permute.xlu0 1
          %1785 = vperm.xlu0 %1784, %v1423
          %v1786 = vpop.permute.xlu0 %1785
          %1789 = vset.pattern.permute.xlu0 1
          %1790 = vperm.xlu0 %1789, %v1424
          %v1791 = vpop.permute.xlu0 %1790
          %1794 = vset.pattern.permute.xlu0 1
          %1795 = vperm.xlu0 %1794, %v1425
          %v1796 = vpop.permute.xlu0 %1795
          %1799 = vset.pattern.permute.xlu0 1
          %1800 = vperm.xlu0 %1799, %v1426
          %v1801 = vpop.permute.xlu0 %1800
          %1804 = vset.pattern.permute.xlu0 1
          %1805 = vperm.xlu0 %1804, %v1427
          %v1806 = vpop.permute.xlu0 %1805
          %1809 = vset.pattern.permute.xlu0 1
          %1810 = vperm.xlu0 %1809, %v1428
          %v1811 = vpop.permute.xlu0 %1810
          %v1813 = vmul.f32 %v1429, %v1496
          %v1814 = vmul.f32 %v1430, %v1501
          %v1815 = vmul.f32 %v1431, %v1506
          %v1816 = vmul.f32 %v1432, %v1511
          %v1817 = vmul.f32 %v1433, %v1516
          %v1818 = vmul.f32 %v1434, %v1521
          %v1819 = vmul.f32 %v1435, %v1526
          %v1820 = vmul.f32 %v1436, %v1531
          %v1821 = vmul.f32 %v1437, %v1536
          %v1822 = vmul.f32 %v1438, %v1541
          %v1823 = vmul.f32 %v1439, %v1546
          %v1824 = vmul.f32 %v1440, %v1551
          %v1825 = vmul.f32 %v1441, %v1556
          %v1826 = vmul.f32 %v1442, %v1561
          %v1827 = vmul.f32 %v1443, %v1566
          %v1828 = vmul.f32 %v1444, %v1571
          %v1829 = vmul.f32 %v1445, %v1576
          %v1830 = vmul.f32 %v1446, %v1581
          %v1831 = vmul.f32 %v1447, %v1586
          %v1832 = vmul.f32 %v1448, %v1591
          %v1833 = vmul.f32 %v1449, %v1596
          %v1834 = vmul.f32 %v1450, %v1601
          %v1835 = vmul.f32 %v1451, %v1606
          %v1836 = vmul.f32 %v1452, %v1611
          %v1837 = vmul.f32 %v1453, %v1616
          %v1838 = vmul.f32 %v1454, %v1621
          %v1839 = vmul.f32 %v1455, %v1626
          %v1840 = vmul.f32 %v1456, %v1631
          %v1841 = vmul.f32 %v1457, %v1636
          %v1842 = vmul.f32 %v1458, %v1641
          %v1843 = vmul.f32 %v1459, %v1646
          %v1844 = vmul.f32 %v1460, %v1651
          %v1845 = vmul.f32 %v1461, %v1656
          %v1846 = vmul.f32 %v1462, %v1661
          %v1847 = vmul.f32 %v1463, %v1666
          %v1848 = vmul.f32 %v1464, %v1671
          %v1849 = vmul.f32 %v1465, %v1676
          %v1850 = vmul.f32 %v1466, %v1681
          %v1851 = vmul.f32 %v1467, %v1686
          %v1852 = vmul.f32 %v1468, %v1691
          %v1853 = vmul.f32 %v1469, %v1696
          %v1854 = vmul.f32 %v1470, %v1701
          %v1855 = vmul.f32 %v1471, %v1706
          %v1856 = vmul.f32 %v1472, %v1711
          %v1857 = vmul.f32 %v1473, %v1716
          %v1858 = vmul.f32 %v1474, %v1721
          %v1859 = vmul.f32 %v1475, %v1726
          %v1860 = vmul.f32 %v1476, %v1731
          %v1861 = vmul.f32 %v1477, %v1736
          %v1862 = vmul.f32 %v1478, %v1741
          %v1863 = vmul.f32 %v1479, %v1746
          %v1864 = vmul.f32 %v1480, %v1751
          %v1865 = vmul.f32 %v1481, %v1756
          %v1866 = vmul.f32 %v1482, %v1761
          %v1867 = vmul.f32 %v1483, %v1766
          %v1868 = vmul.f32 %v1484, %v1771
          %v1869 = vmul.f32 %v1485, %v1776
          %v1870 = vmul.f32 %v1486, %v1781
          %v1871 = vmul.f32 %v1487, %v1786
          %v1872 = vmul.f32 %v1488, %v1791
          %v1873 = vmul.f32 %v1489, %v1796
          %v1874 = vmul.f32 %v1490, %v1801
          %v1875 = vmul.f32 %v1491, %v1806
          %v1876 = vmul.f32 %v1492, %v1811
          %1877 = vset.pattern.permute.xlu0 0
          %1878 = vperm.xlu0 %1877, %v1365
          %v1879 = vpop.permute.xlu0 %1878
          %1881 = vset.pattern.permute.xlu0 0
          %1882 = vperm.xlu0 %1881, %v1366
          %v1883 = vpop.permute.xlu0 %1882
          %1885 = vset.pattern.permute.xlu0 0
          %1886 = vperm.xlu0 %1885, %v1367
          %v1887 = vpop.permute.xlu0 %1886
          %1889 = vset.pattern.permute.xlu0 0
          %1890 = vperm.xlu0 %1889, %v1368
          %v1891 = vpop.permute.xlu0 %1890
          %1893 = vset.pattern.permute.xlu0 0
          %1894 = vperm.xlu0 %1893, %v1369
          %v1895 = vpop.permute.xlu0 %1894
          %1897 = vset.pattern.permute.xlu0 0
          %1898 = vperm.xlu0 %1897, %v1370
          %v1899 = vpop.permute.xlu0 %1898
          %1901 = vset.pattern.permute.xlu0 0
          %1902 = vperm.xlu0 %1901, %v1371
          %v1903 = vpop.permute.xlu0 %1902
          %1905 = vset.pattern.permute.xlu0 0
          %1906 = vperm.xlu0 %1905, %v1372
          %v1907 = vpop.permute.xlu0 %1906
          %1909 = vset.pattern.permute.xlu0 0
          %1910 = vperm.xlu0 %1909, %v1373
          %v1911 = vpop.permute.xlu0 %1910
          %1913 = vset.pattern.permute.xlu0 0
          %1914 = vperm.xlu0 %1913, %v1374
          %v1915 = vpop.permute.xlu0 %1914
          %1917 = vset.pattern.permute.xlu0 0
          %1918 = vperm.xlu0 %1917, %v1375
          %v1919 = vpop.permute.xlu0 %1918
          %1921 = vset.pattern.permute.xlu0 0
          %1922 = vperm.xlu0 %1921, %v1376
          %v1923 = vpop.permute.xlu0 %1922
          %1925 = vset.pattern.permute.xlu0 0
          %1926 = vperm.xlu0 %1925, %v1377
          %v1927 = vpop.permute.xlu0 %1926
          %1929 = vset.pattern.permute.xlu0 0
          %1930 = vperm.xlu0 %1929, %v1378
          %v1931 = vpop.permute.xlu0 %1930
          %1933 = vset.pattern.permute.xlu0 0
          %1934 = vperm.xlu0 %1933, %v1379
          %v1935 = vpop.permute.xlu0 %1934
          %1937 = vset.pattern.permute.xlu0 0
          %1938 = vperm.xlu0 %1937, %v1380
          %v1939 = vpop.permute.xlu0 %1938
          %1941 = vset.pattern.permute.xlu0 0
          %1942 = vperm.xlu0 %1941, %v1381
          %v1943 = vpop.permute.xlu0 %1942
          %1945 = vset.pattern.permute.xlu0 0
          %1946 = vperm.xlu0 %1945, %v1382
          %v1947 = vpop.permute.xlu0 %1946
          %1949 = vset.pattern.permute.xlu0 0
          %1950 = vperm.xlu0 %1949, %v1383
          %v1951 = vpop.permute.xlu0 %1950
          %1953 = vset.pattern.permute.xlu0 0
          %1954 = vperm.xlu0 %1953, %v1384
          %v1955 = vpop.permute.xlu0 %1954
          %1957 = vset.pattern.permute.xlu0 0
          %1958 = vperm.xlu0 %1957, %v1385
          %v1959 = vpop.permute.xlu0 %1958
          %1961 = vset.pattern.permute.xlu0 0
          %1962 = vperm.xlu0 %1961, %v1386
          %v1963 = vpop.permute.xlu0 %1962
          %1965 = vset.pattern.permute.xlu0 0
          %1966 = vperm.xlu0 %1965, %v1387
          %v1967 = vpop.permute.xlu0 %1966
          %1969 = vset.pattern.permute.xlu0 0
          %1970 = vperm.xlu0 %1969, %v1388
          %v1971 = vpop.permute.xlu0 %1970
          %1973 = vset.pattern.permute.xlu0 0
          %1974 = vperm.xlu0 %1973, %v1389
          %v1975 = vpop.permute.xlu0 %1974
          %1977 = vset.pattern.permute.xlu0 0
          %1978 = vperm.xlu0 %1977, %v1390
          %v1979 = vpop.permute.xlu0 %1978
          %1981 = vset.pattern.permute.xlu0 0
          %1982 = vperm.xlu0 %1981, %v1391
          %v1983 = vpop.permute.xlu0 %1982
          %1985 = vset.pattern.permute.xlu0 0
          %1986 = vperm.xlu0 %1985, %v1392
          %v1987 = vpop.permute.xlu0 %1986
          %1989 = vset.pattern.permute.xlu0 0
          %1990 = vperm.xlu0 %1989, %v1393
          %v1991 = vpop.permute.xlu0 %1990
          %1993 = vset.pattern.permute.xlu0 0
          %1994 = vperm.xlu0 %1993, %v1394
          %v1995 = vpop.permute.xlu0 %1994
          %1997 = vset.pattern.permute.xlu0 0
          %1998 = vperm.xlu0 %1997, %v1395
          %v1999 = vpop.permute.xlu0 %1998
          %2001 = vset.pattern.permute.xlu0 0
          %2002 = vperm.xlu0 %2001, %v1396
          %v2003 = vpop.permute.xlu0 %2002
          %2005 = vset.pattern.permute.xlu0 0
          %2006 = vperm.xlu0 %2005, %v1397
          %v2007 = vpop.permute.xlu0 %2006
          %2009 = vset.pattern.permute.xlu0 0
          %2010 = vperm.xlu0 %2009, %v1398
          %v2011 = vpop.permute.xlu0 %2010
          %2013 = vset.pattern.permute.xlu0 0
          %2014 = vperm.xlu0 %2013, %v1399
          %v2015 = vpop.permute.xlu0 %2014
          %2017 = vset.pattern.permute.xlu0 0
          %2018 = vperm.xlu0 %2017, %v1400
          %v2019 = vpop.permute.xlu0 %2018
          %2021 = vset.pattern.permute.xlu0 0
          %2022 = vperm.xlu0 %2021, %v1401
          %v2023 = vpop.permute.xlu0 %2022
          %2025 = vset.pattern.permute.xlu0 0
          %2026 = vperm.xlu0 %2025, %v1402
          %v2027 = vpop.permute.xlu0 %2026
          %2029 = vset.pattern.permute.xlu0 0
          %2030 = vperm.xlu0 %2029, %v1403
          %v2031 = vpop.permute.xlu0 %2030
          %2033 = vset.pattern.permute.xlu0 0
          %2034 = vperm.xlu0 %2033, %v1404
          %v2035 = vpop.permute.xlu0 %2034
          %2037 = vset.pattern.permute.xlu0 0
          %2038 = vperm.xlu0 %2037, %v1405
          %v2039 = vpop.permute.xlu0 %2038
          %2041 = vset.pattern.permute.xlu0 0
          %2042 = vperm.xlu0 %2041, %v1406
          %v2043 = vpop.permute.xlu0 %2042
          %2045 = vset.pattern.permute.xlu0 0
          %2046 = vperm.xlu0 %2045, %v1407
          %v2047 = vpop.permute.xlu0 %2046
          %2049 = vset.pattern.permute.xlu0 0
          %2050 = vperm.xlu0 %2049, %v1408
          %v2051 = vpop.permute.xlu0 %2050
          %2053 = vset.pattern.permute.xlu0 0
          %2054 = vperm.xlu0 %2053, %v1409
          %v2055 = vpop.permute.xlu0 %2054
          %2057 = vset.pattern.permute.xlu0 0
          %2058 = vperm.xlu0 %2057, %v1410
          %v2059 = vpop.permute.xlu0 %2058
          %2061 = vset.pattern.permute.xlu0 0
          %2062 = vperm.xlu0 %2061, %v1411
          %v2063 = vpop.permute.xlu0 %2062
          %2065 = vset.pattern.permute.xlu0 0
          %2066 = vperm.xlu0 %2065, %v1412
          %v2067 = vpop.permute.xlu0 %2066
          %2069 = vset.pattern.permute.xlu0 0
          %2070 = vperm.xlu0 %2069, %v1413
          %v2071 = vpop.permute.xlu0 %2070
          %2073 = vset.pattern.permute.xlu0 0
          %2074 = vperm.xlu0 %2073, %v1414
          %v2075 = vpop.permute.xlu0 %2074
          %2077 = vset.pattern.permute.xlu0 0
          %2078 = vperm.xlu0 %2077, %v1415
          %v2079 = vpop.permute.xlu0 %2078
          %2081 = vset.pattern.permute.xlu0 0
          %2082 = vperm.xlu0 %2081, %v1416
          %v2083 = vpop.permute.xlu0 %2082
          %2085 = vset.pattern.permute.xlu0 0
          %2086 = vperm.xlu0 %2085, %v1417
          %v2087 = vpop.permute.xlu0 %2086
          %2089 = vset.pattern.permute.xlu0 0
          %2090 = vperm.xlu0 %2089, %v1418
          %v2091 = vpop.permute.xlu0 %2090
          %2093 = vset.pattern.permute.xlu0 0
          %2094 = vperm.xlu0 %2093, %v1419
          %v2095 = vpop.permute.xlu0 %2094
          %2097 = vset.pattern.permute.xlu0 0
          %2098 = vperm.xlu0 %2097, %v1420
          %v2099 = vpop.permute.xlu0 %2098
          %2101 = vset.pattern.permute.xlu0 0
          %2102 = vperm.xlu0 %2101, %v1421
          %v2103 = vpop.permute.xlu0 %2102
          %2105 = vset.pattern.permute.xlu0 0
          %2106 = vperm.xlu0 %2105, %v1422
          %v2107 = vpop.permute.xlu0 %2106
          %2109 = vset.pattern.permute.xlu0 0
          %2110 = vperm.xlu0 %2109, %v1423
          %v2111 = vpop.permute.xlu0 %2110
          %2113 = vset.pattern.permute.xlu0 0
          %2114 = vperm.xlu0 %2113, %v1424
          %v2115 = vpop.permute.xlu0 %2114
          %2117 = vset.pattern.permute.xlu0 0
          %2118 = vperm.xlu0 %2117, %v1425
          %v2119 = vpop.permute.xlu0 %2118
          %2121 = vset.pattern.permute.xlu0 0
          %2122 = vperm.xlu0 %2121, %v1426
          %v2123 = vpop.permute.xlu0 %2122
          %2125 = vset.pattern.permute.xlu0 0
          %2126 = vperm.xlu0 %2125, %v1427
          %v2127 = vpop.permute.xlu0 %2126
          %2129 = vset.pattern.permute.xlu0 0
          %2130 = vperm.xlu0 %2129, %v1428
          %v2131 = vpop.permute.xlu0 %2130
          %v2133 = vmul.f32 %v1879, %v1813
          %v2134 = vmul.f32 %v1883, %v1814
          %v2135 = vmul.f32 %v1887, %v1815
          %v2136 = vmul.f32 %v1891, %v1816
          %v2137 = vmul.f32 %v1895, %v1817
          %v2138 = vmul.f32 %v1899, %v1818
          %v2139 = vmul.f32 %v1903, %v1819
          %v2140 = vmul.f32 %v1907, %v1820
          %v2141 = vmul.f32 %v1911, %v1821
          %v2142 = vmul.f32 %v1915, %v1822
          %v2143 = vmul.f32 %v1919, %v1823
          %v2144 = vmul.f32 %v1923, %v1824
          %v2145 = vmul.f32 %v1927, %v1825
          %v2146 = vmul.f32 %v1931, %v1826
          %v2147 = vmul.f32 %v1935, %v1827
          %v2148 = vmul.f32 %v1939, %v1828
          %v2149 = vmul.f32 %v1943, %v1829
          %v2150 = vmul.f32 %v1947, %v1830
          %v2151 = vmul.f32 %v1951, %v1831
          %v2152 = vmul.f32 %v1955, %v1832
          %v2153 = vmul.f32 %v1959, %v1833
          %v2154 = vmul.f32 %v1963, %v1834
          %v2155 = vmul.f32 %v1967, %v1835
          %v2156 = vmul.f32 %v1971, %v1836
          %v2157 = vmul.f32 %v1975, %v1837
          %v2158 = vmul.f32 %v1979, %v1838
          %v2159 = vmul.f32 %v1983, %v1839
          %v2160 = vmul.f32 %v1987, %v1840
          %v2161 = vmul.f32 %v1991, %v1841
          %v2162 = vmul.f32 %v1995, %v1842
          %v2163 = vmul.f32 %v1999, %v1843
          %v2164 = vmul.f32 %v2003, %v1844
          %v2165 = vmul.f32 %v2007, %v1845
          %v2166 = vmul.f32 %v2011, %v1846
          %v2167 = vmul.f32 %v2015, %v1847
          %v2168 = vmul.f32 %v2019, %v1848
          %v2169 = vmul.f32 %v2023, %v1849
          %v2170 = vmul.f32 %v2027, %v1850
          %v2171 = vmul.f32 %v2031, %v1851
          %v2172 = vmul.f32 %v2035, %v1852
          %v2173 = vmul.f32 %v2039, %v1853
          %v2174 = vmul.f32 %v2043, %v1854
          %v2175 = vmul.f32 %v2047, %v1855
          %v2176 = vmul.f32 %v2051, %v1856
          %v2177 = vmul.f32 %v2055, %v1857
          %v2178 = vmul.f32 %v2059, %v1858
          %v2179 = vmul.f32 %v2063, %v1859
          %v2180 = vmul.f32 %v2067, %v1860
          %v2181 = vmul.f32 %v2071, %v1861
          %v2182 = vmul.f32 %v2075, %v1862
          %v2183 = vmul.f32 %v2079, %v1863
          %v2184 = vmul.f32 %v2083, %v1864
          %v2185 = vmul.f32 %v2087, %v1865
          %v2186 = vmul.f32 %v2091, %v1866
          %v2187 = vmul.f32 %v2095, %v1867
          %v2188 = vmul.f32 %v2099, %v1868
          %v2189 = vmul.f32 %v2103, %v1869
          %v2190 = vmul.f32 %v2107, %v1870
          %v2191 = vmul.f32 %v2111, %v1871
          %v2192 = vmul.f32 %v2115, %v1872
          %v2193 = vmul.f32 %v2119, %v1873
          %v2194 = vmul.f32 %v2123, %v1874
          %v2195 = vmul.f32 %v2127, %v1875
          %v2196 = vmul.f32 %v2131, %v1876
          %2261 = vrot.lane.b32.xlu0 %v2133, 1
          %v2262 = vpop.permute.xlu0 %2261
          %2263 = vrot.lane.b32.xlu0 %v2134, 1
          %v2264 = vpop.permute.xlu0 %2263
          %2265 = vrot.lane.b32.xlu0 %v2135, 1
          %v2266 = vpop.permute.xlu0 %2265
          %2267 = vrot.lane.b32.xlu0 %v2136, 1
          %v2268 = vpop.permute.xlu0 %2267
          %2269 = vrot.lane.b32.xlu0 %v2137, 1
          %v2270 = vpop.permute.xlu0 %2269
          %2271 = vrot.lane.b32.xlu0 %v2138, 1
          %v2272 = vpop.permute.xlu0 %2271
          %2273 = vrot.lane.b32.xlu0 %v2139, 1
          %v2274 = vpop.permute.xlu0 %2273
          %2275 = vrot.lane.b32.xlu0 %v2140, 1
          %v2276 = vpop.permute.xlu0 %2275
          %2277 = vrot.lane.b32.xlu0 %v2141, 1
          %v2278 = vpop.permute.xlu0 %2277
          %2279 = vrot.lane.b32.xlu0 %v2142, 1
          %v2280 = vpop.permute.xlu0 %2279
          %2281 = vrot.lane.b32.xlu0 %v2143, 1
          %v2282 = vpop.permute.xlu0 %2281
          %2283 = vrot.lane.b32.xlu0 %v2144, 1
          %v2284 = vpop.permute.xlu0 %2283
          %2285 = vrot.lane.b32.xlu0 %v2145, 1
          %v2286 = vpop.permute.xlu0 %2285
          %2287 = vrot.lane.b32.xlu0 %v2146, 1
          %v2288 = vpop.permute.xlu0 %2287
          %2289 = vrot.lane.b32.xlu0 %v2147, 1
          %v2290 = vpop.permute.xlu0 %2289
          %2291 = vrot.lane.b32.xlu0 %v2148, 1
          %v2292 = vpop.permute.xlu0 %2291
          %2293 = vrot.lane.b32.xlu0 %v2149, 1
          %v2294 = vpop.permute.xlu0 %2293
          %2295 = vrot.lane.b32.xlu0 %v2150, 1
          %v2296 = vpop.permute.xlu0 %2295
          %2297 = vrot.lane.b32.xlu0 %v2151, 1
          %v2298 = vpop.permute.xlu0 %2297
          %2299 = vrot.lane.b32.xlu0 %v2152, 1
          %v2300 = vpop.permute.xlu0 %2299
          %2301 = vrot.lane.b32.xlu0 %v2153, 1
          %v2302 = vpop.permute.xlu0 %2301
          %2303 = vrot.lane.b32.xlu0 %v2154, 1
          %v2304 = vpop.permute.xlu0 %2303
          %2305 = vrot.lane.b32.xlu0 %v2155, 1
          %v2306 = vpop.permute.xlu0 %2305
          %2307 = vrot.lane.b32.xlu0 %v2156, 1
          %v2308 = vpop.permute.xlu0 %2307
          %2309 = vrot.lane.b32.xlu0 %v2157, 1
          %v2310 = vpop.permute.xlu0 %2309
          %2311 = vrot.lane.b32.xlu0 %v2158, 1
          %v2312 = vpop.permute.xlu0 %2311
          %2313 = vrot.lane.b32.xlu0 %v2159, 1
          %v2314 = vpop.permute.xlu0 %2313
          %2315 = vrot.lane.b32.xlu0 %v2160, 1
          %v2316 = vpop.permute.xlu0 %2315
          %2317 = vrot.lane.b32.xlu0 %v2161, 1
          %v2318 = vpop.permute.xlu0 %2317
          %2319 = vrot.lane.b32.xlu0 %v2162, 1
          %v2320 = vpop.permute.xlu0 %2319
          %2321 = vrot.lane.b32.xlu0 %v2163, 1
          %v2322 = vpop.permute.xlu0 %2321
          %2323 = vrot.lane.b32.xlu0 %v2164, 1
          %v2324 = vpop.permute.xlu0 %2323
          %2325 = vrot.lane.b32.xlu0 %v2165, 1
          %v2326 = vpop.permute.xlu0 %2325
          %2327 = vrot.lane.b32.xlu0 %v2166, 1
          %v2328 = vpop.permute.xlu0 %2327
          %2329 = vrot.lane.b32.xlu0 %v2167, 1
          %v2330 = vpop.permute.xlu0 %2329
          %2331 = vrot.lane.b32.xlu0 %v2168, 1
          %v2332 = vpop.permute.xlu0 %2331
          %2333 = vrot.lane.b32.xlu0 %v2169, 1
          %v2334 = vpop.permute.xlu0 %2333
          %2335 = vrot.lane.b32.xlu0 %v2170, 1
          %v2336 = vpop.permute.xlu0 %2335
          %2337 = vrot.lane.b32.xlu0 %v2171, 1
          %v2338 = vpop.permute.xlu0 %2337
          %2339 = vrot.lane.b32.xlu0 %v2172, 1
          %v2340 = vpop.permute.xlu0 %2339
          %2341 = vrot.lane.b32.xlu0 %v2173, 1
          %v2342 = vpop.permute.xlu0 %2341
          %2343 = vrot.lane.b32.xlu0 %v2174, 1
          %v2344 = vpop.permute.xlu0 %2343
          %2345 = vrot.lane.b32.xlu0 %v2175, 1
          %v2346 = vpop.permute.xlu0 %2345
          %2347 = vrot.lane.b32.xlu0 %v2176, 1
          %v2348 = vpop.permute.xlu0 %2347
          %2349 = vrot.lane.b32.xlu0 %v2177, 1
          %v2350 = vpop.permute.xlu0 %2349
          %2351 = vrot.lane.b32.xlu0 %v2178, 1
          %v2352 = vpop.permute.xlu0 %2351
          %2353 = vrot.lane.b32.xlu0 %v2179, 1
          %v2354 = vpop.permute.xlu0 %2353
          %2355 = vrot.lane.b32.xlu0 %v2180, 1
          %v2356 = vpop.permute.xlu0 %2355
          %2357 = vrot.lane.b32.xlu0 %v2181, 1
          %v2358 = vpop.permute.xlu0 %2357
          %2359 = vrot.lane.b32.xlu0 %v2182, 1
          %v2360 = vpop.permute.xlu0 %2359
          %2361 = vrot.lane.b32.xlu0 %v2183, 1
          %v2362 = vpop.permute.xlu0 %2361
          %2363 = vrot.lane.b32.xlu0 %v2184, 1
          %v2364 = vpop.permute.xlu0 %2363
          %2365 = vrot.lane.b32.xlu0 %v2185, 1
          %v2366 = vpop.permute.xlu0 %2365
          %2367 = vrot.lane.b32.xlu0 %v2186, 1
          %v2368 = vpop.permute.xlu0 %2367
          %2369 = vrot.lane.b32.xlu0 %v2187, 1
          %v2370 = vpop.permute.xlu0 %2369
          %2371 = vrot.lane.b32.xlu0 %v2188, 1
          %v2372 = vpop.permute.xlu0 %2371
          %2373 = vrot.lane.b32.xlu0 %v2189, 1
          %v2374 = vpop.permute.xlu0 %2373
          %2375 = vrot.lane.b32.xlu0 %v2190, 1
          %v2376 = vpop.permute.xlu0 %2375
          %2377 = vrot.lane.b32.xlu0 %v2191, 1
          %v2378 = vpop.permute.xlu0 %2377
          %2379 = vrot.lane.b32.xlu0 %v2192, 1
          %v2380 = vpop.permute.xlu0 %2379
          %2381 = vrot.lane.b32.xlu0 %v2193, 1
          %v2382 = vpop.permute.xlu0 %2381
          %2383 = vrot.lane.b32.xlu0 %v2194, 1
          %v2384 = vpop.permute.xlu0 %2383
          %2385 = vrot.lane.b32.xlu0 %v2195, 1
          %v2386 = vpop.permute.xlu0 %2385
          %2387 = vrot.lane.b32.xlu0 %v2196, 1
          %v2388 = vpop.permute.xlu0 %2387
          %2517 = vrot.lane.b32.xlu0 %v1813, 9
          %v2518 = vpop.permute.xlu0 %2517
          %2519 = vrot.lane.b32.xlu0 %v1814, 9
          %v2520 = vpop.permute.xlu0 %2519
          %2521 = vrot.lane.b32.xlu0 %v1815, 9
          %v2522 = vpop.permute.xlu0 %2521
          %2523 = vrot.lane.b32.xlu0 %v1816, 9
          %v2524 = vpop.permute.xlu0 %2523
          %2525 = vrot.lane.b32.xlu0 %v1817, 9
          %v2526 = vpop.permute.xlu0 %2525
          %2527 = vrot.lane.b32.xlu0 %v1818, 9
          %v2528 = vpop.permute.xlu0 %2527
          %2529 = vrot.lane.b32.xlu0 %v1819, 9
          %v2530 = vpop.permute.xlu0 %2529
          %2531 = vrot.lane.b32.xlu0 %v1820, 9
          %v2532 = vpop.permute.xlu0 %2531
          %2533 = vrot.lane.b32.xlu0 %v1821, 9
          %v2534 = vpop.permute.xlu0 %2533
          %2535 = vrot.lane.b32.xlu0 %v1822, 9
          %v2536 = vpop.permute.xlu0 %2535
          %2537 = vrot.lane.b32.xlu0 %v1823, 9
          %v2538 = vpop.permute.xlu0 %2537
          %2539 = vrot.lane.b32.xlu0 %v1824, 9
          %v2540 = vpop.permute.xlu0 %2539
          %2541 = vrot.lane.b32.xlu0 %v1825, 9
          %v2542 = vpop.permute.xlu0 %2541
          %2543 = vrot.lane.b32.xlu0 %v1826, 9
          %v2544 = vpop.permute.xlu0 %2543
          %2545 = vrot.lane.b32.xlu0 %v1827, 9
          %v2546 = vpop.permute.xlu0 %2545
          %2547 = vrot.lane.b32.xlu0 %v1828, 9
          %v2548 = vpop.permute.xlu0 %2547
          %2549 = vrot.lane.b32.xlu0 %v1829, 9
          %v2550 = vpop.permute.xlu0 %2549
          %2551 = vrot.lane.b32.xlu0 %v1830, 9
          %v2552 = vpop.permute.xlu0 %2551
          %2553 = vrot.lane.b32.xlu0 %v1831, 9
          %v2554 = vpop.permute.xlu0 %2553
          %2555 = vrot.lane.b32.xlu0 %v1832, 9
          %v2556 = vpop.permute.xlu0 %2555
          %2557 = vrot.lane.b32.xlu0 %v1833, 9
          %v2558 = vpop.permute.xlu0 %2557
          %2559 = vrot.lane.b32.xlu0 %v1834, 9
          %v2560 = vpop.permute.xlu0 %2559
          %2561 = vrot.lane.b32.xlu0 %v1835, 9
          %v2562 = vpop.permute.xlu0 %2561
          %2563 = vrot.lane.b32.xlu0 %v1836, 9
          %v2564 = vpop.permute.xlu0 %2563
          %2565 = vrot.lane.b32.xlu0 %v1837, 9
          %v2566 = vpop.permute.xlu0 %2565
          %2567 = vrot.lane.b32.xlu0 %v1838, 9
          %v2568 = vpop.permute.xlu0 %2567
          %2569 = vrot.lane.b32.xlu0 %v1839, 9
          %v2570 = vpop.permute.xlu0 %2569
          %2571 = vrot.lane.b32.xlu0 %v1840, 9
          %v2572 = vpop.permute.xlu0 %2571
          %2573 = vrot.lane.b32.xlu0 %v1841, 9
          %v2574 = vpop.permute.xlu0 %2573
          %2575 = vrot.lane.b32.xlu0 %v1842, 9
          %v2576 = vpop.permute.xlu0 %2575
          %2577 = vrot.lane.b32.xlu0 %v1843, 9
          %v2578 = vpop.permute.xlu0 %2577
          %2579 = vrot.lane.b32.xlu0 %v1844, 9
          %v2580 = vpop.permute.xlu0 %2579
          %2581 = vrot.lane.b32.xlu0 %v1845, 9
          %v2582 = vpop.permute.xlu0 %2581
          %2583 = vrot.lane.b32.xlu0 %v1846, 9
          %v2584 = vpop.permute.xlu0 %2583
          %2585 = vrot.lane.b32.xlu0 %v1847, 9
          %v2586 = vpop.permute.xlu0 %2585
          %2587 = vrot.lane.b32.xlu0 %v1848, 9
          %v2588 = vpop.permute.xlu0 %2587
          %2589 = vrot.lane.b32.xlu0 %v1849, 9
          %v2590 = vpop.permute.xlu0 %2589
          %2591 = vrot.lane.b32.xlu0 %v1850, 9
          %v2592 = vpop.permute.xlu0 %2591
          %2593 = vrot.lane.b32.xlu0 %v1851, 9
          %v2594 = vpop.permute.xlu0 %2593
          %2595 = vrot.lane.b32.xlu0 %v1852, 9
          %v2596 = vpop.permute.xlu0 %2595
          %2597 = vrot.lane.b32.xlu0 %v1853, 9
          %v2598 = vpop.permute.xlu0 %2597
          %2599 = vrot.lane.b32.xlu0 %v1854, 9
          %v2600 = vpop.permute.xlu0 %2599
          %2601 = vrot.lane.b32.xlu0 %v1855, 9
          %v2602 = vpop.permute.xlu0 %2601
          %2603 = vrot.lane.b32.xlu0 %v1856, 9
          %v2604 = vpop.permute.xlu0 %2603
          %2605 = vrot.lane.b32.xlu0 %v1857, 9
          %v2606 = vpop.permute.xlu0 %2605
          %2607 = vrot.lane.b32.xlu0 %v1858, 9
          %v2608 = vpop.permute.xlu0 %2607
          %2609 = vrot.lane.b32.xlu0 %v1859, 9
          %v2610 = vpop.permute.xlu0 %2609
          %2611 = vrot.lane.b32.xlu0 %v1860, 9
          %v2612 = vpop.permute.xlu0 %2611
          %2613 = vrot.lane.b32.xlu0 %v1861, 9
          %v2614 = vpop.permute.xlu0 %2613
          %2615 = vrot.lane.b32.xlu0 %v1862, 9
          %v2616 = vpop.permute.xlu0 %2615
          %2617 = vrot.lane.b32.xlu0 %v1863, 9
          %v2618 = vpop.permute.xlu0 %2617
          %2619 = vrot.lane.b32.xlu0 %v1864, 9
          %v2620 = vpop.permute.xlu0 %2619
          %2621 = vrot.lane.b32.xlu0 %v1865, 9
          %v2622 = vpop.permute.xlu0 %2621
          %2623 = vrot.lane.b32.xlu0 %v1866, 9
          %v2624 = vpop.permute.xlu0 %2623
          %2625 = vrot.lane.b32.xlu0 %v1867, 9
          %v2626 = vpop.permute.xlu0 %2625
          %2627 = vrot.lane.b32.xlu0 %v1868, 9
          %v2628 = vpop.permute.xlu0 %2627
          %2629 = vrot.lane.b32.xlu0 %v1869, 9
          %v2630 = vpop.permute.xlu0 %2629
          %2631 = vrot.lane.b32.xlu0 %v1870, 9
          %v2632 = vpop.permute.xlu0 %2631
          %2633 = vrot.lane.b32.xlu0 %v1871, 9
          %v2634 = vpop.permute.xlu0 %2633
          %2635 = vrot.lane.b32.xlu0 %v1872, 9
          %v2636 = vpop.permute.xlu0 %2635
          %2637 = vrot.lane.b32.xlu0 %v1873, 9
          %v2638 = vpop.permute.xlu0 %2637
          %2639 = vrot.lane.b32.xlu0 %v1874, 9
          %v2640 = vpop.permute.xlu0 %2639
          %2641 = vrot.lane.b32.xlu0 %v1875, 9
          %v2642 = vpop.permute.xlu0 %2641
          %2643 = vrot.lane.b32.xlu0 %v1876, 9
          %v2644 = vpop.permute.xlu0 %2643
          %vm2709 = vcmask 7168
          %v2710 = vsel %vm2709, %v1365, %v2262
          %v2711 = vsel %vm2709, %v1366, %v2264
          %v2712 = vsel %vm2709, %v1367, %v2266
          %v2713 = vsel %vm2709, %v1368, %v2268
          %v2714 = vsel %vm2709, %v1369, %v2270
          %v2715 = vsel %vm2709, %v1370, %v2272
          %v2716 = vsel %vm2709, %v1371, %v2274
          %v2717 = vsel %vm2709, %v1372, %v2276
          %v2718 = vsel %vm2709, %v1373, %v2278
          %v2719 = vsel %vm2709, %v1374, %v2280
          %v2720 = vsel %vm2709, %v1375, %v2282
          %v2721 = vsel %vm2709, %v1376, %v2284
          %v2722 = vsel %vm2709, %v1377, %v2286
          %v2723 = vsel %vm2709, %v1378, %v2288
          %v2724 = vsel %vm2709, %v1379, %v2290
          %v2725 = vsel %vm2709, %v1380, %v2292
          %v2726 = vsel %vm2709, %v1381, %v2294
          %v2727 = vsel %vm2709, %v1382, %v2296
          %v2728 = vsel %vm2709, %v1383, %v2298
          %v2729 = vsel %vm2709, %v1384, %v2300
          %v2730 = vsel %vm2709, %v1385, %v2302
          %v2731 = vsel %vm2709, %v1386, %v2304
          %v2732 = vsel %vm2709, %v1387, %v2306
          %v2733 = vsel %vm2709, %v1388, %v2308
          %v2734 = vsel %vm2709, %v1389, %v2310
          %v2735 = vsel %vm2709, %v1390, %v2312
          %v2736 = vsel %vm2709, %v1391, %v2314
          %v2737 = vsel %vm2709, %v1392, %v2316
          %v2738 = vsel %vm2709, %v1393, %v2318
          %v2739 = vsel %vm2709, %v1394, %v2320
          %v2740 = vsel %vm2709, %v1395, %v2322
          %v2741 = vsel %vm2709, %v1396, %v2324
          %v2742 = vsel %vm2709, %v1397, %v2326
          %v2743 = vsel %vm2709, %v1398, %v2328
          %v2744 = vsel %vm2709, %v1399, %v2330
          %v2745 = vsel %vm2709, %v1400, %v2332
          %v2746 = vsel %vm2709, %v1401, %v2334
          %v2747 = vsel %vm2709, %v1402, %v2336
          %v2748 = vsel %vm2709, %v1403, %v2338
          %v2749 = vsel %vm2709, %v1404, %v2340
          %v2750 = vsel %vm2709, %v1405, %v2342
          %v2751 = vsel %vm2709, %v1406, %v2344
          %v2752 = vsel %vm2709, %v1407, %v2346
          %v2753 = vsel %vm2709, %v1408, %v2348
          %v2754 = vsel %vm2709, %v1409, %v2350
          %v2755 = vsel %vm2709, %v1410, %v2352
          %v2756 = vsel %vm2709, %v1411, %v2354
          %v2757 = vsel %vm2709, %v1412, %v2356
          %v2758 = vsel %vm2709, %v1413, %v2358
          %v2759 = vsel %vm2709, %v1414, %v2360
          %v2760 = vsel %vm2709, %v1415, %v2362
          %v2761 = vsel %vm2709, %v1416, %v2364
          %v2762 = vsel %vm2709, %v1417, %v2366
          %v2763 = vsel %vm2709, %v1418, %v2368
          %v2764 = vsel %vm2709, %v1419, %v2370
          %v2765 = vsel %vm2709, %v1420, %v2372
          %v2766 = vsel %vm2709, %v1421, %v2374
          %v2767 = vsel %vm2709, %v1422, %v2376
          %v2768 = vsel %vm2709, %v1423, %v2378
          %v2769 = vsel %vm2709, %v1424, %v2380
          %v2770 = vsel %vm2709, %v1425, %v2382
          %v2771 = vsel %vm2709, %v1426, %v2384
          %v2772 = vsel %vm2709, %v1427, %v2386
          %v2773 = vsel %vm2709, %v1428, %v2388
          %vm2774 = vcmask 72704
          %v2775 = vsel %vm2774, %v2710, %v2518
          %v2776 = vsel %vm2774, %v2711, %v2520
          %v2777 = vsel %vm2774, %v2712, %v2522
          %v2778 = vsel %vm2774, %v2713, %v2524
          %v2779 = vsel %vm2774, %v2714, %v2526
          %v2780 = vsel %vm2774, %v2715, %v2528
          %v2781 = vsel %vm2774, %v2716, %v2530
          %v2782 = vsel %vm2774, %v2717, %v2532
          %v2783 = vsel %vm2774, %v2718, %v2534
          %v2784 = vsel %vm2774, %v2719, %v2536
          %v2785 = vsel %vm2774, %v2720, %v2538
          %v2786 = vsel %vm2774, %v2721, %v2540
          %v2787 = vsel %vm2774, %v2722, %v2542
          %v2788 = vsel %vm2774, %v2723, %v2544
          %v2789 = vsel %vm2774, %v2724, %v2546
          %v2790 = vsel %vm2774, %v2725, %v2548
          %v2791 = vsel %vm2774, %v2726, %v2550
          %v2792 = vsel %vm2774, %v2727, %v2552
          %v2793 = vsel %vm2774, %v2728, %v2554
          %v2794 = vsel %vm2774, %v2729, %v2556
          %v2795 = vsel %vm2774, %v2730, %v2558
          %v2796 = vsel %vm2774, %v2731, %v2560
          %v2797 = vsel %vm2774, %v2732, %v2562
          %v2798 = vsel %vm2774, %v2733, %v2564
          %v2799 = vsel %vm2774, %v2734, %v2566
          %v2800 = vsel %vm2774, %v2735, %v2568
          %v2801 = vsel %vm2774, %v2736, %v2570
          %v2802 = vsel %vm2774, %v2737, %v2572
          %v2803 = vsel %vm2774, %v2738, %v2574
          %v2804 = vsel %vm2774, %v2739, %v2576
          %v2805 = vsel %vm2774, %v2740, %v2578
          %v2806 = vsel %vm2774, %v2741, %v2580
          %v2807 = vsel %vm2774, %v2742, %v2582
          %v2808 = vsel %vm2774, %v2743, %v2584
          %v2809 = vsel %vm2774, %v2744, %v2586
          %v2810 = vsel %vm2774, %v2745, %v2588
          %v2811 = vsel %vm2774, %v2746, %v2590
          %v2812 = vsel %vm2774, %v2747, %v2592
          %v2813 = vsel %vm2774, %v2748, %v2594
          %v2814 = vsel %vm2774, %v2749, %v2596
          %v2815 = vsel %vm2774, %v2750, %v2598
          %v2816 = vsel %vm2774, %v2751, %v2600
          %v2817 = vsel %vm2774, %v2752, %v2602
          %v2818 = vsel %vm2774, %v2753, %v2604
          %v2819 = vsel %vm2774, %v2754, %v2606
          %v2820 = vsel %vm2774, %v2755, %v2608
          %v2821 = vsel %vm2774, %v2756, %v2610
          %v2822 = vsel %vm2774, %v2757, %v2612
          %v2823 = vsel %vm2774, %v2758, %v2614
          %v2824 = vsel %vm2774, %v2759, %v2616
          %v2825 = vsel %vm2774, %v2760, %v2618
          %v2826 = vsel %vm2774, %v2761, %v2620
          %v2827 = vsel %vm2774, %v2762, %v2622
          %v2828 = vsel %vm2774, %v2763, %v2624
          %v2829 = vsel %vm2774, %v2764, %v2626
          %v2830 = vsel %vm2774, %v2765, %v2628
          %v2831 = vsel %vm2774, %v2766, %v2630
          %v2832 = vsel %vm2774, %v2767, %v2632
          %v2833 = vsel %vm2774, %v2768, %v2634
          %v2834 = vsel %vm2774, %v2769, %v2636
          %v2835 = vsel %vm2774, %v2770, %v2638
          %v2836 = vsel %vm2774, %v2771, %v2640
          %v2837 = vsel %vm2774, %v2772, %v2642
          %v2838 = vsel %vm2774, %v2773, %v2644
          %vm2839 = vcmask 138240
          %2840 = vst.msk [vmem:[#allocation4] sm:$0xff] %vm2839, %v2775
          %2841 = vst.msk [vmem:[#allocation4 + $0x8] sm:$0xff] %vm2839, %v2776
          %2842 = vst.msk [vmem:[#allocation4 + $0x10] sm:$0xff] %vm2839, %v2777
          %2843 = vst.msk [vmem:[#allocation4 + $0x18] sm:$0xff] %vm2839, %v2778
          %2844 = vst.msk [vmem:[#allocation4 + $0x20] sm:$0xff] %vm2839, %v2779
          %2845 = vst.msk [vmem:[#allocation4 + $0x28] sm:$0xff] %vm2839, %v2780
          %2846 = vst.msk [vmem:[#allocation4 + $0x30] sm:$0xff] %vm2839, %v2781
          %2847 = vst.msk [vmem:[#allocation4 + $0x38] sm:$0xff] %vm2839, %v2782
          %2848 = vst.msk [vmem:[#allocation4 + $0x40] sm:$0xff] %vm2839, %v2783
          %2849 = vst.msk [vmem:[#allocation4 + $0x48] sm:$0xff] %vm2839, %v2784
          %2850 = vst.msk [vmem:[#allocation4 + $0x50] sm:$0xff] %vm2839, %v2785
          %2851 = vst.msk [vmem:[#allocation4 + $0x58] sm:$0xff] %vm2839, %v2786
          %2852 = vst.msk [vmem:[#allocation4 + $0x60] sm:$0xff] %vm2839, %v2787
          %2853 = vst.msk [vmem:[#allocation4 + $0x68] sm:$0xff] %vm2839, %v2788
          %2854 = vst.msk [vmem:[#allocation4 + $0x70] sm:$0xff] %vm2839, %v2789
          %2855 = vst.msk [vmem:[#allocation4 + $0x78] sm:$0xff] %vm2839, %v2790
          %2856 = vst.msk [vmem:[#allocation4 + $0x80] sm:$0xff] %vm2839, %v2791
          %2857 = vst.msk [vmem:[#allocation4 + $0x88] sm:$0xff] %vm2839, %v2792
          %2858 = vst.msk [vmem:[#allocation4 + $0x90] sm:$0xff] %vm2839, %v2793
          %2859 = vst.msk [vmem:[#allocation4 + $0x98] sm:$0xff] %vm2839, %v2794
          %2860 = vst.msk [vmem:[#allocation4 + $0xa0] sm:$0xff] %vm2839, %v2795
          %2861 = vst.msk [vmem:[#allocation4 + $0xa8] sm:$0xff] %vm2839, %v2796
          %2862 = vst.msk [vmem:[#allocation4 + $0xb0] sm:$0xff] %vm2839, %v2797
          %2863 = vst.msk [vmem:[#allocation4 + $0xb8] sm:$0xff] %vm2839, %v2798
          %2864 = vst.msk [vmem:[#allocation4 + $0xc0] sm:$0xff] %vm2839, %v2799
          %2865 = vst.msk [vmem:[#allocation4 + $0xc8] sm:$0xff] %vm2839, %v2800
          %2866 = vst.msk [vmem:[#allocation4 + $0xd0] sm:$0xff] %vm2839, %v2801
          %2867 = vst.msk [vmem:[#allocation4 + $0xd8] sm:$0xff] %vm2839, %v2802
          %2868 = vst.msk [vmem:[#allocation4 + $0xe0] sm:$0xff] %vm2839, %v2803
          %2869 = vst.msk [vmem:[#allocation4 + $0xe8] sm:$0xff] %vm2839, %v2804
          %2870 = vst.msk [vmem:[#allocation4 + $0xf0] sm:$0xff] %vm2839, %v2805
          %2871 = vst.msk [vmem:[#allocation4 + $0xf8] sm:$0xff] %vm2839, %v2806
          %2872 = vst.msk [vmem:[#allocation4 + $0x100] sm:$0xff] %vm2839, %v2807
          %2873 = vst.msk [vmem:[#allocation4 + $0x108] sm:$0xff] %vm2839, %v2808
          %2874 = vst.msk [vmem:[#allocation4 + $0x110] sm:$0xff] %vm2839, %v2809
          %2875 = vst.msk [vmem:[#allocation4 + $0x118] sm:$0xff] %vm2839, %v2810
          %2876 = vst.msk [vmem:[#allocation4 + $0x120] sm:$0xff] %vm2839, %v2811
          %2877 = vst.msk [vmem:[#allocation4 + $0x128] sm:$0xff] %vm2839, %v2812
          %2878 = vst.msk [vmem:[#allocation4 + $0x130] sm:$0xff] %vm2839, %v2813
          %2879 = vst.msk [vmem:[#allocation4 + $0x138] sm:$0xff] %vm2839, %v2814
          %2880 = vst.msk [vmem:[#allocation4 + $0x140] sm:$0xff] %vm2839, %v2815
          %2881 = vst.msk [vmem:[#allocation4 + $0x148] sm:$0xff] %vm2839, %v2816
          %2882 = vst.msk [vmem:[#allocation4 + $0x150] sm:$0xff] %vm2839, %v2817
          %2883 = vst.msk [vmem:[#allocation4 + $0x158] sm:$0xff] %vm2839, %v2818
          %2884 = vst.msk [vmem:[#allocation4 + $0x160] sm:$0xff] %vm2839, %v2819
          %2885 = vst.msk [vmem:[#allocation4 + $0x168] sm:$0xff] %vm2839, %v2820
          %2886 = vst.msk [vmem:[#allocation4 + $0x170] sm:$0xff] %vm2839, %v2821
          %2887 = vst.msk [vmem:[#allocation4 + $0x178] sm:$0xff] %vm2839, %v2822
          %2888 = vst.msk [vmem:[#allocation4 + $0x180] sm:$0xff] %vm2839, %v2823
          %2889 = vst.msk [vmem:[#allocation4 + $0x188] sm:$0xff] %vm2839, %v2824
          %2890 = vst.msk [vmem:[#allocation4 + $0x190] sm:$0xff] %vm2839, %v2825
          %2891 = vst.msk [vmem:[#allocation4 + $0x198] sm:$0xff] %vm2839, %v2826
          %2892 = vst.msk [vmem:[#allocation4 + $0x1a0] sm:$0xff] %vm2839, %v2827
          %2893 = vst.msk [vmem:[#allocation4 + $0x1a8] sm:$0xff] %vm2839, %v2828
          %2894 = vst.msk [vmem:[#allocation4 + $0x1b0] sm:$0xff] %vm2839, %v2829
          %2895 = vst.msk [vmem:[#allocation4 + $0x1b8] sm:$0xff] %vm2839, %v2830
          %2896 = vst.msk [vmem:[#allocation4 + $0x1c0] sm:$0xff] %vm2839, %v2831
          %2897 = vst.msk [vmem:[#allocation4 + $0x1c8] sm:$0xff] %vm2839, %v2832
          %2898 = vst.msk [vmem:[#allocation4 + $0x1d0] sm:$0xff] %vm2839, %v2833
          %2899 = vst.msk [vmem:[#allocation4 + $0x1d8] sm:$0xff] %vm2839, %v2834
          %2900 = vst.msk [vmem:[#allocation4 + $0x1e0] sm:$0xff] %vm2839, %v2835
          %2901 = vst.msk [vmem:[#allocation4 + $0x1e8] sm:$0xff] %vm2839, %v2836
          %2902 = vst.msk [vmem:[#allocation4 + $0x1f0] sm:$0xff] %vm2839, %v2837
          %2903 = vst.msk [vmem:[#allocation4 + $0x1f8] sm:$0xff] %vm2839, %v2838
        $region68: #{tpu_custom_call.1} parent=55 // pred_fallthru
          _
        // Predicated region
        $region69: #{tpu_custom_call.1} parent=55 // pred_check
          %p2904 = pneg %p1360
        $region70: #{tpu_custom_call.1} parent=55 // pred_check_branch
          %2906 = sbr.rel (%p2904) target = $region72
        $region71: #{tpu_custom_call.1} parent=55 // pred_region
          %vm2907 = vcmask 138240
          %2908 = vst.msk [vmem:[#allocation6] sm:$0xff] %vm2907, 0.0
          %2909 = vst.msk [vmem:[#allocation6 + $0x8] sm:$0xff] %vm2907, 0.0
          %2910 = vst.msk [vmem:[#allocation6 + $0x10] sm:$0xff] %vm2907, 0.0
          %2911 = vst.msk [vmem:[#allocation6 + $0x18] sm:$0xff] %vm2907, 0.0
          %2912 = vst.msk [vmem:[#allocation6 + $0x20] sm:$0xff] %vm2907, 0.0
          %2913 = vst.msk [vmem:[#allocation6 + $0x28] sm:$0xff] %vm2907, 0.0
          %2914 = vst.msk [vmem:[#allocation6 + $0x30] sm:$0xff] %vm2907, 0.0
          %2915 = vst.msk [vmem:[#allocation6 + $0x38] sm:$0xff] %vm2907, 0.0
          %2916 = vst.msk [vmem:[#allocation6 + $0x40] sm:$0xff] %vm2907, 0.0
          %2917 = vst.msk [vmem:[#allocation6 + $0x48] sm:$0xff] %vm2907, 0.0
          %2918 = vst.msk [vmem:[#allocation6 + $0x50] sm:$0xff] %vm2907, 0.0
          %2919 = vst.msk [vmem:[#allocation6 + $0x58] sm:$0xff] %vm2907, 0.0
          %2920 = vst.msk [vmem:[#allocation6 + $0x60] sm:$0xff] %vm2907, 0.0
          %2921 = vst.msk [vmem:[#allocation6 + $0x68] sm:$0xff] %vm2907, 0.0
          %2922 = vst.msk [vmem:[#allocation6 + $0x70] sm:$0xff] %vm2907, 0.0
          %2923 = vst.msk [vmem:[#allocation6 + $0x78] sm:$0xff] %vm2907, 0.0
        $region72: #{tpu_custom_call.1} parent=55 // pred_fallthru
          _
        %v2924 = vld [vmem:[%s371] sm:$0xf]
        %v2925 = vld [vmem:[%s371 + $0x4] sm:$0xf]
        %v2926 = vld [vmem:[%s371 + $0x8] sm:$0xf]
        %v2927 = vld [vmem:[%s371 + $0xc] sm:$0xf]
        %v2928 = vld [vmem:[%s371 + $0x10] sm:$0xf]
        %v2929 = vld [vmem:[%s371 + $0x14] sm:$0xf]
        %v2930 = vld [vmem:[%s371 + $0x18] sm:$0xf]
        %v2931 = vld [vmem:[%s371 + $0x1c] sm:$0xf]
        %v2932 = vld [vmem:[%s371 + $0x20] sm:$0xf]
        %v2933 = vld [vmem:[%s371 + $0x24] sm:$0xf]
        %v2934 = vld [vmem:[%s371 + $0x28] sm:$0xf]
        %v2935 = vld [vmem:[%s371 + $0x2c] sm:$0xf]
        %v2936 = vld [vmem:[%s371 + $0x30] sm:$0xf]
        %v2937 = vld [vmem:[%s371 + $0x34] sm:$0xf]
        %v2938 = vld [vmem:[%s371 + $0x38] sm:$0xf]
        %v2939 = vld [vmem:[%s371 + $0x3c] sm:$0xf]
        %v2940 = vunpack.c.l.bf16 %v2924
        %v2941 = vunpack.c.l.bf16 %v2925
        %v2942 = vunpack.c.l.bf16 %v2926
        %v2943 = vunpack.c.l.bf16 %v2927
        %v2944 = vunpack.c.l.bf16 %v2928
        %v2945 = vunpack.c.l.bf16 %v2929
        %v2946 = vunpack.c.l.bf16 %v2930
        %v2947 = vunpack.c.l.bf16 %v2931
        %v2948 = vunpack.c.l.bf16 %v2932
        %v2949 = vunpack.c.l.bf16 %v2933
        %v2950 = vunpack.c.l.bf16 %v2934
        %v2951 = vunpack.c.l.bf16 %v2935
        %v2952 = vunpack.c.l.bf16 %v2936
        %v2953 = vunpack.c.l.bf16 %v2937
        %v2954 = vunpack.c.l.bf16 %v2938
        %v2955 = vunpack.c.l.bf16 %v2939
        %v2956 = vld [vmem:[#allocation6] sm:$0xff]
        %v2957 = vld [vmem:[#allocation6 + $0x8] sm:$0xff]
        %v2958 = vld [vmem:[#allocation6 + $0x10] sm:$0xff]
        %v2959 = vld [vmem:[#allocation6 + $0x18] sm:$0xff]
        %v2960 = vld [vmem:[#allocation6 + $0x20] sm:$0xff]
        %v2961 = vld [vmem:[#allocation6 + $0x28] sm:$0xff]
        %v2962 = vld [vmem:[#allocation6 + $0x30] sm:$0xff]
        %v2963 = vld [vmem:[#allocation6 + $0x38] sm:$0xff]
        %v2964 = vld [vmem:[#allocation6 + $0x40] sm:$0xff]
        %v2965 = vld [vmem:[#allocation6 + $0x48] sm:$0xff]
        %v2966 = vld [vmem:[#allocation6 + $0x50] sm:$0xff]
        %v2967 = vld [vmem:[#allocation6 + $0x58] sm:$0xff]
        %v2968 = vld [vmem:[#allocation6 + $0x60] sm:$0xff]
        %v2969 = vld [vmem:[#allocation6 + $0x68] sm:$0xff]
        %v2970 = vld [vmem:[#allocation6 + $0x70] sm:$0xff]
        %v2971 = vld [vmem:[#allocation6 + $0x78] sm:$0xff]
        %s2972 = scalar_lea.vmem [#allocation4], %s446
        %v2973 = vld [vmem:[%s2972] sm:$0xff]
        %v2974 = vld [vmem:[%s2972 + $0x8] sm:$0xff]
        %v2975 = vld [vmem:[%s2972 + $0x10] sm:$0xff]
        %v2976 = vld [vmem:[%s2972 + $0x18] sm:$0xff]
        %v2977 = vld [vmem:[%s2972 + $0x20] sm:$0xff]
        %v2978 = vld [vmem:[%s2972 + $0x28] sm:$0xff]
        %v2979 = vld [vmem:[%s2972 + $0x30] sm:$0xff]
        %v2980 = vld [vmem:[%s2972 + $0x38] sm:$0xff]
        %v2981 = vld [vmem:[%s2972 + $0x40] sm:$0xff]
        %v2982 = vld [vmem:[%s2972 + $0x48] sm:$0xff]
        %v2983 = vld [vmem:[%s2972 + $0x50] sm:$0xff]
        %v2984 = vld [vmem:[%s2972 + $0x58] sm:$0xff]
        %v2985 = vld [vmem:[%s2972 + $0x60] sm:$0xff]
        %v2986 = vld [vmem:[%s2972 + $0x68] sm:$0xff]
        %v2987 = vld [vmem:[%s2972 + $0x70] sm:$0xff]
        %v2988 = vld [vmem:[%s2972 + $0x78] sm:$0xff]
        %2989 = vmatprep.subr.mxu0 0.0
        %2990 = vmatpush1.msra.mxu0 %v2973
        %2991 = vmatprep.subr.mxu0 0.0
        %2992 = vmatpush1.msra.mxu0 %v2974
        %2993 = vmatprep.subr.mxu0 0.0
        %2994 = vmatpush1.msra.mxu0 %v2975
        %2995 = vmatprep.subr.mxu0 0.0
        %2996 = vmatpush1.msra.mxu0 %v2976
        %2997 = vmatprep.subr.mxu0 0.0
        %2998 = vmatpush1.msra.mxu0 %v2977
        %2999 = vmatprep.subr.mxu0 0.0
        %3000 = vmatpush1.msra.mxu0 %v2978
        %3001 = vmatprep.subr.mxu0 0.0
        %3002 = vmatpush1.msra.mxu0 %v2979
        %3003 = vmatprep.subr.mxu0 0.0
        %3004 = vmatpush1.msra.mxu0 %v2980
        %3005 = vmatprep.subr.mxu0 0.0
        %3006 = vmatpush1.msra.mxu0 %v2981
        %3007 = vmatprep.subr.mxu0 0.0
        %3008 = vmatpush1.msra.mxu0 %v2982
        %3009 = vmatprep.subr.mxu0 0.0
        %3010 = vmatpush1.msra.mxu0 %v2983
        %3011 = vmatprep.subr.mxu0 0.0
        %3012 = vmatpush1.msra.mxu0 %v2984
        %3013 = vmatprep.subr.mxu0 0.0
        %3014 = vmatpush1.msra.mxu0 %v2985
        %3015 = vmatprep.subr.mxu0 0.0
        %3016 = vmatpush1.msra.mxu0 %v2986
        %3017 = vmatprep.subr.mxu0 0.0
        %3018 = vmatpush1.msra.mxu0 %v2987
        %3019 = vmatprep.subr.mxu0 0.0
        %3020 = vmatpush1.msra.mxu0 %v2988
        %3021 = vmatprep.subr.mxu0 0.0
        %3022 = vmatpush1.msra.mxu0 0.0
        %3023 = vmatprep.subr.mxu0 0.0
        %3024 = vmatpush1.msra.mxu0 0.0
        %3025 = vmatprep.subr.mxu0 0.0
        %3026 = vmatpush1.msra.mxu0 0.0
        %3027 = vmatprep.subr.mxu0 0.0
        %3028 = vmatpush1.msra.mxu0 0.0
        %3029 = vmatprep.subr.mxu0 0.0
        %3030 = vmatpush1.msra.mxu0 0.0
        %3031 = vmatprep.subr.mxu0 0.0
        %3032 = vmatpush1.msra.mxu0 0.0
        %3033 = vmatprep.subr.mxu0 0.0
        %3034 = vmatpush1.msra.mxu0 0.0
        %3035 = vmatprep.subr.mxu0 0.0
        %3036 = vmatpush1.msra.mxu0 0.0
        %3037 = vmatprep.subr.mxu0 0.0
        %3038 = vmatpush1.msra.mxu0 0.0
        %3039 = vmatprep.subr.mxu0 0.0
        %3040 = vmatpush1.msra.mxu0 0.0
        %3041 = vmatprep.subr.mxu0 0.0
        %3042 = vmatpush1.msra.mxu0 0.0
        %3043 = vmatprep.subr.mxu0 0.0
        %3044 = vmatpush1.msra.mxu0 0.0
        %3045 = vmatprep.subr.mxu0 0.0
        %3046 = vmatpush1.msra.mxu0 0.0
        %3047 = vmatprep.subr.mxu0 0.0
        %3048 = vmatpush1.msra.mxu0 0.0
        %3049 = vmatprep.subr.mxu0 0.0
        %3050 = vmatpush1.msra.mxu0 0.0
        %3051 = vmatprep.subr.mxu0 0.0
        %3052 = vmatpush1.msra.mxu0 0.0
        %3053 = vmatprep.mubr.f32.mxu0 0.0
        %3054 = vmatmul.mubr.f32.gmra.mrb[0].mxu0 %v2940
        %v3055 = vpop.f32.mrb[0].mxu0
        %v3056 = vadd.f32 0.0, %v3055
        %v3057 = vpop.f32.mrb[0].mxu0
        %3058 = vmatprep.mubr.f32.mxu0 0.0
        %3059 = vmatmul.mubr.f32.gmra.mrb[0].mxu0 %v2941
        %v3060 = vpop.f32.mrb[0].mxu0
        %v3061 = vadd.f32 0.0, %v3060
        %v3062 = vpop.f32.mrb[0].mxu0
        %3063 = vmatprep.mubr.f32.mxu0 0.0
        %3064 = vmatmul.mubr.f32.gmra.mrb[0].mxu0 %v2942
        %v3065 = vpop.f32.mrb[0].mxu0
        %v3066 = vadd.f32 0.0, %v3065
        %v3067 = vpop.f32.mrb[0].mxu0
        %3068 = vmatprep.mubr.f32.mxu0 0.0
        %3069 = vmatmul.mubr.f32.gmra.mrb[0].mxu0 %v2943
        %v3070 = vpop.f32.mrb[0].mxu0
        %v3071 = vadd.f32 0.0, %v3070
        %v3072 = vpop.f32.mrb[0].mxu0
        %3073 = vmatprep.mubr.f32.mxu0 0.0
        %3074 = vmatmul.mubr.f32.gmra.mrb[0].mxu0 %v2944
        %v3075 = vpop.f32.mrb[0].mxu0
        %v3076 = vadd.f32 0.0, %v3075
        %v3077 = vpop.f32.mrb[0].mxu0
        %3078 = vmatprep.mubr.f32.mxu0 0.0
        %3079 = vmatmul.mubr.f32.gmra.mrb[0].mxu0 %v2945
        %v3080 = vpop.f32.mrb[0].mxu0
        %v3081 = vadd.f32 0.0, %v3080
        %v3082 = vpop.f32.mrb[0].mxu0
        %3083 = vmatprep.mubr.f32.mxu0 0.0
        %3084 = vmatmul.mubr.f32.gmra.mrb[0].mxu0 %v2946
        %v3085 = vpop.f32.mrb[0].mxu0
        %v3086 = vadd.f32 0.0, %v3085
        %v3087 = vpop.f32.mrb[0].mxu0
        %3088 = vmatprep.mubr.f32.mxu0 0.0
        %3089 = vmatmul.mubr.f32.gmra.mrb[0].mxu0 %v2947
        %v3090 = vpop.f32.mrb[0].mxu0
        %v3091 = vadd.f32 0.0, %v3090
        %v3092 = vpop.f32.mrb[0].mxu0
        %3093 = vmatprep.mubr.f32.mxu0 0.0
        %3094 = vmatmul.mubr.f32.gmra.mrb[0].mxu0 %v2948
        %v3095 = vpop.f32.mrb[0].mxu0
        %v3096 = vadd.f32 0.0, %v3095
        %v3097 = vpop.f32.mrb[0].mxu0
        %3098 = vmatprep.mubr.f32.mxu0 0.0
        %3099 = vmatmul.mubr.f32.gmra.mrb[0].mxu0 %v2949
        %v3100 = vpop.f32.mrb[0].mxu0
        %v3101 = vadd.f32 0.0, %v3100
        %v3102 = vpop.f32.mrb[0].mxu0
        %3103 = vmatprep.mubr.f32.mxu0 0.0
        %3104 = vmatmul.mubr.f32.gmra.mrb[0].mxu0 %v2950
        %v3105 = vpop.f32.mrb[0].mxu0
        %v3106 = vadd.f32 0.0, %v3105
        %v3107 = vpop.f32.mrb[0].mxu0
        %3108 = vmatprep.mubr.f32.mxu0 0.0
        %3109 = vmatmul.mubr.f32.gmra.mrb[0].mxu0 %v2951
        %v3110 = vpop.f32.mrb[0].mxu0
        %v3111 = vadd.f32 0.0, %v3110
        %v3112 = vpop.f32.mrb[0].mxu0
        %3113 = vmatprep.mubr.f32.mxu0 0.0
        %3114 = vmatmul.mubr.f32.gmra.mrb[0].mxu0 %v2952
        %v3115 = vpop.f32.mrb[0].mxu0
        %v3116 = vadd.f32 0.0, %v3115
        %v3117 = vpop.f32.mrb[0].mxu0
        %3118 = vmatprep.mubr.f32.mxu0 0.0
        %3119 = vmatmul.mubr.f32.gmra.mrb[0].mxu0 %v2953
        %v3120 = vpop.f32.mrb[0].mxu0
        %v3121 = vadd.f32 0.0, %v3120
        %v3122 = vpop.f32.mrb[0].mxu0
        %3123 = vmatprep.mubr.f32.mxu0 0.0
        %3124 = vmatmul.mubr.f32.gmra.mrb[0].mxu0 %v2954
        %v3125 = vpop.f32.mrb[0].mxu0
        %v3126 = vadd.f32 0.0, %v3125
        %v3127 = vpop.f32.mrb[0].mxu0
        %3128 = vmatprep.mubr.f32.mxu0 0.0
        %3129 = vmatmul.mubr.f32.gmra.mrb[0].mxu0 %v2955
        %v3130 = vpop.f32.mrb[0].mxu0
        %v3131 = vadd.f32 0.0, %v3130
        %v3132 = vpop.f32.mrb[0].mxu0
        %3133 = vdwg.mxu0
        %v3134 = vadd.f32 %v2956, %v3056
        %v3135 = vadd.f32 %v2957, %v3061
        %v3136 = vadd.f32 %v2958, %v3066
        %v3137 = vadd.f32 %v2959, %v3071
        %v3138 = vadd.f32 %v2960, %v3076
        %v3139 = vadd.f32 %v2961, %v3081
        %v3140 = vadd.f32 %v2962, %v3086
        %v3141 = vadd.f32 %v2963, %v3091
        %v3142 = vadd.f32 %v2964, %v3096
        %v3143 = vadd.f32 %v2965, %v3101
        %v3144 = vadd.f32 %v2966, %v3106
        %v3145 = vadd.f32 %v2967, %v3111
        %v3146 = vadd.f32 %v2968, %v3116
        %v3147 = vadd.f32 %v2969, %v3121
        %v3148 = vadd.f32 %v2970, %v3126
        %v3149 = vadd.f32 %v2971, %v3131
        %vm3150 = vcmask 138240
        %3151 = vst.msk [vmem:[#allocation6] sm:$0xff] %vm3150, %v3134
        %3152 = vst.msk [vmem:[#allocation6 + $0x8] sm:$0xff] %vm3150, %v3135
        %3153 = vst.msk [vmem:[#allocation6 + $0x10] sm:$0xff] %vm3150, %v3136
        %3154 = vst.msk [vmem:[#allocation6 + $0x18] sm:$0xff] %vm3150, %v3137
        %3155 = vst.msk [vmem:[#allocation6 + $0x20] sm:$0xff] %vm3150, %v3138
        %3156 = vst.msk [vmem:[#allocation6 + $0x28] sm:$0xff] %vm3150, %v3139
        %3157 = vst.msk [vmem:[#allocation6 + $0x30] sm:$0xff] %vm3150, %v3140
        %3158 = vst.msk [vmem:[#allocation6 + $0x38] sm:$0xff] %vm3150, %v3141
        %3159 = vst.msk [vmem:[#allocation6 + $0x40] sm:$0xff] %vm3150, %v3142
        %3160 = vst.msk [vmem:[#allocation6 + $0x48] sm:$0xff] %vm3150, %v3143
        %3161 = vst.msk [vmem:[#allocation6 + $0x50] sm:$0xff] %vm3150, %v3144
        %3162 = vst.msk [vmem:[#allocation6 + $0x58] sm:$0xff] %vm3150, %v3145
        %3163 = vst.msk [vmem:[#allocation6 + $0x60] sm:$0xff] %vm3150, %v3146
        %3164 = vst.msk [vmem:[#allocation6 + $0x68] sm:$0xff] %vm3150, %v3147
        %3165 = vst.msk [vmem:[#allocation6 + $0x70] sm:$0xff] %vm3150, %v3148
        %3166 = vst.msk [vmem:[#allocation6 + $0x78] sm:$0xff] %vm3150, %v3149
        %p3167 = scmp.eq.s32.totalorder %s30, 3
        // Predicated region
        $region73: #{tpu_custom_call.1} parent=55 // pred_check
          %p3168 = pneg %p3167
        $region74: #{tpu_custom_call.1} parent=55 // pred_check_branch
          %3170 = sbr.rel (%p3168) target = $region76
        $region75: #{tpu_custom_call.1} parent=55 // pred_region
          %v3171 = vld [vmem:[#allocation6] sm:$0xff]
          %v3172 = vld [vmem:[#allocation6 + $0x8] sm:$0xff]
          %v3173 = vld [vmem:[#allocation6 + $0x10] sm:$0xff]
          %v3174 = vld [vmem:[#allocation6 + $0x18] sm:$0xff]
          %v3175 = vld [vmem:[#allocation6 + $0x20] sm:$0xff]
          %v3176 = vld [vmem:[#allocation6 + $0x28] sm:$0xff]
          %v3177 = vld [vmem:[#allocation6 + $0x30] sm:$0xff]
          %v3178 = vld [vmem:[#allocation6 + $0x38] sm:$0xff]
          %v3179 = vld [vmem:[#allocation6 + $0x40] sm:$0xff]
          %v3180 = vld [vmem:[#allocation6 + $0x48] sm:$0xff]
          %v3181 = vld [vmem:[#allocation6 + $0x50] sm:$0xff]
          %v3182 = vld [vmem:[#allocation6 + $0x58] sm:$0xff]
          %v3183 = vld [vmem:[#allocation6 + $0x60] sm:$0xff]
          %v3184 = vld [vmem:[#allocation6 + $0x68] sm:$0xff]
          %v3185 = vld [vmem:[#allocation6 + $0x70] sm:$0xff]
          %v3186 = vld [vmem:[#allocation6 + $0x78] sm:$0xff]
          // Predicated region
          $region77: #{tpu_custom_call.1} parent=75 // pred_check
            %p3187 = pneg %p447
          $region78: #{tpu_custom_call.1} parent=75 // pred_check_branch
            %3189 = sbr.rel (%p3187) target = $region80
          $region79: #{tpu_custom_call.1} parent=75 // pred_region
            %v3190 = vmax.f32 %v3171, 1.0
            %v3191 = vmax.f32 %v3172, 1.0
            %v3192 = vmax.f32 %v3173, 1.0
            %v3193 = vmax.f32 %v3174, 1.0
            %v3194 = vmax.f32 %v3175, 1.0
            %v3195 = vmax.f32 %v3176, 1.0
            %v3196 = vmax.f32 %v3177, 1.0
            %v3197 = vmax.f32 %v3178, 1.0
            %v3198 = vmax.f32 %v3179, 1.0
            %v3199 = vmax.f32 %v3180, 1.0
            %v3200 = vmax.f32 %v3181, 1.0
            %v3201 = vmax.f32 %v3182, 1.0
            %v3202 = vmax.f32 %v3183, 1.0
            %v3203 = vmax.f32 %v3184, 1.0
            %v3204 = vmax.f32 %v3185, 1.0
            %v3205 = vmax.f32 %v3186, 1.0
            %v3206 = vrcp.pop %v3190
            %v3207 = vmul.f32 1.0, %v3206
            %v3208 = vrcp.pop %v3191
            %v3209 = vmul.f32 1.0, %v3208
            %v3210 = vrcp.pop %v3192
            %v3211 = vmul.f32 1.0, %v3210
            %v3212 = vrcp.pop %v3193
            %v3213 = vmul.f32 1.0, %v3212
            %v3214 = vrcp.pop %v3194
            %v3215 = vmul.f32 1.0, %v3214
            %v3216 = vrcp.pop %v3195
            %v3217 = vmul.f32 1.0, %v3216
            %v3218 = vrcp.pop %v3196
            %v3219 = vmul.f32 1.0, %v3218
            %v3220 = vrcp.pop %v3197
            %v3221 = vmul.f32 1.0, %v3220
            %v3222 = vrcp.pop %v3198
            %v3223 = vmul.f32 1.0, %v3222
            %v3224 = vrcp.pop %v3199
            %v3225 = vmul.f32 1.0, %v3224
            %v3226 = vrcp.pop %v3200
            %v3227 = vmul.f32 1.0, %v3226
            %v3228 = vrcp.pop %v3201
            %v3229 = vmul.f32 1.0, %v3228
            %v3230 = vrcp.pop %v3202
            %v3231 = vmul.f32 1.0, %v3230
            %v3232 = vrcp.pop %v3203
            %v3233 = vmul.f32 1.0, %v3232
            %v3234 = vrcp.pop %v3204
            %v3235 = vmul.f32 1.0, %v3234
            %v3236 = vrcp.pop %v3205
            %v3237 = vmul.f32 1.0, %v3236
            %3239 = vset.pattern.permute.xlu0 0
            %3240 = vperm.xlu0 %3239, %v3207
            %v3241 = vpop.permute.xlu0 %3240
            %3244 = vset.pattern.permute.xlu0 0
            %3245 = vperm.xlu0 %3244, %v3209
            %v3246 = vpop.permute.xlu0 %3245
            %3249 = vset.pattern.permute.xlu0 0
            %3250 = vperm.xlu0 %3249, %v3211
            %v3251 = vpop.permute.xlu0 %3250
            %3254 = vset.pattern.permute.xlu0 0
            %3255 = vperm.xlu0 %3254, %v3213
            %v3256 = vpop.permute.xlu0 %3255
            %3259 = vset.pattern.permute.xlu0 0
            %3260 = vperm.xlu0 %3259, %v3215
            %v3261 = vpop.permute.xlu0 %3260
            %3264 = vset.pattern.permute.xlu0 0
            %3265 = vperm.xlu0 %3264, %v3217
            %v3266 = vpop.permute.xlu0 %3265
            %3269 = vset.pattern.permute.xlu0 0
            %3270 = vperm.xlu0 %3269, %v3219
            %v3271 = vpop.permute.xlu0 %3270
            %3274 = vset.pattern.permute.xlu0 0
            %3275 = vperm.xlu0 %3274, %v3221
            %v3276 = vpop.permute.xlu0 %3275
            %3279 = vset.pattern.permute.xlu0 0
            %3280 = vperm.xlu0 %3279, %v3223
            %v3281 = vpop.permute.xlu0 %3280
            %3284 = vset.pattern.permute.xlu0 0
            %3285 = vperm.xlu0 %3284, %v3225
            %v3286 = vpop.permute.xlu0 %3285
            %3289 = vset.pattern.permute.xlu0 0
            %3290 = vperm.xlu0 %3289, %v3227
            %v3291 = vpop.permute.xlu0 %3290
            %3294 = vset.pattern.permute.xlu0 0
            %3295 = vperm.xlu0 %3294, %v3229
            %v3296 = vpop.permute.xlu0 %3295
            %3299 = vset.pattern.permute.xlu0 0
            %3300 = vperm.xlu0 %3299, %v3231
            %v3301 = vpop.permute.xlu0 %3300
            %3304 = vset.pattern.permute.xlu0 0
            %3305 = vperm.xlu0 %3304, %v3233
            %v3306 = vpop.permute.xlu0 %3305
            %3309 = vset.pattern.permute.xlu0 0
            %3310 = vperm.xlu0 %3309, %v3235
            %v3311 = vpop.permute.xlu0 %3310
            %3314 = vset.pattern.permute.xlu0 0
            %3315 = vperm.xlu0 %3314, %v3237
            %v3316 = vpop.permute.xlu0 %3315
            %v3318 = vmul.f32 %v3171, %v3241
            %v3319 = vmul.f32 %v3172, %v3246
            %v3320 = vmul.f32 %v3173, %v3251
            %v3321 = vmul.f32 %v3174, %v3256
            %v3322 = vmul.f32 %v3175, %v3261
            %v3323 = vmul.f32 %v3176, %v3266
            %v3324 = vmul.f32 %v3177, %v3271
            %v3325 = vmul.f32 %v3178, %v3276
            %v3326 = vmul.f32 %v3179, %v3281
            %v3327 = vmul.f32 %v3180, %v3286
            %v3328 = vmul.f32 %v3181, %v3291
            %v3329 = vmul.f32 %v3182, %v3296
            %v3330 = vmul.f32 %v3183, %v3301
            %v3331 = vmul.f32 %v3184, %v3306
            %v3332 = vmul.f32 %v3185, %v3311
            %v3333 = vmul.f32 %v3186, %v3316
            %v3334 = vmul.f32 %v3318, %v3318
            %v3335 = vmul.f32 %v3319, %v3319
            %v3336 = vmul.f32 %v3320, %v3320
            %v3337 = vmul.f32 %v3321, %v3321
            %v3338 = vmul.f32 %v3322, %v3322
            %v3339 = vmul.f32 %v3323, %v3323
            %v3340 = vmul.f32 %v3324, %v3324
            %v3341 = vmul.f32 %v3325, %v3325
            %v3342 = vmul.f32 %v3326, %v3326
            %v3343 = vmul.f32 %v3327, %v3327
            %v3344 = vmul.f32 %v3328, %v3328
            %v3345 = vmul.f32 %v3329, %v3329
            %v3346 = vmul.f32 %v3330, %v3330
            %v3347 = vmul.f32 %v3331, %v3331
            %v3348 = vmul.f32 %v3332, %v3332
            %v3349 = vmul.f32 %v3333, %v3333
            %3366 = vrot.lane.b32.xlu0 %v3334, 8
            %v3367 = vpop.permute.xlu0 %3366
            %3368 = vrot.lane.b32.xlu0 %v3335, 8
            %v3369 = vpop.permute.xlu0 %3368
            %3370 = vrot.lane.b32.xlu0 %v3336, 8
            %v3371 = vpop.permute.xlu0 %3370
            %3372 = vrot.lane.b32.xlu0 %v3337, 8
            %v3373 = vpop.permute.xlu0 %3372
            %3374 = vrot.lane.b32.xlu0 %v3338, 8
            %v3375 = vpop.permute.xlu0 %3374
            %3376 = vrot.lane.b32.xlu0 %v3339, 8
            %v3377 = vpop.permute.xlu0 %3376
            %3378 = vrot.lane.b32.xlu0 %v3340, 8
            %v3379 = vpop.permute.xlu0 %3378
            %3380 = vrot.lane.b32.xlu0 %v3341, 8
            %v3381 = vpop.permute.xlu0 %3380
            %3382 = vrot.lane.b32.xlu0 %v3342, 8
            %v3383 = vpop.permute.xlu0 %3382
            %3384 = vrot.lane.b32.xlu0 %v3343, 8
            %v3385 = vpop.permute.xlu0 %3384
            %3386 = vrot.lane.b32.xlu0 %v3344, 8
            %v3387 = vpop.permute.xlu0 %3386
            %3388 = vrot.lane.b32.xlu0 %v3345, 8
            %v3389 = vpop.permute.xlu0 %3388
            %3390 = vrot.lane.b32.xlu0 %v3346, 8
            %v3391 = vpop.permute.xlu0 %3390
            %3392 = vrot.lane.b32.xlu0 %v3347, 8
            %v3393 = vpop.permute.xlu0 %3392
            %3394 = vrot.lane.b32.xlu0 %v3348, 8
            %v3395 = vpop.permute.xlu0 %3394
            %3396 = vrot.lane.b32.xlu0 %v3349, 8
            %v3397 = vpop.permute.xlu0 %3396
            %v3414 = vsub.f32 %v3318, %v3367
            %v3415 = vsub.f32 %v3319, %v3369
            %v3416 = vsub.f32 %v3320, %v3371
            %v3417 = vsub.f32 %v3321, %v3373
            %v3418 = vsub.f32 %v3322, %v3375
            %v3419 = vsub.f32 %v3323, %v3377
            %v3420 = vsub.f32 %v3324, %v3379
            %v3421 = vsub.f32 %v3325, %v3381
            %v3422 = vsub.f32 %v3326, %v3383
            %v3423 = vsub.f32 %v3327, %v3385
            %v3424 = vsub.f32 %v3328, %v3387
            %v3425 = vsub.f32 %v3329, %v3389
            %v3426 = vsub.f32 %v3330, %v3391
            %v3427 = vsub.f32 %v3331, %v3393
            %v3428 = vsub.f32 %v3332, %v3395
            %v3429 = vsub.f32 %v3333, %v3397
            %v3430 = vld [vmem:[%s8] sm:$0x1]
            %v3432 = vlaneseq
            %v3433 = vshrl.u32 %v3432, 7
            %v3434 = vsub.s32 0, %v3433
            %v3435 = vrot.slane %v3430, %v3434
            %3436 = vrot.lane.b32.xlu0 %v3435, 9
            %v3437 = vpop.permute.xlu0 %3436
            %v3439 = vmul.f32 %v3414, %v3437
            %v3440 = vmul.f32 %v3415, %v3437
            %v3441 = vmul.f32 %v3416, %v3437
            %v3442 = vmul.f32 %v3417, %v3437
            %v3443 = vmul.f32 %v3418, %v3437
            %v3444 = vmul.f32 %v3419, %v3437
            %v3445 = vmul.f32 %v3420, %v3437
            %v3446 = vmul.f32 %v3421, %v3437
            %v3447 = vmul.f32 %v3422, %v3437
            %v3448 = vmul.f32 %v3423, %v3437
            %v3449 = vmul.f32 %v3424, %v3437
            %v3450 = vmul.f32 %v3425, %v3437
            %v3451 = vmul.f32 %v3426, %v3437
            %v3452 = vmul.f32 %v3427, %v3437
            %v3453 = vmul.f32 %v3428, %v3437
            %v3454 = vmul.f32 %v3429, %v3437
            %3471 = vrot.lane.b32.xlu0 %v3439, 119
            %v3472 = vpop.permute.xlu0 %3471
            %3473 = vrot.lane.b32.xlu0 %v3440, 119
            %v3474 = vpop.permute.xlu0 %3473
            %3475 = vrot.lane.b32.xlu0 %v3441, 119
            %v3476 = vpop.permute.xlu0 %3475
            %3477 = vrot.lane.b32.xlu0 %v3442, 119
            %v3478 = vpop.permute.xlu0 %3477
            %3479 = vrot.lane.b32.xlu0 %v3443, 119
            %v3480 = vpop.permute.xlu0 %3479
            %3481 = vrot.lane.b32.xlu0 %v3444, 119
            %v3482 = vpop.permute.xlu0 %3481
            %3483 = vrot.lane.b32.xlu0 %v3445, 119
            %v3484 = vpop.permute.xlu0 %3483
            %3485 = vrot.lane.b32.xlu0 %v3446, 119
            %v3486 = vpop.permute.xlu0 %3485
            %3487 = vrot.lane.b32.xlu0 %v3447, 119
            %v3488 = vpop.permute.xlu0 %3487
            %3489 = vrot.lane.b32.xlu0 %v3448, 119
            %v3490 = vpop.permute.xlu0 %3489
            %3491 = vrot.lane.b32.xlu0 %v3449, 119
            %v3492 = vpop.permute.xlu0 %3491
            %3493 = vrot.lane.b32.xlu0 %v3450, 119
            %v3494 = vpop.permute.xlu0 %3493
            %3495 = vrot.lane.b32.xlu0 %v3451, 119
            %v3496 = vpop.permute.xlu0 %3495
            %3497 = vrot.lane.b32.xlu0 %v3452, 119
            %v3498 = vpop.permute.xlu0 %3497
            %3499 = vrot.lane.b32.xlu0 %v3453, 119
            %v3500 = vpop.permute.xlu0 %3499
            %3501 = vrot.lane.b32.xlu0 %v3454, 119
            %v3502 = vpop.permute.xlu0 %3501
            %vm3519 = vcmask 64512
            %v3520 = vsel %vm3519, %v3472, 0.0
            %3521 = vadd.xlane.f32.xlu0 %v3520
            %v3522 = vpop.xlane.xlu0 %3521
            %v3523 = vsel %vm3519, %v3474, 0.0
            %3524 = vadd.xlane.f32.xlu0 %v3523
            %v3525 = vpop.xlane.xlu0 %3524
            %v3526 = vsel %vm3519, %v3476, 0.0
            %3527 = vadd.xlane.f32.xlu0 %v3526
            %v3528 = vpop.xlane.xlu0 %3527
            %v3529 = vsel %vm3519, %v3478, 0.0
            %3530 = vadd.xlane.f32.xlu0 %v3529
            %v3531 = vpop.xlane.xlu0 %3530
            %v3532 = vsel %vm3519, %v3480, 0.0
            %3533 = vadd.xlane.f32.xlu0 %v3532
            %v3534 = vpop.xlane.xlu0 %3533
            %v3535 = vsel %vm3519, %v3482, 0.0
            %3536 = vadd.xlane.f32.xlu0 %v3535
            %v3537 = vpop.xlane.xlu0 %3536
            %v3538 = vsel %vm3519, %v3484, 0.0
            %3539 = vadd.xlane.f32.xlu0 %v3538
            %v3540 = vpop.xlane.xlu0 %3539
            %v3541 = vsel %vm3519, %v3486, 0.0
            %3542 = vadd.xlane.f32.xlu0 %v3541
            %v3543 = vpop.xlane.xlu0 %3542
            %v3544 = vsel %vm3519, %v3488, 0.0
            %3545 = vadd.xlane.f32.xlu0 %v3544
            %v3546 = vpop.xlane.xlu0 %3545
            %v3547 = vsel %vm3519, %v3490, 0.0
            %3548 = vadd.xlane.f32.xlu0 %v3547
            %v3549 = vpop.xlane.xlu0 %3548
            %v3550 = vsel %vm3519, %v3492, 0.0
            %3551 = vadd.xlane.f32.xlu0 %v3550
            %v3552 = vpop.xlane.xlu0 %3551
            %v3553 = vsel %vm3519, %v3494, 0.0
            %3554 = vadd.xlane.f32.xlu0 %v3553
            %v3555 = vpop.xlane.xlu0 %3554
            %v3556 = vsel %vm3519, %v3496, 0.0
            %3557 = vadd.xlane.f32.xlu0 %v3556
            %v3558 = vpop.xlane.xlu0 %3557
            %v3559 = vsel %vm3519, %v3498, 0.0
            %3560 = vadd.xlane.f32.xlu0 %v3559
            %v3561 = vpop.xlane.xlu0 %3560
            %v3562 = vsel %vm3519, %v3500, 0.0
            %3563 = vadd.xlane.f32.xlu0 %v3562
            %v3564 = vpop.xlane.xlu0 %3563
            %v3565 = vsel %vm3519, %v3502, 0.0
            %3566 = vadd.xlane.f32.xlu0 %v3565
            %v3567 = vpop.xlane.xlu0 %3566
            %v3568 = vmul.f32 %v3522, 0.5
            %v3569 = vmul.f32 %v3525, 0.5
            %v3570 = vmul.f32 %v3528, 0.5
            %v3571 = vmul.f32 %v3531, 0.5
            %v3572 = vmul.f32 %v3534, 0.5
            %v3573 = vmul.f32 %v3537, 0.5
            %v3574 = vmul.f32 %v3540, 0.5
            %v3575 = vmul.f32 %v3543, 0.5
            %v3576 = vmul.f32 %v3546, 0.5
            %v3577 = vmul.f32 %v3549, 0.5
            %v3578 = vmul.f32 %v3552, 0.5
            %v3579 = vmul.f32 %v3555, 0.5
            %v3580 = vmul.f32 %v3558, 0.5
            %v3581 = vmul.f32 %v3561, 0.5
            %v3582 = vmul.f32 %v3564, 0.5
            %v3583 = vmul.f32 %v3567, 0.5
            %s3584 = scalar_lea.vmem [#allocation5], %s445
            %vm3585 = vcmask 7168
            %3586 = vst.msk [vmem:[%s3584] sm:$0xff] %vm3585, %v3568
            %3587 = vst.msk [vmem:[%s3584 + $0x8] sm:$0xff] %vm3585, %v3569
            %3588 = vst.msk [vmem:[%s3584 + $0x10] sm:$0xff] %vm3585, %v3570
            %3589 = vst.msk [vmem:[%s3584 + $0x18] sm:$0xff] %vm3585, %v3571
            %3590 = vst.msk [vmem:[%s3584 + $0x20] sm:$0xff] %vm3585, %v3572
            %3591 = vst.msk [vmem:[%s3584 + $0x28] sm:$0xff] %vm3585, %v3573
            %3592 = vst.msk [vmem:[%s3584 + $0x30] sm:$0xff] %vm3585, %v3574
            %3593 = vst.msk [vmem:[%s3584 + $0x38] sm:$0xff] %vm3585, %v3575
            %3594 = vst.msk [vmem:[%s3584 + $0x40] sm:$0xff] %vm3585, %v3576
            %3595 = vst.msk [vmem:[%s3584 + $0x48] sm:$0xff] %vm3585, %v3577
            %3596 = vst.msk [vmem:[%s3584 + $0x50] sm:$0xff] %vm3585, %v3578
            %3597 = vst.msk [vmem:[%s3584 + $0x58] sm:$0xff] %vm3585, %v3579
            %3598 = vst.msk [vmem:[%s3584 + $0x60] sm:$0xff] %vm3585, %v3580
            %3599 = vst.msk [vmem:[%s3584 + $0x68] sm:$0xff] %vm3585, %v3581
            %3600 = vst.msk [vmem:[%s3584 + $0x70] sm:$0xff] %vm3585, %v3582
            %3601 = vst.msk [vmem:[%s3584 + $0x78] sm:$0xff] %vm3585, %v3583
            %v3602 = vrsqrt.pop %v3190
            %v3603 = vrsqrt.pop %v3191
            %v3604 = vrsqrt.pop %v3192
            %v3605 = vrsqrt.pop %v3193
            %v3606 = vrsqrt.pop %v3194
            %v3607 = vrsqrt.pop %v3195
            %v3608 = vrsqrt.pop %v3196
            %v3609 = vrsqrt.pop %v3197
            %v3610 = vrsqrt.pop %v3198
            %v3611 = vrsqrt.pop %v3199
            %v3612 = vrsqrt.pop %v3200
            %v3613 = vrsqrt.pop %v3201
            %v3614 = vrsqrt.pop %v3202
            %v3615 = vrsqrt.pop %v3203
            %v3616 = vrsqrt.pop %v3204
            %v3617 = vrsqrt.pop %v3205
            %3634 = vrot.lane.b32.xlu0 %v3602, 1
            %v3635 = vpop.permute.xlu0 %3634
            %3636 = vrot.lane.b32.xlu0 %v3603, 1
            %v3637 = vpop.permute.xlu0 %3636
            %3638 = vrot.lane.b32.xlu0 %v3604, 1
            %v3639 = vpop.permute.xlu0 %3638
            %3640 = vrot.lane.b32.xlu0 %v3605, 1
            %v3641 = vpop.permute.xlu0 %3640
            %3642 = vrot.lane.b32.xlu0 %v3606, 1
            %v3643 = vpop.permute.xlu0 %3642
            %3644 = vrot.lane.b32.xlu0 %v3607, 1
            %v3645 = vpop.permute.xlu0 %3644
            %3646 = vrot.lane.b32.xlu0 %v3608, 1
            %v3647 = vpop.permute.xlu0 %3646
            %3648 = vrot.lane.b32.xlu0 %v3609, 1
            %v3649 = vpop.permute.xlu0 %3648
            %3650 = vrot.lane.b32.xlu0 %v3610, 1
            %v3651 = vpop.permute.xlu0 %3650
            %3652 = vrot.lane.b32.xlu0 %v3611, 1
            %v3653 = vpop.permute.xlu0 %3652
            %3654 = vrot.lane.b32.xlu0 %v3612, 1
            %v3655 = vpop.permute.xlu0 %3654
            %3656 = vrot.lane.b32.xlu0 %v3613, 1
            %v3657 = vpop.permute.xlu0 %3656
            %3658 = vrot.lane.b32.xlu0 %v3614, 1
            %v3659 = vpop.permute.xlu0 %3658
            %3660 = vrot.lane.b32.xlu0 %v3615, 1
            %v3661 = vpop.permute.xlu0 %3660
            %3662 = vrot.lane.b32.xlu0 %v3616, 1
            %v3663 = vpop.permute.xlu0 %3662
            %3664 = vrot.lane.b32.xlu0 %v3617, 1
            %v3665 = vpop.permute.xlu0 %3664
            %vm3682 = vcmask 15368
            %3683 = vst.msk [vmem:[%s3584] sm:$0xff] %vm3682, %v3635
            %3684 = vst.msk [vmem:[%s3584 + $0x8] sm:$0xff] %vm3682, %v3637
            %3685 = vst.msk [vmem:[%s3584 + $0x10] sm:$0xff] %vm3682, %v3639
            %3686 = vst.msk [vmem:[%s3584 + $0x18] sm:$0xff] %vm3682, %v3641
            %3687 = vst.msk [vmem:[%s3584 + $0x20] sm:$0xff] %vm3682, %v3643
            %3688 = vst.msk [vmem:[%s3584 + $0x28] sm:$0xff] %vm3682, %v3645
            %3689 = vst.msk [vmem:[%s3584 + $0x30] sm:$0xff] %vm3682, %v3647
            %3690 = vst.msk [vmem:[%s3584 + $0x38] sm:$0xff] %vm3682, %v3649
            %3691 = vst.msk [vmem:[%s3584 + $0x40] sm:$0xff] %vm3682, %v3651
            %3692 = vst.msk [vmem:[%s3584 + $0x48] sm:$0xff] %vm3682, %v3653
            %3693 = vst.msk [vmem:[%s3584 + $0x50] sm:$0xff] %vm3682, %v3655
            %3694 = vst.msk [vmem:[%s3584 + $0x58] sm:$0xff] %vm3682, %v3657
            %3695 = vst.msk [vmem:[%s3584 + $0x60] sm:$0xff] %vm3682, %v3659
            %3696 = vst.msk [vmem:[%s3584 + $0x68] sm:$0xff] %vm3682, %v3661
            %3697 = vst.msk [vmem:[%s3584 + $0x70] sm:$0xff] %vm3682, %v3663
            %3698 = vst.msk [vmem:[%s3584 + $0x78] sm:$0xff] %vm3682, %v3665
            %3715 = vrot.lane.b32.xlu0 %v3171, 2
            %v3716 = vpop.permute.xlu0 %3715
            %3717 = vrot.lane.b32.xlu0 %v3172, 2
            %v3718 = vpop.permute.xlu0 %3717
            %3719 = vrot.lane.b32.xlu0 %v3173, 2
            %v3720 = vpop.permute.xlu0 %3719
            %3721 = vrot.lane.b32.xlu0 %v3174, 2
            %v3722 = vpop.permute.xlu0 %3721
            %3723 = vrot.lane.b32.xlu0 %v3175, 2
            %v3724 = vpop.permute.xlu0 %3723
            %3725 = vrot.lane.b32.xlu0 %v3176, 2
            %v3726 = vpop.permute.xlu0 %3725
            %3727 = vrot.lane.b32.xlu0 %v3177, 2
            %v3728 = vpop.permute.xlu0 %3727
            %3729 = vrot.lane.b32.xlu0 %v3178, 2
            %v3730 = vpop.permute.xlu0 %3729
            %3731 = vrot.lane.b32.xlu0 %v3179, 2
            %v3732 = vpop.permute.xlu0 %3731
            %3733 = vrot.lane.b32.xlu0 %v3180, 2
            %v3734 = vpop.permute.xlu0 %3733
            %3735 = vrot.lane.b32.xlu0 %v3181, 2
            %v3736 = vpop.permute.xlu0 %3735
            %3737 = vrot.lane.b32.xlu0 %v3182, 2
            %v3738 = vpop.permute.xlu0 %3737
            %3739 = vrot.lane.b32.xlu0 %v3183, 2
            %v3740 = vpop.permute.xlu0 %3739
            %3741 = vrot.lane.b32.xlu0 %v3184, 2
            %v3742 = vpop.permute.xlu0 %3741
            %3743 = vrot.lane.b32.xlu0 %v3185, 2
            %v3744 = vpop.permute.xlu0 %3743
            %3745 = vrot.lane.b32.xlu0 %v3186, 2
            %v3746 = vpop.permute.xlu0 %3745
            %vm3763 = vcmask 23568
            %3764 = vst.msk [vmem:[%s3584] sm:$0xff] %vm3763, %v3716
            %3765 = vst.msk [vmem:[%s3584 + $0x8] sm:$0xff] %vm3763, %v3718
            %3766 = vst.msk [vmem:[%s3584 + $0x10] sm:$0xff] %vm3763, %v3720
            %3767 = vst.msk [vmem:[%s3584 + $0x18] sm:$0xff] %vm3763, %v3722
            %3768 = vst.msk [vmem:[%s3584 + $0x20] sm:$0xff] %vm3763, %v3724
            %3769 = vst.msk [vmem:[%s3584 + $0x28] sm:$0xff] %vm3763, %v3726
            %3770 = vst.msk [vmem:[%s3584 + $0x30] sm:$0xff] %vm3763, %v3728
            %3771 = vst.msk [vmem:[%s3584 + $0x38] sm:$0xff] %vm3763, %v3730
            %3772 = vst.msk [vmem:[%s3584 + $0x40] sm:$0xff] %vm3763, %v3732
            %3773 = vst.msk [vmem:[%s3584 + $0x48] sm:$0xff] %vm3763, %v3734
            %3774 = vst.msk [vmem:[%s3584 + $0x50] sm:$0xff] %vm3763, %v3736
            %3775 = vst.msk [vmem:[%s3584 + $0x58] sm:$0xff] %vm3763, %v3738
            %3776 = vst.msk [vmem:[%s3584 + $0x60] sm:$0xff] %vm3763, %v3740
            %3777 = vst.msk [vmem:[%s3584 + $0x68] sm:$0xff] %vm3763, %v3742
            %3778 = vst.msk [vmem:[%s3584 + $0x70] sm:$0xff] %vm3763, %v3744
            %3779 = vst.msk [vmem:[%s3584 + $0x78] sm:$0xff] %vm3763, %v3746
            %3780 = vrot.lane.b32.xlu0 %v3207, 3
            %v3781 = vpop.permute.xlu0 %3780
            %3782 = vrot.lane.b32.xlu0 %v3209, 3
            %v3783 = vpop.permute.xlu0 %3782
            %3784 = vrot.lane.b32.xlu0 %v3211, 3
            %v3785 = vpop.permute.xlu0 %3784
            %3786 = vrot.lane.b32.xlu0 %v3213, 3
            %v3787 = vpop.permute.xlu0 %3786
            %3788 = vrot.lane.b32.xlu0 %v3215, 3
            %v3789 = vpop.permute.xlu0 %3788
            %3790 = vrot.lane.b32.xlu0 %v3217, 3
            %v3791 = vpop.permute.xlu0 %3790
            %3792 = vrot.lane.b32.xlu0 %v3219, 3
            %v3793 = vpop.permute.xlu0 %3792
            %3794 = vrot.lane.b32.xlu0 %v3221, 3
            %v3795 = vpop.permute.xlu0 %3794
            %3796 = vrot.lane.b32.xlu0 %v3223, 3
            %v3797 = vpop.permute.xlu0 %3796
            %3798 = vrot.lane.b32.xlu0 %v3225, 3
            %v3799 = vpop.permute.xlu0 %3798
            %3800 = vrot.lane.b32.xlu0 %v3227, 3
            %v3801 = vpop.permute.xlu0 %3800
            %3802 = vrot.lane.b32.xlu0 %v3229, 3
            %v3803 = vpop.permute.xlu0 %3802
            %3804 = vrot.lane.b32.xlu0 %v3231, 3
            %v3805 = vpop.permute.xlu0 %3804
            %3806 = vrot.lane.b32.xlu0 %v3233, 3
            %v3807 = vpop.permute.xlu0 %3806
            %3808 = vrot.lane.b32.xlu0 %v3235, 3
            %v3809 = vpop.permute.xlu0 %3808
            %3810 = vrot.lane.b32.xlu0 %v3237, 3
            %v3811 = vpop.permute.xlu0 %3810
            %vm3828 = vcmask 31768
            %3829 = vst.msk [vmem:[%s3584] sm:$0xff] %vm3828, %v3781
            %3830 = vst.msk [vmem:[%s3584 + $0x8] sm:$0xff] %vm3828, %v3783
            %3831 = vst.msk [vmem:[%s3584 + $0x10] sm:$0xff] %vm3828, %v3785
            %3832 = vst.msk [vmem:[%s3584 + $0x18] sm:$0xff] %vm3828, %v3787
            %3833 = vst.msk [vmem:[%s3584 + $0x20] sm:$0xff] %vm3828, %v3789
            %3834 = vst.msk [vmem:[%s3584 + $0x28] sm:$0xff] %vm3828, %v3791
            %3835 = vst.msk [vmem:[%s3584 + $0x30] sm:$0xff] %vm3828, %v3793
            %3836 = vst.msk [vmem:[%s3584 + $0x38] sm:$0xff] %vm3828, %v3795
            %3837 = vst.msk [vmem:[%s3584 + $0x40] sm:$0xff] %vm3828, %v3797
            %3838 = vst.msk [vmem:[%s3584 + $0x48] sm:$0xff] %vm3828, %v3799
            %3839 = vst.msk [vmem:[%s3584 + $0x50] sm:$0xff] %vm3828, %v3801
            %3840 = vst.msk [vmem:[%s3584 + $0x58] sm:$0xff] %vm3828, %v3803
            %3841 = vst.msk [vmem:[%s3584 + $0x60] sm:$0xff] %vm3828, %v3805
            %3842 = vst.msk [vmem:[%s3584 + $0x68] sm:$0xff] %vm3828, %v3807
            %3843 = vst.msk [vmem:[%s3584 + $0x70] sm:$0xff] %vm3828, %v3809
            %3844 = vst.msk [vmem:[%s3584 + $0x78] sm:$0xff] %vm3828, %v3811
          $region80: #{tpu_custom_call.1} parent=75 // pred_fallthru
            _
          // Predicated region
          $region81: #{tpu_custom_call.1} parent=75 // pred_check
            %p3845 = pneg %p1357
          $region82: #{tpu_custom_call.1} parent=75 // pred_check_branch
            %3847 = sbr.rel (%p3845) target = $region84
          $region83: #{tpu_custom_call.1} parent=75 // pred_region
            %s3848 = scalar_lea.vmem [#allocation5], %s445
            %v3849 = vld [vmem:[%s3848] sm:$0xff]
            %v3850 = vld [vmem:[%s3848 + $0x8] sm:$0xff]
            %v3851 = vld [vmem:[%s3848 + $0x10] sm:$0xff]
            %v3852 = vld [vmem:[%s3848 + $0x18] sm:$0xff]
            %v3853 = vld [vmem:[%s3848 + $0x20] sm:$0xff]
            %v3854 = vld [vmem:[%s3848 + $0x28] sm:$0xff]
            %v3855 = vld [vmem:[%s3848 + $0x30] sm:$0xff]
            %v3856 = vld [vmem:[%s3848 + $0x38] sm:$0xff]
            %v3857 = vld [vmem:[%s3848 + $0x40] sm:$0xff]
            %v3858 = vld [vmem:[%s3848 + $0x48] sm:$0xff]
            %v3859 = vld [vmem:[%s3848 + $0x50] sm:$0xff]
            %v3860 = vld [vmem:[%s3848 + $0x58] sm:$0xff]
            %v3861 = vld [vmem:[%s3848 + $0x60] sm:$0xff]
            %v3862 = vld [vmem:[%s3848 + $0x68] sm:$0xff]
            %v3863 = vld [vmem:[%s3848 + $0x70] sm:$0xff]
            %v3864 = vld [vmem:[%s3848 + $0x78] sm:$0xff]
            %p3865 = scmp.eq.s32.totalorder %s28, 1
            // Predicated region
            $region85: #{tpu_custom_call.1} parent=83 // pred_check
              %p3866 = pneg %p3865
            $region86: #{tpu_custom_call.1} parent=83 // pred_check_branch
              %3868 = sbr.rel (%p3866) target = $region88
            $region87: #{tpu_custom_call.1} parent=83 // pred_region
              %v3869 = vld [vmem:[%s3848] sm:$0xff]
              %v3870 = vld [vmem:[%s3848 + $0x8] sm:$0xff]
              %v3871 = vld [vmem:[%s3848 + $0x10] sm:$0xff]
              %v3872 = vld [vmem:[%s3848 + $0x18] sm:$0xff]
              %v3873 = vld [vmem:[%s3848 + $0x20] sm:$0xff]
              %v3874 = vld [vmem:[%s3848 + $0x28] sm:$0xff]
              %v3875 = vld [vmem:[%s3848 + $0x30] sm:$0xff]
              %v3876 = vld [vmem:[%s3848 + $0x38] sm:$0xff]
              %v3877 = vld [vmem:[%s3848 + $0x40] sm:$0xff]
              %v3878 = vld [vmem:[%s3848 + $0x48] sm:$0xff]
              %v3879 = vld [vmem:[%s3848 + $0x50] sm:$0xff]
              %v3880 = vld [vmem:[%s3848 + $0x58] sm:$0xff]
              %v3881 = vld [vmem:[%s3848 + $0x60] sm:$0xff]
              %v3882 = vld [vmem:[%s3848 + $0x68] sm:$0xff]
              %v3883 = vld [vmem:[%s3848 + $0x70] sm:$0xff]
              %v3884 = vld [vmem:[%s3848 + $0x78] sm:$0xff]
              %3901 = vrot.lane.b32.xlu0 %v3849, 2
              %v3902 = vpop.permute.xlu0 %3901
              %3903 = vrot.lane.b32.xlu0 %v3850, 2
              %v3904 = vpop.permute.xlu0 %3903
              %3905 = vrot.lane.b32.xlu0 %v3851, 2
              %v3906 = vpop.permute.xlu0 %3905
              %3907 = vrot.lane.b32.xlu0 %v3852, 2
              %v3908 = vpop.permute.xlu0 %3907
              %3909 = vrot.lane.b32.xlu0 %v3853, 2
              %v3910 = vpop.permute.xlu0 %3909
              %3911 = vrot.lane.b32.xlu0 %v3854, 2
              %v3912 = vpop.permute.xlu0 %3911
              %3913 = vrot.lane.b32.xlu0 %v3855, 2
              %v3914 = vpop.permute.xlu0 %3913
              %3915 = vrot.lane.b32.xlu0 %v3856, 2
              %v3916 = vpop.permute.xlu0 %3915
              %3917 = vrot.lane.b32.xlu0 %v3857, 2
              %v3918 = vpop.permute.xlu0 %3917
              %3919 = vrot.lane.b32.xlu0 %v3858, 2
              %v3920 = vpop.permute.xlu0 %3919
              %3921 = vrot.lane.b32.xlu0 %v3859, 2
              %v3922 = vpop.permute.xlu0 %3921
              %3923 = vrot.lane.b32.xlu0 %v3860, 2
              %v3924 = vpop.permute.xlu0 %3923
              %3925 = vrot.lane.b32.xlu0 %v3861, 2
              %v3926 = vpop.permute.xlu0 %3925
              %3927 = vrot.lane.b32.xlu0 %v3862, 2
              %v3928 = vpop.permute.xlu0 %3927
              %3929 = vrot.lane.b32.xlu0 %v3863, 2
              %v3930 = vpop.permute.xlu0 %3929
              %3931 = vrot.lane.b32.xlu0 %v3864, 2
              %v3932 = vpop.permute.xlu0 %3931
              %v3949 = vmul.f32 %v3869, %v3902
              %v3950 = vmul.f32 %v3870, %v3904
              %v3951 = vmul.f32 %v3871, %v3906
              %v3952 = vmul.f32 %v3872, %v3908
              %v3953 = vmul.f32 %v3873, %v3910
              %v3954 = vmul.f32 %v3874, %v3912
              %v3955 = vmul.f32 %v3875, %v3914
              %v3956 = vmul.f32 %v3876, %v3916
              %v3957 = vmul.f32 %v3877, %v3918
              %v3958 = vmul.f32 %v3878, %v3920
              %v3959 = vmul.f32 %v3879, %v3922
              %v3960 = vmul.f32 %v3880, %v3924
              %v3961 = vmul.f32 %v3881, %v3926
              %v3962 = vmul.f32 %v3882, %v3928
              %v3963 = vmul.f32 %v3883, %v3930
              %v3964 = vmul.f32 %v3884, %v3932
              %3981 = vrot.lane.b32.xlu0 %v3949, 126
              %v3982 = vpop.permute.xlu0 %3981
              %3983 = vrot.lane.b32.xlu0 %v3950, 126
              %v3984 = vpop.permute.xlu0 %3983
              %3985 = vrot.lane.b32.xlu0 %v3951, 126
              %v3986 = vpop.permute.xlu0 %3985
              %3987 = vrot.lane.b32.xlu0 %v3952, 126
              %v3988 = vpop.permute.xlu0 %3987
              %3989 = vrot.lane.b32.xlu0 %v3953, 126
              %v3990 = vpop.permute.xlu0 %3989
              %3991 = vrot.lane.b32.xlu0 %v3954, 126
              %v3992 = vpop.permute.xlu0 %3991
              %3993 = vrot.lane.b32.xlu0 %v3955, 126
              %v3994 = vpop.permute.xlu0 %3993
              %3995 = vrot.lane.b32.xlu0 %v3956, 126
              %v3996 = vpop.permute.xlu0 %3995
              %3997 = vrot.lane.b32.xlu0 %v3957, 126
              %v3998 = vpop.permute.xlu0 %3997
              %3999 = vrot.lane.b32.xlu0 %v3958, 126
              %v4000 = vpop.permute.xlu0 %3999
              %4001 = vrot.lane.b32.xlu0 %v3959, 126
              %v4002 = vpop.permute.xlu0 %4001
              %4003 = vrot.lane.b32.xlu0 %v3960, 126
              %v4004 = vpop.permute.xlu0 %4003
              %4005 = vrot.lane.b32.xlu0 %v3961, 126
              %v4006 = vpop.permute.xlu0 %4005
              %4007 = vrot.lane.b32.xlu0 %v3962, 126
              %v4008 = vpop.permute.xlu0 %4007
              %4009 = vrot.lane.b32.xlu0 %v3963, 126
              %v4010 = vpop.permute.xlu0 %4009
              %4011 = vrot.lane.b32.xlu0 %v3964, 126
              %v4012 = vpop.permute.xlu0 %4011
              %v4029 = vadd.f32 %v3171, %v3982
              %v4030 = vadd.f32 %v3172, %v3984
              %v4031 = vadd.f32 %v3173, %v3986
              %v4032 = vadd.f32 %v3174, %v3988
              %v4033 = vadd.f32 %v3175, %v3990
              %v4034 = vadd.f32 %v3176, %v3992
              %v4035 = vadd.f32 %v3177, %v3994
              %v4036 = vadd.f32 %v3178, %v3996
              %v4037 = vadd.f32 %v3179, %v3998
              %v4038 = vadd.f32 %v3180, %v4000
              %v4039 = vadd.f32 %v3181, %v4002
              %v4040 = vadd.f32 %v3182, %v4004
              %v4041 = vadd.f32 %v3183, %v4006
              %v4042 = vadd.f32 %v3184, %v4008
              %v4043 = vadd.f32 %v3185, %v4010
              %v4044 = vadd.f32 %v3186, %v4012
              %4061 = vrot.lane.b32.xlu0 %v3869, 125
              %v4062 = vpop.permute.xlu0 %4061
              %4063 = vrot.lane.b32.xlu0 %v3870, 125
              %v4064 = vpop.permute.xlu0 %4063
              %4065 = vrot.lane.b32.xlu0 %v3871, 125
              %v4066 = vpop.permute.xlu0 %4065
              %4067 = vrot.lane.b32.xlu0 %v3872, 125
              %v4068 = vpop.permute.xlu0 %4067
              %4069 = vrot.lane.b32.xlu0 %v3873, 125
              %v4070 = vpop.permute.xlu0 %4069
              %4071 = vrot.lane.b32.xlu0 %v3874, 125
              %v4072 = vpop.permute.xlu0 %4071
              %4073 = vrot.lane.b32.xlu0 %v3875, 125
              %v4074 = vpop.permute.xlu0 %4073
              %4075 = vrot.lane.b32.xlu0 %v3876, 125
              %v4076 = vpop.permute.xlu0 %4075
              %4077 = vrot.lane.b32.xlu0 %v3877, 125
              %v4078 = vpop.permute.xlu0 %4077
              %4079 = vrot.lane.b32.xlu0 %v3878, 125
              %v4080 = vpop.permute.xlu0 %4079
              %4081 = vrot.lane.b32.xlu0 %v3879, 125
              %v4082 = vpop.permute.xlu0 %4081
              %4083 = vrot.lane.b32.xlu0 %v3880, 125
              %v4084 = vpop.permute.xlu0 %4083
              %4085 = vrot.lane.b32.xlu0 %v3881, 125
              %v4086 = vpop.permute.xlu0 %4085
              %4087 = vrot.lane.b32.xlu0 %v3882, 125
              %v4088 = vpop.permute.xlu0 %4087
              %4089 = vrot.lane.b32.xlu0 %v3883, 125
              %v4090 = vpop.permute.xlu0 %4089
              %4091 = vrot.lane.b32.xlu0 %v3884, 125
              %v4092 = vpop.permute.xlu0 %4091
              %v4109 = vmul.f32 %v4029, %v4062
              %v4110 = vmul.f32 %v4030, %v4064
              %v4111 = vmul.f32 %v4031, %v4066
              %v4112 = vmul.f32 %v4032, %v4068
              %v4113 = vmul.f32 %v4033, %v4070
              %v4114 = vmul.f32 %v4034, %v4072
              %v4115 = vmul.f32 %v4035, %v4074
              %v4116 = vmul.f32 %v4036, %v4076
              %v4117 = vmul.f32 %v4037, %v4078
              %v4118 = vmul.f32 %v4038, %v4080
              %v4119 = vmul.f32 %v4039, %v4082
              %v4120 = vmul.f32 %v4040, %v4084
              %v4121 = vmul.f32 %v4041, %v4086
              %v4122 = vmul.f32 %v4042, %v4088
              %v4123 = vmul.f32 %v4043, %v4090
              %v4124 = vmul.f32 %v4044, %v4092
              %v4125 = vadd.f32 %v4109, 2.0
              %v4126 = vadd.f32 %v4110, 2.0
              %v4127 = vadd.f32 %v4111, 2.0
              %v4128 = vadd.f32 %v4112, 2.0
              %v4129 = vadd.f32 %v4113, 2.0
              %v4130 = vadd.f32 %v4114, 2.0
              %v4131 = vadd.f32 %v4115, 2.0
              %v4132 = vadd.f32 %v4116, 2.0
              %v4133 = vadd.f32 %v4117, 2.0
              %v4134 = vadd.f32 %v4118, 2.0
              %v4135 = vadd.f32 %v4119, 2.0
              %v4136 = vadd.f32 %v4120, 2.0
              %v4137 = vadd.f32 %v4121, 2.0
              %v4138 = vadd.f32 %v4122, 2.0
              %v4139 = vadd.f32 %v4123, 2.0
              %v4140 = vadd.f32 %v4124, 2.0
              %v4141 = vrcp.pop %v4125
              %v4142 = vmul.f32 1.0, %v4141
              %v4143 = vrcp.pop %v4126
              %v4144 = vmul.f32 1.0, %v4143
              %v4145 = vrcp.pop %v4127
              %v4146 = vmul.f32 1.0, %v4145
              %v4147 = vrcp.pop %v4128
              %v4148 = vmul.f32 1.0, %v4147
              %v4149 = vrcp.pop %v4129
              %v4150 = vmul.f32 1.0, %v4149
              %v4151 = vrcp.pop %v4130
              %v4152 = vmul.f32 1.0, %v4151
              %v4153 = vrcp.pop %v4131
              %v4154 = vmul.f32 1.0, %v4153
              %v4155 = vrcp.pop %v4132
              %v4156 = vmul.f32 1.0, %v4155
              %v4157 = vrcp.pop %v4133
              %v4158 = vmul.f32 1.0, %v4157
              %v4159 = vrcp.pop %v4134
              %v4160 = vmul.f32 1.0, %v4159
              %v4161 = vrcp.pop %v4135
              %v4162 = vmul.f32 1.0, %v4161
              %v4163 = vrcp.pop %v4136
              %v4164 = vmul.f32 1.0, %v4163
              %v4165 = vrcp.pop %v4137
              %v4166 = vmul.f32 1.0, %v4165
              %v4167 = vrcp.pop %v4138
              %v4168 = vmul.f32 1.0, %v4167
              %v4169 = vrcp.pop %v4139
              %v4170 = vmul.f32 1.0, %v4169
              %v4171 = vrcp.pop %v4140
              %v4172 = vmul.f32 1.0, %v4171
              %4189 = vrot.lane.b32.xlu0 %v4142, 4
              %v4190 = vpop.permute.xlu0 %4189
              %4191 = vrot.lane.b32.xlu0 %v4144, 4
              %v4192 = vpop.permute.xlu0 %4191
              %4193 = vrot.lane.b32.xlu0 %v4146, 4
              %v4194 = vpop.permute.xlu0 %4193
              %4195 = vrot.lane.b32.xlu0 %v4148, 4
              %v4196 = vpop.permute.xlu0 %4195
              %4197 = vrot.lane.b32.xlu0 %v4150, 4
              %v4198 = vpop.permute.xlu0 %4197
              %4199 = vrot.lane.b32.xlu0 %v4152, 4
              %v4200 = vpop.permute.xlu0 %4199
              %4201 = vrot.lane.b32.xlu0 %v4154, 4
              %v4202 = vpop.permute.xlu0 %4201
              %4203 = vrot.lane.b32.xlu0 %v4156, 4
              %v4204 = vpop.permute.xlu0 %4203
              %4205 = vrot.lane.b32.xlu0 %v4158, 4
              %v4206 = vpop.permute.xlu0 %4205
              %4207 = vrot.lane.b32.xlu0 %v4160, 4
              %v4208 = vpop.permute.xlu0 %4207
              %4209 = vrot.lane.b32.xlu0 %v4162, 4
              %v4210 = vpop.permute.xlu0 %4209
              %4211 = vrot.lane.b32.xlu0 %v4164, 4
              %v4212 = vpop.permute.xlu0 %4211
              %4213 = vrot.lane.b32.xlu0 %v4166, 4
              %v4214 = vpop.permute.xlu0 %4213
              %4215 = vrot.lane.b32.xlu0 %v4168, 4
              %v4216 = vpop.permute.xlu0 %4215
              %4217 = vrot.lane.b32.xlu0 %v4170, 4
              %v4218 = vpop.permute.xlu0 %4217
              %4219 = vrot.lane.b32.xlu0 %v4172, 4
              %v4220 = vpop.permute.xlu0 %4219
              %vm4237 = vcmask 39968
              %4238 = vst.msk [vmem:[%s3848] sm:$0xff] %vm4237, %v4190
              %4239 = vst.msk [vmem:[%s3848 + $0x8] sm:$0xff] %vm4237, %v4192
              %4240 = vst.msk [vmem:[%s3848 + $0x10] sm:$0xff] %vm4237, %v4194
              %4241 = vst.msk [vmem:[%s3848 + $0x18] sm:$0xff] %vm4237, %v4196
              %4242 = vst.msk [vmem:[%s3848 + $0x20] sm:$0xff] %vm4237, %v4198
              %4243 = vst.msk [vmem:[%s3848 + $0x28] sm:$0xff] %vm4237, %v4200
              %4244 = vst.msk [vmem:[%s3848 + $0x30] sm:$0xff] %vm4237, %v4202
              %4245 = vst.msk [vmem:[%s3848 + $0x38] sm:$0xff] %vm4237, %v4204
              %4246 = vst.msk [vmem:[%s3848 + $0x40] sm:$0xff] %vm4237, %v4206
              %4247 = vst.msk [vmem:[%s3848 + $0x48] sm:$0xff] %vm4237, %v4208
              %4248 = vst.msk [vmem:[%s3848 + $0x50] sm:$0xff] %vm4237, %v4210
              %4249 = vst.msk [vmem:[%s3848 + $0x58] sm:$0xff] %vm4237, %v4212
              %4250 = vst.msk [vmem:[%s3848 + $0x60] sm:$0xff] %vm4237, %v4214
              %4251 = vst.msk [vmem:[%s3848 + $0x68] sm:$0xff] %vm4237, %v4216
              %4252 = vst.msk [vmem:[%s3848 + $0x70] sm:$0xff] %vm4237, %v4218
              %4253 = vst.msk [vmem:[%s3848 + $0x78] sm:$0xff] %vm4237, %v4220
              %4254 = vrot.lane.b32.xlu0 %v3849, 127
              %v4255 = vpop.permute.xlu0 %4254
              %4256 = vrot.lane.b32.xlu0 %v3850, 127
              %v4257 = vpop.permute.xlu0 %4256
              %4258 = vrot.lane.b32.xlu0 %v3851, 127
              %v4259 = vpop.permute.xlu0 %4258
              %4260 = vrot.lane.b32.xlu0 %v3852, 127
              %v4261 = vpop.permute.xlu0 %4260
              %4262 = vrot.lane.b32.xlu0 %v3853, 127
              %v4263 = vpop.permute.xlu0 %4262
              %4264 = vrot.lane.b32.xlu0 %v3854, 127
              %v4265 = vpop.permute.xlu0 %4264
              %4266 = vrot.lane.b32.xlu0 %v3855, 127
              %v4267 = vpop.permute.xlu0 %4266
              %4268 = vrot.lane.b32.xlu0 %v3856, 127
              %v4269 = vpop.permute.xlu0 %4268
              %4270 = vrot.lane.b32.xlu0 %v3857, 127
              %v4271 = vpop.permute.xlu0 %4270
              %4272 = vrot.lane.b32.xlu0 %v3858, 127
              %v4273 = vpop.permute.xlu0 %4272
              %4274 = vrot.lane.b32.xlu0 %v3859, 127
              %v4275 = vpop.permute.xlu0 %4274
              %4276 = vrot.lane.b32.xlu0 %v3860, 127
              %v4277 = vpop.permute.xlu0 %4276
              %4278 = vrot.lane.b32.xlu0 %v3861, 127
              %v4279 = vpop.permute.xlu0 %4278
              %4280 = vrot.lane.b32.xlu0 %v3862, 127
              %v4281 = vpop.permute.xlu0 %4280
              %4282 = vrot.lane.b32.xlu0 %v3863, 127
              %v4283 = vpop.permute.xlu0 %4282
              %4284 = vrot.lane.b32.xlu0 %v3864, 127
              %v4285 = vpop.permute.xlu0 %4284
              %v4302 = vmul.f32 %v4142, %v4255
              %v4303 = vmul.f32 %v4144, %v4257
              %v4304 = vmul.f32 %v4146, %v4259
              %v4305 = vmul.f32 %v4148, %v4261
              %v4306 = vmul.f32 %v4150, %v4263
              %v4307 = vmul.f32 %v4152, %v4265
              %v4308 = vmul.f32 %v4154, %v4267
              %v4309 = vmul.f32 %v4156, %v4269
              %v4310 = vmul.f32 %v4158, %v4271
              %v4311 = vmul.f32 %v4160, %v4273
              %v4312 = vmul.f32 %v4162, %v4275
              %v4313 = vmul.f32 %v4164, %v4277
              %v4314 = vmul.f32 %v4166, %v4279
              %v4315 = vmul.f32 %v4168, %v4281
              %v4316 = vmul.f32 %v4170, %v4283
              %v4317 = vmul.f32 %v4172, %v4285
              %4334 = vrot.lane.b32.xlu0 %v4302, 5
              %v4335 = vpop.permute.xlu0 %4334
              %4336 = vrot.lane.b32.xlu0 %v4303, 5
              %v4337 = vpop.permute.xlu0 %4336
              %4338 = vrot.lane.b32.xlu0 %v4304, 5
              %v4339 = vpop.permute.xlu0 %4338
              %4340 = vrot.lane.b32.xlu0 %v4305, 5
              %v4341 = vpop.permute.xlu0 %4340
              %4342 = vrot.lane.b32.xlu0 %v4306, 5
              %v4343 = vpop.permute.xlu0 %4342
              %4344 = vrot.lane.b32.xlu0 %v4307, 5
              %v4345 = vpop.permute.xlu0 %4344
              %4346 = vrot.lane.b32.xlu0 %v4308, 5
              %v4347 = vpop.permute.xlu0 %4346
              %4348 = vrot.lane.b32.xlu0 %v4309, 5
              %v4349 = vpop.permute.xlu0 %4348
              %4350 = vrot.lane.b32.xlu0 %v4310, 5
              %v4351 = vpop.permute.xlu0 %4350
              %4352 = vrot.lane.b32.xlu0 %v4311, 5
              %v4353 = vpop.permute.xlu0 %4352
              %4354 = vrot.lane.b32.xlu0 %v4312, 5
              %v4355 = vpop.permute.xlu0 %4354
              %4356 = vrot.lane.b32.xlu0 %v4313, 5
              %v4357 = vpop.permute.xlu0 %4356
              %4358 = vrot.lane.b32.xlu0 %v4314, 5
              %v4359 = vpop.permute.xlu0 %4358
              %4360 = vrot.lane.b32.xlu0 %v4315, 5
              %v4361 = vpop.permute.xlu0 %4360
              %4362 = vrot.lane.b32.xlu0 %v4316, 5
              %v4363 = vpop.permute.xlu0 %4362
              %4364 = vrot.lane.b32.xlu0 %v4317, 5
              %v4365 = vpop.permute.xlu0 %4364
              %vm4382 = vcmask 48168
              %4383 = vst.msk [vmem:[%s3848] sm:$0xff] %vm4382, %v4335
              %4384 = vst.msk [vmem:[%s3848 + $0x8] sm:$0xff] %vm4382, %v4337
              %4385 = vst.msk [vmem:[%s3848 + $0x10] sm:$0xff] %vm4382, %v4339
              %4386 = vst.msk [vmem:[%s3848 + $0x18] sm:$0xff] %vm4382, %v4341
              %4387 = vst.msk [vmem:[%s3848 + $0x20] sm:$0xff] %vm4382, %v4343
              %4388 = vst.msk [vmem:[%s3848 + $0x28] sm:$0xff] %vm4382, %v4345
              %4389 = vst.msk [vmem:[%s3848 + $0x30] sm:$0xff] %vm4382, %v4347
              %4390 = vst.msk [vmem:[%s3848 + $0x38] sm:$0xff] %vm4382, %v4349
              %4391 = vst.msk [vmem:[%s3848 + $0x40] sm:$0xff] %vm4382, %v4351
              %4392 = vst.msk [vmem:[%s3848 + $0x48] sm:$0xff] %vm4382, %v4353
              %4393 = vst.msk [vmem:[%s3848 + $0x50] sm:$0xff] %vm4382, %v4355
              %4394 = vst.msk [vmem:[%s3848 + $0x58] sm:$0xff] %vm4382, %v4357
              %4395 = vst.msk [vmem:[%s3848 + $0x60] sm:$0xff] %vm4382, %v4359
              %4396 = vst.msk [vmem:[%s3848 + $0x68] sm:$0xff] %vm4382, %v4361
              %4397 = vst.msk [vmem:[%s3848 + $0x70] sm:$0xff] %vm4382, %v4363
              %4398 = vst.msk [vmem:[%s3848 + $0x78] sm:$0xff] %vm4382, %v4365
            $region88: #{tpu_custom_call.1} parent=83 // pred_fallthru
              _
            %v4399 = vld [vmem:[%s3848] sm:$0xff]
            %v4400 = vld [vmem:[%s3848 + $0x8] sm:$0xff]
            %v4401 = vld [vmem:[%s3848 + $0x10] sm:$0xff]
            %v4402 = vld [vmem:[%s3848 + $0x18] sm:$0xff]
            %v4403 = vld [vmem:[%s3848 + $0x20] sm:$0xff]
            %v4404 = vld [vmem:[%s3848 + $0x28] sm:$0xff]
            %v4405 = vld [vmem:[%s3848 + $0x30] sm:$0xff]
            %v4406 = vld [vmem:[%s3848 + $0x38] sm:$0xff]
            %v4407 = vld [vmem:[%s3848 + $0x40] sm:$0xff]
            %v4408 = vld [vmem:[%s3848 + $0x48] sm:$0xff]
            %v4409 = vld [vmem:[%s3848 + $0x50] sm:$0xff]
            %v4410 = vld [vmem:[%s3848 + $0x58] sm:$0xff]
            %v4411 = vld [vmem:[%s3848 + $0x60] sm:$0xff]
            %v4412 = vld [vmem:[%s3848 + $0x68] sm:$0xff]
            %v4413 = vld [vmem:[%s3848 + $0x70] sm:$0xff]
            %v4414 = vld [vmem:[%s3848 + $0x78] sm:$0xff]
            %4416 = vset.pattern.permute.xlu0 0
            %4417 = vperm.xlu0 %4416, %v3849
            %v4418 = vpop.permute.xlu0 %4417
            %4421 = vset.pattern.permute.xlu0 0
            %4422 = vperm.xlu0 %4421, %v3850
            %v4423 = vpop.permute.xlu0 %4422
            %4426 = vset.pattern.permute.xlu0 0
            %4427 = vperm.xlu0 %4426, %v3851
            %v4428 = vpop.permute.xlu0 %4427
            %4431 = vset.pattern.permute.xlu0 0
            %4432 = vperm.xlu0 %4431, %v3852
            %v4433 = vpop.permute.xlu0 %4432
            %4436 = vset.pattern.permute.xlu0 0
            %4437 = vperm.xlu0 %4436, %v3853
            %v4438 = vpop.permute.xlu0 %4437
            %4441 = vset.pattern.permute.xlu0 0
            %4442 = vperm.xlu0 %4441, %v3854
            %v4443 = vpop.permute.xlu0 %4442
            %4446 = vset.pattern.permute.xlu0 0
            %4447 = vperm.xlu0 %4446, %v3855
            %v4448 = vpop.permute.xlu0 %4447
            %4451 = vset.pattern.permute.xlu0 0
            %4452 = vperm.xlu0 %4451, %v3856
            %v4453 = vpop.permute.xlu0 %4452
            %4456 = vset.pattern.permute.xlu0 0
            %4457 = vperm.xlu0 %4456, %v3857
            %v4458 = vpop.permute.xlu0 %4457
            %4461 = vset.pattern.permute.xlu0 0
            %4462 = vperm.xlu0 %4461, %v3858
            %v4463 = vpop.permute.xlu0 %4462
            %4466 = vset.pattern.permute.xlu0 0
            %4467 = vperm.xlu0 %4466, %v3859
            %v4468 = vpop.permute.xlu0 %4467
            %4471 = vset.pattern.permute.xlu0 0
            %4472 = vperm.xlu0 %4471, %v3860
            %v4473 = vpop.permute.xlu0 %4472
            %4476 = vset.pattern.permute.xlu0 0
            %4477 = vperm.xlu0 %4476, %v3861
            %v4478 = vpop.permute.xlu0 %4477
            %4481 = vset.pattern.permute.xlu0 0
            %4482 = vperm.xlu0 %4481, %v3862
            %v4483 = vpop.permute.xlu0 %4482
            %4486 = vset.pattern.permute.xlu0 0
            %4487 = vperm.xlu0 %4486, %v3863
            %v4488 = vpop.permute.xlu0 %4487
            %4491 = vset.pattern.permute.xlu0 0
            %4492 = vperm.xlu0 %4491, %v3864
            %v4493 = vpop.permute.xlu0 %4492
            %v4495 = vmul.f32 %v4418, %v3171
            %v4496 = vmul.f32 %v4423, %v3172
            %v4497 = vmul.f32 %v4428, %v3173
            %v4498 = vmul.f32 %v4433, %v3174
            %v4499 = vmul.f32 %v4438, %v3175
            %v4500 = vmul.f32 %v4443, %v3176
            %v4501 = vmul.f32 %v4448, %v3177
            %v4502 = vmul.f32 %v4453, %v3178
            %v4503 = vmul.f32 %v4458, %v3179
            %v4504 = vmul.f32 %v4463, %v3180
            %v4505 = vmul.f32 %v4468, %v3181
            %v4506 = vmul.f32 %v4473, %v3182
            %v4507 = vmul.f32 %v4478, %v3183
            %v4508 = vmul.f32 %v4483, %v3184
            %v4509 = vmul.f32 %v4488, %v3185
            %v4510 = vmul.f32 %v4493, %v3186
            %4527 = vrot.lane.b32.xlu0 %v4495, 120
            %v4528 = vpop.permute.xlu0 %4527
            %4529 = vrot.lane.b32.xlu0 %v4496, 120
            %v4530 = vpop.permute.xlu0 %4529
            %4531 = vrot.lane.b32.xlu0 %v4497, 120
            %v4532 = vpop.permute.xlu0 %4531
            %4533 = vrot.lane.b32.xlu0 %v4498, 120
            %v4534 = vpop.permute.xlu0 %4533
            %4535 = vrot.lane.b32.xlu0 %v4499, 120
            %v4536 = vpop.permute.xlu0 %4535
            %4537 = vrot.lane.b32.xlu0 %v4500, 120
            %v4538 = vpop.permute.xlu0 %4537
            %4539 = vrot.lane.b32.xlu0 %v4501, 120
            %v4540 = vpop.permute.xlu0 %4539
            %4541 = vrot.lane.b32.xlu0 %v4502, 120
            %v4542 = vpop.permute.xlu0 %4541
            %4543 = vrot.lane.b32.xlu0 %v4503, 120
            %v4544 = vpop.permute.xlu0 %4543
            %4545 = vrot.lane.b32.xlu0 %v4504, 120
            %v4546 = vpop.permute.xlu0 %4545
            %4547 = vrot.lane.b32.xlu0 %v4505, 120
            %v4548 = vpop.permute.xlu0 %4547
            %4549 = vrot.lane.b32.xlu0 %v4506, 120
            %v4550 = vpop.permute.xlu0 %4549
            %4551 = vrot.lane.b32.xlu0 %v4507, 120
            %v4552 = vpop.permute.xlu0 %4551
            %4553 = vrot.lane.b32.xlu0 %v4508, 120
            %v4554 = vpop.permute.xlu0 %4553
            %4555 = vrot.lane.b32.xlu0 %v4509, 120
            %v4556 = vpop.permute.xlu0 %4555
            %4557 = vrot.lane.b32.xlu0 %v4510, 120
            %v4558 = vpop.permute.xlu0 %4557
            %v4575 = vadd.f32 %v3171, %v4528
            %v4576 = vadd.f32 %v3172, %v4530
            %v4577 = vadd.f32 %v3173, %v4532
            %v4578 = vadd.f32 %v3174, %v4534
            %v4579 = vadd.f32 %v3175, %v4536
            %v4580 = vadd.f32 %v3176, %v4538
            %v4581 = vadd.f32 %v3177, %v4540
            %v4582 = vadd.f32 %v3178, %v4542
            %v4583 = vadd.f32 %v3179, %v4544
            %v4584 = vadd.f32 %v3180, %v4546
            %v4585 = vadd.f32 %v3181, %v4548
            %v4586 = vadd.f32 %v3182, %v4550
            %v4587 = vadd.f32 %v3183, %v4552
            %v4588 = vadd.f32 %v3184, %v4554
            %v4589 = vadd.f32 %v3185, %v4556
            %v4590 = vadd.f32 %v3186, %v4558
            %4592 = vset.pattern.permute.xlu0 5
            %4593 = vperm.xlu0 %4592, %v4399
            %v4594 = vpop.permute.xlu0 %4593
            %4597 = vset.pattern.permute.xlu0 5
            %4598 = vperm.xlu0 %4597, %v4400
            %v4599 = vpop.permute.xlu0 %4598
            %4602 = vset.pattern.permute.xlu0 5
            %4603 = vperm.xlu0 %4602, %v4401
            %v4604 = vpop.permute.xlu0 %4603
            %4607 = vset.pattern.permute.xlu0 5
            %4608 = vperm.xlu0 %4607, %v4402
            %v4609 = vpop.permute.xlu0 %4608
            %4612 = vset.pattern.permute.xlu0 5
            %4613 = vperm.xlu0 %4612, %v4403
            %v4614 = vpop.permute.xlu0 %4613
            %4617 = vset.pattern.permute.xlu0 5
            %4618 = vperm.xlu0 %4617, %v4404
            %v4619 = vpop.permute.xlu0 %4618
            %4622 = vset.pattern.permute.xlu0 5
            %4623 = vperm.xlu0 %4622, %v4405
            %v4624 = vpop.permute.xlu0 %4623
            %4627 = vset.pattern.permute.xlu0 5
            %4628 = vperm.xlu0 %4627, %v4406
            %v4629 = vpop.permute.xlu0 %4628
            %4632 = vset.pattern.permute.xlu0 5
            %4633 = vperm.xlu0 %4632, %v4407
            %v4634 = vpop.permute.xlu0 %4633
            %4637 = vset.pattern.permute.xlu0 5
            %4638 = vperm.xlu0 %4637, %v4408
            %v4639 = vpop.permute.xlu0 %4638
            %4642 = vset.pattern.permute.xlu0 5
            %4643 = vperm.xlu0 %4642, %v4409
            %v4644 = vpop.permute.xlu0 %4643
            %4647 = vset.pattern.permute.xlu0 5
            %4648 = vperm.xlu0 %4647, %v4410
            %v4649 = vpop.permute.xlu0 %4648
            %4652 = vset.pattern.permute.xlu0 5
            %4653 = vperm.xlu0 %4652, %v4411
            %v4654 = vpop.permute.xlu0 %4653
            %4657 = vset.pattern.permute.xlu0 5
            %4658 = vperm.xlu0 %4657, %v4412
            %v4659 = vpop.permute.xlu0 %4658
            %4662 = vset.pattern.permute.xlu0 5
            %4663 = vperm.xlu0 %4662, %v4413
            %v4664 = vpop.permute.xlu0 %4663
            %4667 = vset.pattern.permute.xlu0 5
            %4668 = vperm.xlu0 %4667, %v4414
            %v4669 = vpop.permute.xlu0 %4668
            %v4671 = vmul.f32 %v4594, %v4575
            %v4672 = vmul.f32 %v4599, %v4576
            %v4673 = vmul.f32 %v4604, %v4577
            %v4674 = vmul.f32 %v4609, %v4578
            %v4675 = vmul.f32 %v4614, %v4579
            %v4676 = vmul.f32 %v4619, %v4580
            %v4677 = vmul.f32 %v4624, %v4581
            %v4678 = vmul.f32 %v4629, %v4582
            %v4679 = vmul.f32 %v4634, %v4583
            %v4680 = vmul.f32 %v4639, %v4584
            %v4681 = vmul.f32 %v4644, %v4585
            %v4682 = vmul.f32 %v4649, %v4586
            %v4683 = vmul.f32 %v4654, %v4587
            %v4684 = vmul.f32 %v4659, %v4588
            %v4685 = vmul.f32 %v4664, %v4589
            %v4686 = vmul.f32 %v4669, %v4590
            %v4687 = vmul.f32 %v4399, 2.0
            %v4688 = vmul.f32 %v4400, 2.0
            %v4689 = vmul.f32 %v4401, 2.0
            %v4690 = vmul.f32 %v4402, 2.0
            %v4691 = vmul.f32 %v4403, 2.0
            %v4692 = vmul.f32 %v4404, 2.0
            %v4693 = vmul.f32 %v4405, 2.0
            %v4694 = vmul.f32 %v4406, 2.0
            %v4695 = vmul.f32 %v4407, 2.0
            %v4696 = vmul.f32 %v4408, 2.0
            %v4697 = vmul.f32 %v4409, 2.0
            %v4698 = vmul.f32 %v4410, 2.0
            %v4699 = vmul.f32 %v4411, 2.0
            %v4700 = vmul.f32 %v4412, 2.0
            %v4701 = vmul.f32 %v4413, 2.0
            %v4702 = vmul.f32 %v4414, 2.0
            %s4703 = scalar_lea.vmem [#allocation2], %s445
            %v4704 = vld [vmem:[%s4703] sm:$0xff]
            %v4705 = vld [vmem:[%s4703 + $0x8] sm:$0xff]
            %v4706 = vld [vmem:[%s4703 + $0x10] sm:$0xff]
            %v4707 = vld [vmem:[%s4703 + $0x18] sm:$0xff]
            %v4708 = vld [vmem:[%s4703 + $0x20] sm:$0xff]
            %v4709 = vld [vmem:[%s4703 + $0x28] sm:$0xff]
            %v4710 = vld [vmem:[%s4703 + $0x30] sm:$0xff]
            %v4711 = vld [vmem:[%s4703 + $0x38] sm:$0xff]
            %v4712 = vld [vmem:[%s4703 + $0x40] sm:$0xff]
            %v4713 = vld [vmem:[%s4703 + $0x48] sm:$0xff]
            %v4714 = vld [vmem:[%s4703 + $0x50] sm:$0xff]
            %v4715 = vld [vmem:[%s4703 + $0x58] sm:$0xff]
            %v4716 = vld [vmem:[%s4703 + $0x60] sm:$0xff]
            %v4717 = vld [vmem:[%s4703 + $0x68] sm:$0xff]
            %v4718 = vld [vmem:[%s4703 + $0x70] sm:$0xff]
            %v4719 = vld [vmem:[%s4703 + $0x78] sm:$0xff]
            %4721 = vset.pattern.permute.xlu0 4
            %4722 = vperm.xlu0 %4721, %v4687
            %v4723 = vpop.permute.xlu0 %4722
            %4726 = vset.pattern.permute.xlu0 4
            %4727 = vperm.xlu0 %4726, %v4688
            %v4728 = vpop.permute.xlu0 %4727
            %4731 = vset.pattern.permute.xlu0 4
            %4732 = vperm.xlu0 %4731, %v4689
            %v4733 = vpop.permute.xlu0 %4732
            %4736 = vset.pattern.permute.xlu0 4
            %4737 = vperm.xlu0 %4736, %v4690
            %v4738 = vpop.permute.xlu0 %4737
            %4741 = vset.pattern.permute.xlu0 4
            %4742 = vperm.xlu0 %4741, %v4691
            %v4743 = vpop.permute.xlu0 %4742
            %4746 = vset.pattern.permute.xlu0 4
            %4747 = vperm.xlu0 %4746, %v4692
            %v4748 = vpop.permute.xlu0 %4747
            %4751 = vset.pattern.permute.xlu0 4
            %4752 = vperm.xlu0 %4751, %v4693
            %v4753 = vpop.permute.xlu0 %4752
            %4756 = vset.pattern.permute.xlu0 4
            %4757 = vperm.xlu0 %4756, %v4694
            %v4758 = vpop.permute.xlu0 %4757
            %4761 = vset.pattern.permute.xlu0 4
            %4762 = vperm.xlu0 %4761, %v4695
            %v4763 = vpop.permute.xlu0 %4762
            %4766 = vset.pattern.permute.xlu0 4
            %4767 = vperm.xlu0 %4766, %v4696
            %v4768 = vpop.permute.xlu0 %4767
            %4771 = vset.pattern.permute.xlu0 4
            %4772 = vperm.xlu0 %4771, %v4697
            %v4773 = vpop.permute.xlu0 %4772
            %4776 = vset.pattern.permute.xlu0 4
            %4777 = vperm.xlu0 %4776, %v4698
            %v4778 = vpop.permute.xlu0 %4777
            %4781 = vset.pattern.permute.xlu0 4
            %4782 = vperm.xlu0 %4781, %v4699
            %v4783 = vpop.permute.xlu0 %4782
            %4786 = vset.pattern.permute.xlu0 4
            %4787 = vperm.xlu0 %4786, %v4700
            %v4788 = vpop.permute.xlu0 %4787
            %4791 = vset.pattern.permute.xlu0 4
            %4792 = vperm.xlu0 %4791, %v4701
            %v4793 = vpop.permute.xlu0 %4792
            %4796 = vset.pattern.permute.xlu0 4
            %4797 = vperm.xlu0 %4796, %v4702
            %v4798 = vpop.permute.xlu0 %4797
            %v4800 = vmul.f32 %v4723, %v4704
            %v4801 = vmul.f32 %v4728, %v4705
            %v4802 = vmul.f32 %v4733, %v4706
            %v4803 = vmul.f32 %v4738, %v4707
            %v4804 = vmul.f32 %v4743, %v4708
            %v4805 = vmul.f32 %v4748, %v4709
            %v4806 = vmul.f32 %v4753, %v4710
            %v4807 = vmul.f32 %v4758, %v4711
            %v4808 = vmul.f32 %v4763, %v4712
            %v4809 = vmul.f32 %v4768, %v4713
            %v4810 = vmul.f32 %v4773, %v4714
            %v4811 = vmul.f32 %v4778, %v4715
            %v4812 = vmul.f32 %v4783, %v4716
            %v4813 = vmul.f32 %v4788, %v4717
            %v4814 = vmul.f32 %v4793, %v4718
            %v4815 = vmul.f32 %v4798, %v4719
            %4832 = vrot.lane.b32.xlu0 %v4800, 1
            %v4833 = vpop.permute.xlu0 %4832
            %4834 = vrot.lane.b32.xlu0 %v4801, 1
            %v4835 = vpop.permute.xlu0 %4834
            %4836 = vrot.lane.b32.xlu0 %v4802, 1
            %v4837 = vpop.permute.xlu0 %4836
            %4838 = vrot.lane.b32.xlu0 %v4803, 1
            %v4839 = vpop.permute.xlu0 %4838
            %4840 = vrot.lane.b32.xlu0 %v4804, 1
            %v4841 = vpop.permute.xlu0 %4840
            %4842 = vrot.lane.b32.xlu0 %v4805, 1
            %v4843 = vpop.permute.xlu0 %4842
            %4844 = vrot.lane.b32.xlu0 %v4806, 1
            %v4845 = vpop.permute.xlu0 %4844
            %4846 = vrot.lane.b32.xlu0 %v4807, 1
            %v4847 = vpop.permute.xlu0 %4846
            %4848 = vrot.lane.b32.xlu0 %v4808, 1
            %v4849 = vpop.permute.xlu0 %4848
            %4850 = vrot.lane.b32.xlu0 %v4809, 1
            %v4851 = vpop.permute.xlu0 %4850
            %4852 = vrot.lane.b32.xlu0 %v4810, 1
            %v4853 = vpop.permute.xlu0 %4852
            %4854 = vrot.lane.b32.xlu0 %v4811, 1
            %v4855 = vpop.permute.xlu0 %4854
            %4856 = vrot.lane.b32.xlu0 %v4812, 1
            %v4857 = vpop.permute.xlu0 %4856
            %4858 = vrot.lane.b32.xlu0 %v4813, 1
            %v4859 = vpop.permute.xlu0 %4858
            %4860 = vrot.lane.b32.xlu0 %v4814, 1
            %v4861 = vpop.permute.xlu0 %4860
            %4862 = vrot.lane.b32.xlu0 %v4815, 1
            %v4863 = vpop.permute.xlu0 %4862
            %v4880 = vadd.f32 %v4671, %v4833
            %v4881 = vadd.f32 %v4672, %v4835
            %v4882 = vadd.f32 %v4673, %v4837
            %v4883 = vadd.f32 %v4674, %v4839
            %v4884 = vadd.f32 %v4675, %v4841
            %v4885 = vadd.f32 %v4676, %v4843
            %v4886 = vadd.f32 %v4677, %v4845
            %v4887 = vadd.f32 %v4678, %v4847
            %v4888 = vadd.f32 %v4679, %v4849
            %v4889 = vadd.f32 %v4680, %v4851
            %v4890 = vadd.f32 %v4681, %v4853
            %v4891 = vadd.f32 %v4682, %v4855
            %v4892 = vadd.f32 %v4683, %v4857
            %v4893 = vadd.f32 %v4684, %v4859
            %v4894 = vadd.f32 %v4685, %v4861
            %v4895 = vadd.f32 %v4686, %v4863
            %4912 = vrot.lane.b32.xlu0 %v4880, 127
            %v4913 = vpop.permute.xlu0 %4912
            %4914 = vrot.lane.b32.xlu0 %v4881, 127
            %v4915 = vpop.permute.xlu0 %4914
            %4916 = vrot.lane.b32.xlu0 %v4882, 127
            %v4917 = vpop.permute.xlu0 %4916
            %4918 = vrot.lane.b32.xlu0 %v4883, 127
            %v4919 = vpop.permute.xlu0 %4918
            %4920 = vrot.lane.b32.xlu0 %v4884, 127
            %v4921 = vpop.permute.xlu0 %4920
            %4922 = vrot.lane.b32.xlu0 %v4885, 127
            %v4923 = vpop.permute.xlu0 %4922
            %4924 = vrot.lane.b32.xlu0 %v4886, 127
            %v4925 = vpop.permute.xlu0 %4924
            %4926 = vrot.lane.b32.xlu0 %v4887, 127
            %v4927 = vpop.permute.xlu0 %4926
            %4928 = vrot.lane.b32.xlu0 %v4888, 127
            %v4929 = vpop.permute.xlu0 %4928
            %4930 = vrot.lane.b32.xlu0 %v4889, 127
            %v4931 = vpop.permute.xlu0 %4930
            %4932 = vrot.lane.b32.xlu0 %v4890, 127
            %v4933 = vpop.permute.xlu0 %4932
            %4934 = vrot.lane.b32.xlu0 %v4891, 127
            %v4935 = vpop.permute.xlu0 %4934
            %4936 = vrot.lane.b32.xlu0 %v4892, 127
            %v4937 = vpop.permute.xlu0 %4936
            %4938 = vrot.lane.b32.xlu0 %v4893, 127
            %v4939 = vpop.permute.xlu0 %4938
            %4940 = vrot.lane.b32.xlu0 %v4894, 127
            %v4941 = vpop.permute.xlu0 %4940
            %4942 = vrot.lane.b32.xlu0 %v4895, 127
            %v4943 = vpop.permute.xlu0 %4942
            %s4960 = scalar_lea.vmem [#allocation3], %s445
            %vm4961 = vcmask 64512
            %4962 = vst.msk [vmem:[%s4960] sm:$0xff] %vm4961, %v4913
            %4963 = vst.msk [vmem:[%s4960 + $0x8] sm:$0xff] %vm4961, %v4915
            %4964 = vst.msk [vmem:[%s4960 + $0x10] sm:$0xff] %vm4961, %v4917
            %4965 = vst.msk [vmem:[%s4960 + $0x18] sm:$0xff] %vm4961, %v4919
            %4966 = vst.msk [vmem:[%s4960 + $0x20] sm:$0xff] %vm4961, %v4921
            %4967 = vst.msk [vmem:[%s4960 + $0x28] sm:$0xff] %vm4961, %v4923
            %4968 = vst.msk [vmem:[%s4960 + $0x30] sm:$0xff] %vm4961, %v4925
            %4969 = vst.msk [vmem:[%s4960 + $0x38] sm:$0xff] %vm4961, %v4927
            %4970 = vst.msk [vmem:[%s4960 + $0x40] sm:$0xff] %vm4961, %v4929
            %4971 = vst.msk [vmem:[%s4960 + $0x48] sm:$0xff] %vm4961, %v4931
            %4972 = vst.msk [vmem:[%s4960 + $0x50] sm:$0xff] %vm4961, %v4933
            %4973 = vst.msk [vmem:[%s4960 + $0x58] sm:$0xff] %vm4961, %v4935
            %4974 = vst.msk [vmem:[%s4960 + $0x60] sm:$0xff] %vm4961, %v4937
            %4975 = vst.msk [vmem:[%s4960 + $0x68] sm:$0xff] %vm4961, %v4939
            %4976 = vst.msk [vmem:[%s4960 + $0x70] sm:$0xff] %vm4961, %v4941
            %4977 = vst.msk [vmem:[%s4960 + $0x78] sm:$0xff] %vm4961, %v4943
            %p4978 = scmp.eq.s32.totalorder %s28, 2
            // Predicated region
            $region89: #{tpu_custom_call.1} parent=83 // pred_check
              %p4979 = pneg %p4978
            $region90: #{tpu_custom_call.1} parent=83 // pred_check_branch
              %4981 = sbr.rel (%p4979) target = $region92
            $region91: #{tpu_custom_call.1} parent=83 // pred_region
              %vm4982 = vcmask 72712
              %v4983 = vsel %vm4982, %v4880, -inf
              %4984 = vmax.xlane.f32.xlu0 %v4983
              %v4985 = vpop.xlane.xlu0 %4984
              %v4986 = vsel %vm4982, %v4881, -inf
              %4987 = vmax.xlane.f32.xlu0 %v4986
              %v4988 = vpop.xlane.xlu0 %4987
              %v4989 = vsel %vm4982, %v4882, -inf
              %4990 = vmax.xlane.f32.xlu0 %v4989
              %v4991 = vpop.xlane.xlu0 %4990
              %v4992 = vsel %vm4982, %v4883, -inf
              %4993 = vmax.xlane.f32.xlu0 %v4992
              %v4994 = vpop.xlane.xlu0 %4993
              %v4995 = vsel %vm4982, %v4884, -inf
              %4996 = vmax.xlane.f32.xlu0 %v4995
              %v4997 = vpop.xlane.xlu0 %4996
              %v4998 = vsel %vm4982, %v4885, -inf
              %4999 = vmax.xlane.f32.xlu0 %v4998
              %v5000 = vpop.xlane.xlu0 %4999
              %v5001 = vsel %vm4982, %v4886, -inf
              %5002 = vmax.xlane.f32.xlu0 %v5001
              %v5003 = vpop.xlane.xlu0 %5002
              %v5004 = vsel %vm4982, %v4887, -inf
              %5005 = vmax.xlane.f32.xlu0 %v5004
              %v5006 = vpop.xlane.xlu0 %5005
              %v5007 = vsel %vm4982, %v4888, -inf
              %5008 = vmax.xlane.f32.xlu0 %v5007
              %v5009 = vpop.xlane.xlu0 %5008
              %v5010 = vsel %vm4982, %v4889, -inf
              %5011 = vmax.xlane.f32.xlu0 %v5010
              %v5012 = vpop.xlane.xlu0 %5011
              %v5013 = vsel %vm4982, %v4890, -inf
              %5014 = vmax.xlane.f32.xlu0 %v5013
              %v5015 = vpop.xlane.xlu0 %5014
              %v5016 = vsel %vm4982, %v4891, -inf
              %5017 = vmax.xlane.f32.xlu0 %v5016
              %v5018 = vpop.xlane.xlu0 %5017
              %v5019 = vsel %vm4982, %v4892, -inf
              %5020 = vmax.xlane.f32.xlu0 %v5019
              %v5021 = vpop.xlane.xlu0 %5020
              %v5022 = vsel %vm4982, %v4893, -inf
              %5023 = vmax.xlane.f32.xlu0 %v5022
              %v5024 = vpop.xlane.xlu0 %5023
              %v5025 = vsel %vm4982, %v4894, -inf
              %5026 = vmax.xlane.f32.xlu0 %v5025
              %v5027 = vpop.xlane.xlu0 %5026
              %v5028 = vsel %vm4982, %v4895, -inf
              %5029 = vmax.xlane.f32.xlu0 %v5028
              %v5030 = vpop.xlane.xlu0 %5029
              %v5031 = vsub.f32 %v4880, %v4985
              %v5032 = vsub.f32 %v4881, %v4988
              %v5033 = vsub.f32 %v4882, %v4991
              %v5034 = vsub.f32 %v4883, %v4994
              %v5035 = vsub.f32 %v4884, %v4997
              %v5036 = vsub.f32 %v4885, %v5000
              %v5037 = vsub.f32 %v4886, %v5003
              %v5038 = vsub.f32 %v4887, %v5006
              %v5039 = vsub.f32 %v4888, %v5009
              %v5040 = vsub.f32 %v4889, %v5012
              %v5041 = vsub.f32 %v4890, %v5015
              %v5042 = vsub.f32 %v4891, %v5018
              %v5043 = vsub.f32 %v4892, %v5021
              %v5044 = vsub.f32 %v4893, %v5024
              %v5045 = vsub.f32 %v4894, %v5027
              %v5046 = vsub.f32 %v4895, %v5030
              %v5047 = vmul.f32 %v5031, 1.442695
              %v5048 = vpow.pop %v5047
              %v5049 = vmul.f32 %v5032, 1.442695
              %v5050 = vpow.pop %v5049
              %v5051 = vmul.f32 %v5033, 1.442695
              %v5052 = vpow.pop %v5051
              %v5053 = vmul.f32 %v5034, 1.442695
              %v5054 = vpow.pop %v5053
              %v5055 = vmul.f32 %v5035, 1.442695
              %v5056 = vpow.pop %v5055
              %v5057 = vmul.f32 %v5036, 1.442695
              %v5058 = vpow.pop %v5057
              %v5059 = vmul.f32 %v5037, 1.442695
              %v5060 = vpow.pop %v5059
              %v5061 = vmul.f32 %v5038, 1.442695
              %v5062 = vpow.pop %v5061
              %v5063 = vmul.f32 %v5039, 1.442695
              %v5064 = vpow.pop %v5063
              %v5065 = vmul.f32 %v5040, 1.442695
              %v5066 = vpow.pop %v5065
              %v5067 = vmul.f32 %v5041, 1.442695
              %v5068 = vpow.pop %v5067
              %v5069 = vmul.f32 %v5042, 1.442695
              %v5070 = vpow.pop %v5069
              %v5071 = vmul.f32 %v5043, 1.442695
              %v5072 = vpow.pop %v5071
              %v5073 = vmul.f32 %v5044, 1.442695
              %v5074 = vpow.pop %v5073
              %v5075 = vmul.f32 %v5045, 1.442695
              %v5076 = vpow.pop %v5075
              %v5077 = vmul.f32 %v5046, 1.442695
              %v5078 = vpow.pop %v5077
              %5095 = vrot.lane.b32.xlu0 %v5048, 127
              %v5096 = vpop.permute.xlu0 %5095
              %5097 = vrot.lane.b32.xlu0 %v5050, 127
              %v5098 = vpop.permute.xlu0 %5097
              %5099 = vrot.lane.b32.xlu0 %v5052, 127
              %v5100 = vpop.permute.xlu0 %5099
              %5101 = vrot.lane.b32.xlu0 %v5054, 127
              %v5102 = vpop.permute.xlu0 %5101
              %5103 = vrot.lane.b32.xlu0 %v5056, 127
              %v5104 = vpop.permute.xlu0 %5103
              %5105 = vrot.lane.b32.xlu0 %v5058, 127
              %v5106 = vpop.permute.xlu0 %5105
              %5107 = vrot.lane.b32.xlu0 %v5060, 127
              %v5108 = vpop.permute.xlu0 %5107
              %5109 = vrot.lane.b32.xlu0 %v5062, 127
              %v5110 = vpop.permute.xlu0 %5109
              %5111 = vrot.lane.b32.xlu0 %v5064, 127
              %v5112 = vpop.permute.xlu0 %5111
              %5113 = vrot.lane.b32.xlu0 %v5066, 127
              %v5114 = vpop.permute.xlu0 %5113
              %5115 = vrot.lane.b32.xlu0 %v5068, 127
              %v5116 = vpop.permute.xlu0 %5115
              %5117 = vrot.lane.b32.xlu0 %v5070, 127
              %v5118 = vpop.permute.xlu0 %5117
              %5119 = vrot.lane.b32.xlu0 %v5072, 127
              %v5120 = vpop.permute.xlu0 %5119
              %5121 = vrot.lane.b32.xlu0 %v5074, 127
              %v5122 = vpop.permute.xlu0 %5121
              %5123 = vrot.lane.b32.xlu0 %v5076, 127
              %v5124 = vpop.permute.xlu0 %5123
              %5125 = vrot.lane.b32.xlu0 %v5078, 127
              %v5126 = vpop.permute.xlu0 %5125
              %v5143 = vsel %vm4961, %v5096, 0.0
              %5144 = vadd.xlane.f32.xlu0 %v5143
              %v5145 = vpop.xlane.xlu0 %5144
              %v5146 = vsel %vm4961, %v5098, 0.0
              %5147 = vadd.xlane.f32.xlu0 %v5146
              %v5148 = vpop.xlane.xlu0 %5147
              %v5149 = vsel %vm4961, %v5100, 0.0
              %5150 = vadd.xlane.f32.xlu0 %v5149
              %v5151 = vpop.xlane.xlu0 %5150
              %v5152 = vsel %vm4961, %v5102, 0.0
              %5153 = vadd.xlane.f32.xlu0 %v5152
              %v5154 = vpop.xlane.xlu0 %5153
              %v5155 = vsel %vm4961, %v5104, 0.0
              %5156 = vadd.xlane.f32.xlu0 %v5155
              %v5157 = vpop.xlane.xlu0 %5156
              %v5158 = vsel %vm4961, %v5106, 0.0
              %5159 = vadd.xlane.f32.xlu0 %v5158
              %v5160 = vpop.xlane.xlu0 %5159
              %v5161 = vsel %vm4961, %v5108, 0.0
              %5162 = vadd.xlane.f32.xlu0 %v5161
              %v5163 = vpop.xlane.xlu0 %5162
              %v5164 = vsel %vm4961, %v5110, 0.0
              %5165 = vadd.xlane.f32.xlu0 %v5164
              %v5166 = vpop.xlane.xlu0 %5165
              %v5167 = vsel %vm4961, %v5112, 0.0
              %5168 = vadd.xlane.f32.xlu0 %v5167
              %v5169 = vpop.xlane.xlu0 %5168
              %v5170 = vsel %vm4961, %v5114, 0.0
              %5171 = vadd.xlane.f32.xlu0 %v5170
              %v5172 = vpop.xlane.xlu0 %5171
              %v5173 = vsel %vm4961, %v5116, 0.0
              %5174 = vadd.xlane.f32.xlu0 %v5173
              %v5175 = vpop.xlane.xlu0 %5174
              %v5176 = vsel %vm4961, %v5118, 0.0
              %5177 = vadd.xlane.f32.xlu0 %v5176
              %v5178 = vpop.xlane.xlu0 %5177
              %v5179 = vsel %vm4961, %v5120, 0.0
              %5180 = vadd.xlane.f32.xlu0 %v5179
              %v5181 = vpop.xlane.xlu0 %5180
              %v5182 = vsel %vm4961, %v5122, 0.0
              %5183 = vadd.xlane.f32.xlu0 %v5182
              %v5184 = vpop.xlane.xlu0 %5183
              %v5185 = vsel %vm4961, %v5124, 0.0
              %5186 = vadd.xlane.f32.xlu0 %v5185
              %v5187 = vpop.xlane.xlu0 %5186
              %v5188 = vsel %vm4961, %v5126, 0.0
              %5189 = vadd.xlane.f32.xlu0 %v5188
              %v5190 = vpop.xlane.xlu0 %5189
              %v5191 = vlog2.pop %v5145
              %v5192 = vmul.f32 %v5191, 0.6931472
              %v5193 = vlog2.pop %v5148
              %v5194 = vmul.f32 %v5193, 0.6931472
              %v5195 = vlog2.pop %v5151
              %v5196 = vmul.f32 %v5195, 0.6931472
              %v5197 = vlog2.pop %v5154
              %v5198 = vmul.f32 %v5197, 0.6931472
              %v5199 = vlog2.pop %v5157
              %v5200 = vmul.f32 %v5199, 0.6931472
              %v5201 = vlog2.pop %v5160
              %v5202 = vmul.f32 %v5201, 0.6931472
              %v5203 = vlog2.pop %v5163
              %v5204 = vmul.f32 %v5203, 0.6931472
              %v5205 = vlog2.pop %v5166
              %v5206 = vmul.f32 %v5205, 0.6931472
              %v5207 = vlog2.pop %v5169
              %v5208 = vmul.f32 %v5207, 0.6931472
              %v5209 = vlog2.pop %v5172
              %v5210 = vmul.f32 %v5209, 0.6931472
              %v5211 = vlog2.pop %v5175
              %v5212 = vmul.f32 %v5211, 0.6931472
              %v5213 = vlog2.pop %v5178
              %v5214 = vmul.f32 %v5213, 0.6931472
              %v5215 = vlog2.pop %v5181
              %v5216 = vmul.f32 %v5215, 0.6931472
              %v5217 = vlog2.pop %v5184
              %v5218 = vmul.f32 %v5217, 0.6931472
              %v5219 = vlog2.pop %v5187
              %v5220 = vmul.f32 %v5219, 0.6931472
              %v5221 = vlog2.pop %v5190
              %v5222 = vmul.f32 %v5221, 0.6931472
              %v5223 = vsub.f32 %v5031, %v5192
              %v5224 = vsub.f32 %v5032, %v5194
              %v5225 = vsub.f32 %v5033, %v5196
              %v5226 = vsub.f32 %v5034, %v5198
              %v5227 = vsub.f32 %v5035, %v5200
              %v5228 = vsub.f32 %v5036, %v5202
              %v5229 = vsub.f32 %v5037, %v5204
              %v5230 = vsub.f32 %v5038, %v5206
              %v5231 = vsub.f32 %v5039, %v5208
              %v5232 = vsub.f32 %v5040, %v5210
              %v5233 = vsub.f32 %v5041, %v5212
              %v5234 = vsub.f32 %v5042, %v5214
              %v5235 = vsub.f32 %v5043, %v5216
              %v5236 = vsub.f32 %v5044, %v5218
              %v5237 = vsub.f32 %v5045, %v5220
              %v5238 = vsub.f32 %v5046, %v5222
              %5255 = vrot.lane.b32.xlu0 %v5223, 127
              %v5256 = vpop.permute.xlu0 %5255
              %5257 = vrot.lane.b32.xlu0 %v5224, 127
              %v5258 = vpop.permute.xlu0 %5257
              %5259 = vrot.lane.b32.xlu0 %v5225, 127
              %v5260 = vpop.permute.xlu0 %5259
              %5261 = vrot.lane.b32.xlu0 %v5226, 127
              %v5262 = vpop.permute.xlu0 %5261
              %5263 = vrot.lane.b32.xlu0 %v5227, 127
              %v5264 = vpop.permute.xlu0 %5263
              %5265 = vrot.lane.b32.xlu0 %v5228, 127
              %v5266 = vpop.permute.xlu0 %5265
              %5267 = vrot.lane.b32.xlu0 %v5229, 127
              %v5268 = vpop.permute.xlu0 %5267
              %5269 = vrot.lane.b32.xlu0 %v5230, 127
              %v5270 = vpop.permute.xlu0 %5269
              %5271 = vrot.lane.b32.xlu0 %v5231, 127
              %v5272 = vpop.permute.xlu0 %5271
              %5273 = vrot.lane.b32.xlu0 %v5232, 127
              %v5274 = vpop.permute.xlu0 %5273
              %5275 = vrot.lane.b32.xlu0 %v5233, 127
              %v5276 = vpop.permute.xlu0 %5275
              %5277 = vrot.lane.b32.xlu0 %v5234, 127
              %v5278 = vpop.permute.xlu0 %5277
              %5279 = vrot.lane.b32.xlu0 %v5235, 127
              %v5280 = vpop.permute.xlu0 %5279
              %5281 = vrot.lane.b32.xlu0 %v5236, 127
              %v5282 = vpop.permute.xlu0 %5281
              %5283 = vrot.lane.b32.xlu0 %v5237, 127
              %v5284 = vpop.permute.xlu0 %5283
              %5285 = vrot.lane.b32.xlu0 %v5238, 127
              %v5286 = vpop.permute.xlu0 %5285
              %5303 = vst.msk [vmem:[%s441] sm:$0xff] %vm4961, %v5256
              %5304 = vst.msk [vmem:[%s441 + $0x8] sm:$0xff] %vm4961, %v5258
              %5305 = vst.msk [vmem:[%s441 + $0x10] sm:$0xff] %vm4961, %v5260
              %5306 = vst.msk [vmem:[%s441 + $0x18] sm:$0xff] %vm4961, %v5262
              %5307 = vst.msk [vmem:[%s441 + $0x20] sm:$0xff] %vm4961, %v5264
              %5308 = vst.msk [vmem:[%s441 + $0x28] sm:$0xff] %vm4961, %v5266
              %5309 = vst.msk [vmem:[%s441 + $0x30] sm:$0xff] %vm4961, %v5268
              %5310 = vst.msk [vmem:[%s441 + $0x38] sm:$0xff] %vm4961, %v5270
              %5311 = vst.msk [vmem:[%s441 + $0x40] sm:$0xff] %vm4961, %v5272
              %5312 = vst.msk [vmem:[%s441 + $0x48] sm:$0xff] %vm4961, %v5274
              %5313 = vst.msk [vmem:[%s441 + $0x50] sm:$0xff] %vm4961, %v5276
              %5314 = vst.msk [vmem:[%s441 + $0x58] sm:$0xff] %vm4961, %v5278
              %5315 = vst.msk [vmem:[%s441 + $0x60] sm:$0xff] %vm4961, %v5280
              %5316 = vst.msk [vmem:[%s441 + $0x68] sm:$0xff] %vm4961, %v5282
              %5317 = vst.msk [vmem:[%s441 + $0x70] sm:$0xff] %vm4961, %v5284
              %5318 = vst.msk [vmem:[%s441 + $0x78] sm:$0xff] %vm4961, %v5286
            $region92: #{tpu_custom_call.1} parent=83 // pred_fallthru
              _
          $region84: #{tpu_custom_call.1} parent=75 // pred_fallthru
            _
        $region76: #{tpu_custom_call.1} parent=55 // pred_fallthru
          _
        %p5319 = scmp.eq.s32.totalorder %s28, 2
        %s5320 = scalar_select %p5319, %s29, 0
        %s5321 = smul.u32 16, %s5320
        %p5322 = scmp.lt.s32.totalorder %s5321, 63
        %s5323 = scalar_select %p5322, %s5321, 63
        %s5324 = smul.addr %s5323, 8
        %s5325 = scalar_lea.vmem %s9, %s5324
        // Predicated region
        $region93: #{tpu_custom_call.1} parent=55 // pred_check
          %p5326 = pneg %p275
        $region94: #{tpu_custom_call.1} parent=55 // pred_check_branch
          %5328 = sbr.rel (%p5326) target = $region96
        $region95: #{tpu_custom_call.1} parent=55 // pred_region
          %p5329 = scmp.eq.s32.totalorder %s28, 2
          %s5330 = scalar_select %p5329, %s29, 0
          %s5331 = smul.u32 16, %s5330
        $region96: #{tpu_custom_call.1} parent=55 // pred_fallthru
          _
      $region56: #{tpu_custom_call.1} parent=5 // pred_fallthru
        _
      %p5332 = scmp.le.s32.totalorder 2, %s18
      // Predicated region
      $region97: #{tpu_custom_call.1} parent=5 // pred_check
        %p5333 = pneg %p5332
      $region98: #{tpu_custom_call.1} parent=5 // pred_check_branch
        %5335 = sbr.rel (%p5333) target = $region100
      $region99: #{tpu_custom_call.1} parent=5 // pred_region
        %s5336 = ssub.s32 %s18, 2
        // Predicated region
        $region101: #{tpu_custom_call.1} parent=99 // pred_check
          %p5337 = pneg %p281
        $region102: #{tpu_custom_call.1} parent=99 // pred_check_branch
          %5339 = sbr.rel (%p5337) target = $region104
        $region103: #{tpu_custom_call.1} parent=99 // pred_region
          %p5340 = scmp.eq.s32.totalorder %s31, 2
          %s5341 = scalar_select %p5340, %s32, 0
          %s5342 = smul.u32 16, %s5341
          %p5343 = scmp.lt.s32.totalorder %s5342, 63
          %s5344 = scalar_select %p5343, %s5342, 63
          %s5345 = smul.addr %s5344, 8
          %s5346 = scalar_lea.vmem %s9, %s5345
        $region104: #{tpu_custom_call.1} parent=99 // pred_fallthru
          _
      $region100: #{tpu_custom_call.1} parent=5 // pred_fallthru
        _
    $region6: #{tpu_custom_call.1} parent=1 // loop_footer
      %s22 = sadd.s32 1, %s18
    $region7: #{tpu_custom_call.1} parent=1 // loop_footer_branch
      %17 = sbr.rel target = $region3
    $region8: #{tpu_custom_call.1} parent=1 // loop_exit
      _
    %5347 = vsyncpa [#allocation8], 1
    %s5348 = scalar_lea.sflag [#allocation8], 1
    %5349 = vsyncpa %s5348, 1

</llo_original>
